<compile_context>
chip_gen: v6e
topology: v6e:2x2x1
jax: 0.10.0
libtpu: 0.0.40
codegen_flags: <defaults>
</compile_context>

<pallas_src>
import functools

import jax
import jax.numpy as jnp
from jax.experimental import pallas as pl
from jax.experimental.pallas import tpu as pltpu


def _mlp_g_kernel(noise_ref, att_ref, w1n_ref, w1a_ref, b1_ref,
                  w2q_ref, s2_ref, b2_ref, o_ref, *, negative_slope):
    """One (column-tile j, hidden-tile k) grid step.

    fc1 chunk -> leaky_relu -> partial fc2 accumulated directly into the
    resident f32 output block; scale + bias + sigmoid on the last k step.
    """
    k = pl.program_id(1)

    @pl.when(k == 0)
    def _():
        o_ref[...] = jnp.zeros_like(o_ref)

    # fc1 chunk: bf16 operands on the MXU, f32 accumulation. The concat is
    # fused away as two K-partial dots against W1's row slices.
    h = jnp.dot(noise_ref[...].astype(jnp.bfloat16), w1n_ref[...],
                preferred_element_type=jnp.float32)
    h = h + jnp.dot(att_ref[...].astype(jnp.bfloat16), w1a_ref[...],
                    preferred_element_type=jnp.float32)
    h = h + b1_ref[...]                              # f32 bias add (VPU)
    h = jnp.where(h > 0, h, negative_slope * h)      # LeakyReLU in f32

    # fc2 partial: W2 streamed as int8. int8 values are exact in bf16, so the
    # MXU dot runs on the raw quantized values; the per-output-column f32
    # scale is applied once in the epilogue (scale commutes with contraction).
    o_ref[...] += jnp.dot(h.astype(jnp.bfloat16),
                          w2q_ref[...].astype(jnp.bfloat16),
                          preferred_element_type=jnp.float32)

    @pl.when(k == pl.num_programs(1) - 1)
    def _():
        z = o_ref[...] * s2_ref[...] + b2_ref[...]
        # sigmoid via a single EUP tanh: no exp overflow for very negative z,
        # no approx-reciprocal error.
        o_ref[...] = (0.5 * (jnp.tanh(0.5 * z) + 1.0)).astype(o_ref.dtype)


def _vmem_budget():
    """Generation-aware explicit VMEM limit + tile-picker budget (bytes)."""
    try:
        info = pltpu.get_tpu_info()
        phys = int(getattr(info, "vmem_capacity_bytes", 0)) or (64 << 20)
    except Exception:
        phys = 64 << 20   # conservative fallback: v7x per-TensorCore VMEM
    # ~96 MiB on v5e/v6e (128 MiB physical), ~48 MiB on v7x (64 MiB physical).
    vmem_limit = min((phys * 3) // 4, 96 << 20)
    budget = vmem_limit - (8 << 20)   # headroom for Mosaic internal scratch
    return vmem_limit, budget


def _pick_tiles(B, latent, n_att, H, res_p, budget):
    """Pick (tile_h, tile_r, n_col, single_buffer) under a full VMEM model."""
    d_in = latent + n_att
    # Output-column split: the two v7x TensorCores stream disjoint halves of
    # W2 (dominant HBM traffic). Only W1, which is tiny, gets re-streamed.
    n_col = 2 if (res_p % 256 == 0) else 1
    tile_r = res_p // n_col

    def footprint(tile_h, n_buf):
        streamed = (d_in * tile_h * 2          # W1 row-slices (bf16)
                    + tile_h * 4               # b1 chunk (f32)
                    + tile_h * tile_r)         # W2 chunk (int8)
        resident = (B * latent * 4 + B * n_att * 4      # noise / att (f32)
                    + 2 * tile_r * 4                    # s2 + b2 (f32)
                    + B * tile_r * 4)                   # resident f32 out acc
        interm = (B * tile_h * 6                        # h in f32 + bf16 copy
                  + tile_h * tile_r * 2)                # W2 int8->bf16 temp
        return n_buf * streamed + 2 * resident + interm

    if n_col == 1 and footprint(H, 1) <= budget:
        # Single grid step along H: the second streaming buffer is pure waste;
        # only request single-buffering if double-buffering would not fit.
        single_buffer = footprint(H, 2) > budget
        return H, tile_r, n_col, single_buffer

    tile_h = H
    while footprint(tile_h, 2) > budget and tile_h % 256 == 0 and tile_h > 256:
        tile_h //= 2
    return tile_h, tile_r, n_col, False


def _quantize_per_column(w):
    """Symmetric weight-only int8 with per-output-column f32 scales."""
    s = jnp.max(jnp.abs(w), axis=0, keepdims=True) / 127.0
    s = jnp.where(s > 0, s, 1.0)
    q = jnp.clip(jnp.round(w / s), -127.0, 127.0).astype(jnp.int8)
    return q, s.astype(jnp.float32)


def mlp_g_forward(noise, att, w1, b1, w2, b2, *, negative_slope=0.2,
                  tile_h=None):
    """Pallas forward pass of MLP_G.

    noise: [B, latent], att: [B, attSize]
    w1: [latent + attSize, H] (pre-transposed), b1: [H]
    w2: [H, resSize] (pre-transposed), b2: [resSize]
    """
    B, latent = noise.shape
    _, n_att = att.shape
    d_in, H = w1.shape
    assert d_in == latent + n_att
    res = w2.shape[1]

    # Lane-pad fc2 / output to a multiple of 128 so accumulator updates and the
    # final store are unmasked; padding is sliced off at the end.
    res_p = pl.cdiv(res, 128) * 128
    if res_p != res:
        w2 = jnp.pad(w2, ((0, 0), (0, res_p - res)))
        b2 = jnp.pad(b2, (0, res_p - res))

    # W1 (d_in x H) is negligible traffic: stream as bf16. W2 dominates HBM
    # traffic: weight-only int8 with per-output-column f32 scales.
    # TODO(synk): on v7x stream W2 as fp8 (MXU-native) instead of int8.
    w1n = w1[:latent, :].astype(jnp.bfloat16)   # rows hit by `noise`
    w1a = w1[latent:, :].astype(jnp.bfloat16)   # rows hit by `att`
    b1_2d = b1.reshape(1, H).astype(jnp.float32)
    w2q, s2 = _quantize_per_column(w2.astype(jnp.float32))
    b2_2d = b2.reshape(1, res_p).astype(jnp.float32)

    vmem_limit, budget = _vmem_budget()
    auto_tile_h, tile_r, n_col, single_buffer = _pick_tiles(
        B, latent, n_att, H, res_p, budget)
    if tile_h is None:
        tile_h = auto_tile_h
    assert H % tile_h == 0 and (tile_h == H or tile_h % 128 == 0)
    n_h = H // tile_h

    stream_mode = {}
    if single_buffer and n_col == 1 and n_h == 1:
        # Only one grid step: reclaim the unused second streaming buffer
        # instead of halving the tile.
        stream_mode = dict(pipeline_mode=pl.Buffered(1))

    kernel = functools.partial(_mlp_g_kernel, negative_slope=negative_slope)

    # Advisory cost hint so XLA schedules neighboring ops around this short,
    # memory-bound kernel instead of serializing on it.
    flops = 2 * B * d_in * H + 2 * B * H * res_p
    bytes_accessed = (d_in * H * 2 + H * 4          # W1 (bf16) + b1
                      + H * res_p                   # W2 (int8)
                      + 2 * res_p * 4               # s2 + b2
                      + B * d_in * 4 + B * res_p * 4)
    cost = pl.CostEstimate(flops=flops, transcendentals=B * res_p,
                           bytes_accessed=bytes_accessed)

    out = pl.pallas_call(
        kernel,
        out_shape=jax.ShapeDtypeStruct((B, res_p), jnp.float32),
        grid_spec=pltpu.PrefetchScalarGridSpec(
            num_scalar_prefetch=0,
            grid=(n_col, n_h),
            in_specs=[
                pl.BlockSpec((B, latent), lambda j, k: (0, 0)),       # noise (resident)
                pl.BlockSpec((B, n_att), lambda j, k: (0, 0)),        # att   (resident)
                pl.BlockSpec((latent, tile_h), lambda j, k: (0, k),   # W1[:latent] chunk
                             **stream_mode),
                pl.BlockSpec((n_att, tile_h), lambda j, k: (0, k),    # W1[latent:] chunk
                             **stream_mode),
                pl.BlockSpec((1, tile_h), lambda j, k: (0, k),        # b1 chunk
                             **stream_mode),
                pl.BlockSpec((tile_h, tile_r), lambda j, k: (k, j),   # W2 chunk (int8)
                             **stream_mode),
                pl.BlockSpec((1, tile_r), lambda j, k: (0, j)),       # s2 column slice
                pl.BlockSpec((1, tile_r), lambda j, k: (0, j)),       # b2 column slice
            ],
            out_specs=pl.BlockSpec((B, tile_r), lambda j, k: (0, j)),  # resident f32 acc
        ),
        compiler_params=pltpu.CompilerParams(
            dimension_semantics=("parallel", "arbitrary"),
            vmem_limit_bytes=vmem_limit),
        cost_estimate=cost,
        # TODO(synk): below B~128 this kernel is HBM weight-streaming bound;
        # batch several generator invocations in the caller before tuning MXU
        # row-fill.
    )(noise, att, w1n, w1a, b1_2d, w2q, s2, b2_2d)

    return out[:, :res]


def _reference(noise, att, w1, b1, w2, b2, negative_slope):
    """Pure-JAX reference mirroring the kernel's bf16 activation casts and the
    int8 per-column quantization of W2."""
    bf, f32 = jnp.bfloat16, jnp.float32
    x = jnp.concatenate([noise, att], axis=1).astype(bf).astype(f32)
    w1f = w1.astype(bf).astype(f32)
    h = x @ w1f + b1
    h = jnp.where(h > 0, h, negative_slope * h).astype(bf).astype(f32)
    w2q, s2 = _quantize_per_column(w2.astype(f32))
    w2f = w2q.astype(f32) * s2
    return jax.nn.sigmoid(h @ w2f + b2)


def _reference_fp32(noise, att, w1, b1, w2, b2, negative_slope):
    """Exact f32 semantics of the PyTorch module (for a loose sanity check)."""
    x = jnp.concatenate([noise, att], axis=1)
    h = x @ w1 + b1
    h = jnp.where(h > 0, h, negative_slope * h)
    return jax.nn.sigmoid(h @ w2 + b2)


if __name__ == "__main__":
    # Small opt consistent with the module.
    opt = dict(attSize=16, latent_feature_size=16, resSize=64,
               activate_index=0.2)
    B = 8
    H = 4096  # fixed by the module definition (fc1 -> 4096)

    key = jax.random.PRNGKey(0)
    k_noise, k_att, k_w1, k_w2 = jax.random.split(key, 4)

    d_in = opt["attSize"] + opt["latent_feature_size"]

    noise = jax.random.normal(k_noise, (B, opt["latent_feature_size"]),
                              dtype=jnp.float32)
    att = jax.random.normal(k_att, (B, opt["attSize"]), dtype=jnp.float32)

    # weights_init: Linear weights ~ N(0, 0.02), biases = 0.
    # PyTorch stores Linear weight as [out, in]; we keep the transposed [in, out].
    w1 = 0.02 * jax.random.normal(k_w1, (d_in, H), dtype=jnp.float32)
    b1 = jnp.zeros((H,), dtype=jnp.float32)
    w2 = 0.02 * jax.random.normal(k_w2, (H, opt["resSize"]), dtype=jnp.float32)
    b2 = jnp.zeros((opt["resSize"],), dtype=jnp.float32)

    out = mlp_g_forward(noise, att, w1, b1, w2, b2,
                        negative_slope=opt["activate_index"])
    out = jax.block_until_ready(out)

    ref = _reference(noise, att, w1, b1, w2, b2, opt["activate_index"])
    ref_f32 = _reference_fp32(noise, att, w1, b1, w2, b2, opt["activate_index"])
    assert out.shape == (B, opt["resSize"])
    assert jnp.allclose(out, ref, atol=5e-3, rtol=5e-3), "mismatch vs mirrored reference"
    assert jnp.allclose(out, ref_f32, atol=1e-2, rtol=1e-2), "mismatch vs f32 module reference"

    print("KERNEL_OK")
</pallas_src>

<mosaic_0001>
module attributes {stable_mosaic.version = 11 : i64} {
  func.func @_mlp_g_kernel(%arg0: i32, %arg1: i32, %arg2: memref<8x16xf32, #tpu.memory_space<vmem>>, %arg3: memref<8x16xf32, #tpu.memory_space<vmem>>, %arg4: memref<16x4096xbf16, #tpu.memory_space<vmem>>, %arg5: memref<16x4096xbf16, #tpu.memory_space<vmem>>, %arg6: memref<1x4096xf32, #tpu.memory_space<vmem>>, %arg7: memref<4096x128xi8, #tpu.memory_space<vmem>>, %arg8: memref<1x128xf32, #tpu.memory_space<vmem>>, %arg9: memref<1x128xf32, #tpu.memory_space<vmem>>, %arg10: memref<8x128xf32, #tpu.memory_space<vmem>>) attributes {dimension_semantics = [#tpu.dimension_semantics<parallel>, #tpu.dimension_semantics<arbitrary>], iteration_bounds = array<i64: 1, 1>, scalar_prefetch = 0 : i64, scratch_operands = 0 : i64, tpu.core_type = #tpu.core_type<tc>, window_params = [{pipeline_mode = #tpu.pipeline_mode<synchronous>, transform_indices = @transform_0, window_bounds = array<i64: 8, 16>}, {pipeline_mode = #tpu.pipeline_mode<synchronous>, transform_indices = @transform_1, window_bounds = array<i64: 8, 16>}, {transform_indices = @transform_2, window_bounds = array<i64: 16, 4096>}, {transform_indices = @transform_3, window_bounds = array<i64: 16, 4096>}, {transform_indices = @transform_4, window_bounds = array<i64: 1, 4096>}, {transform_indices = @transform_5, window_bounds = array<i64: 4096, 128>}, {transform_indices = @transform_6, window_bounds = array<i64: 1, 128>}, {transform_indices = @transform_7, window_bounds = array<i64: 1, 128>}, {transform_indices = @transform_8, window_bounds = array<i64: 8, 128>}]} {
    %c0_i32 = arith.constant 0 : i32
    %0 = arith.cmpi eq, %arg1, %c0_i32 : i32
    %1 = arith.extui %0 : i1 to i32
    %c0_i32_0 = arith.constant 0 : i32
    %2 = arith.cmpi ne, %1, %c0_i32_0 : i32
    scf.if %2 {
      %cst_22 = arith.constant 0.000000e+00 : f32
      %30 = vector.broadcast %cst_22 : f32 to vector<8x128xf32>
      %c0_23 = arith.constant 0 : index
      %c0_24 = arith.constant 0 : index
      %31 = vector.load %arg10[%c0_23, %c0_24] : memref<8x128xf32, #tpu.memory_space<vmem>>, vector<8x128xf32>
      tpu.vector_store %arg10[%c0_23, %c0_24], %30 {strides = array<i32>} : memref<8x128xf32, #tpu.memory_space<vmem>>, vector<8x128xf32>,
    } else {
    }
    %c0 = arith.constant 0 : index
    %c0_1 = arith.constant 0 : index
    %3 = vector.load %arg2[%c0, %c0_1] : memref<8x16xf32, #tpu.memory_space<vmem>>, vector<8x16xf32>
    %4 = arith.truncf %3 : vector<8x16xf32> to vector<8x16xbf16>
    %c0_2 = arith.constant 0 : index
    %c0_3 = arith.constant 0 : index
    %5 = vector.load %arg4[%c0_2, %c0_3] : memref<16x4096xbf16, #tpu.memory_space<vmem>>, vector<16x4096xbf16>
    %cst = arith.constant dense<0.000000e+00> : vector<8x4096xf32>
    %6 = tpu.matmul %4, %5, %cst {dimension_numbers = #tpu.dot_dimension_numbers<[1], [0], [0], [1], [0, 0, 1, 1], [], []>} : vector<8x16xbf16>, vector<16x4096xbf16>, vector<8x4096xf32> -> vector<8x4096xf32>
    %c0_4 = arith.constant 0 : index
    %c0_5 = arith.constant 0 : index
    %7 = vector.load %arg3[%c0_4, %c0_5] : memref<8x16xf32, #tpu.memory_space<vmem>>, vector<8x16xf32>
    %8 = arith.truncf %7 : vector<8x16xf32> to vector<8x16xbf16>
    %c0_6 = arith.constant 0 : index
    %c0_7 = arith.constant 0 : index
    %9 = vector.load %arg5[%c0_6, %c0_7] : memref<16x4096xbf16, #tpu.memory_space<vmem>>, vector<16x4096xbf16>
    %cst_8 = arith.constant dense<0.000000e+00> : vector<8x4096xf32>
    %10 = tpu.matmul %8, %9, %cst_8 {dimension_numbers = #tpu.dot_dimension_numbers<[1], [0], [0], [1], [0, 0, 1, 1], [], []>} : vector<8x16xbf16>, vector<16x4096xbf16>, vector<8x4096xf32> -> vector<8x4096xf32>
    %11 = arith.addf %6, %10 : vector<8x4096xf32>
    %c0_9 = arith.constant 0 : index
    %c0_10 = arith.constant 0 : index
    %12 = vector.load %arg6[%c0_9, %c0_10] : memref<1x4096xf32, #tpu.memory_space<vmem>>, vector<1x4096xf32>
    %13 = vector.broadcast %12 : vector<1x4096xf32> to vector<8x4096xf32>
    %14 = arith.addf %11, %13 : vector<8x4096xf32>
    %cst_11 = arith.constant 0.000000e+00 : f32
    %15 = vector.broadcast %cst_11 : f32 to vector<8x4096xf32>
    %16 = arith.cmpf ogt, %14, %15 : vector<8x4096xf32>
    %cst_12 = arith.constant 2.000000e-01 : f32
    %17 = vector.broadcast %cst_12 : f32 to vector<8x4096xf32>
    %18 = arith.mulf %17, %14 : vector<8x4096xf32>
    %19 = arith.select %16, %14, %18 : vector<8x4096xi1>, vector<8x4096xf32>
    %c0_13 = arith.constant 0 : index
    %c0_14 = arith.constant 0 : index
    %20 = vector.load %arg10[%c0_13, %c0_14] : memref<8x128xf32, #tpu.memory_space<vmem>>, vector<8x128xf32>
    %21 = arith.truncf %19 : vector<8x4096xf32> to vector<8x4096xbf16>
    %c0_15 = arith.constant 0 : index
    %c0_16 = arith.constant 0 : index
    %22 = vector.load %arg7[%c0_15, %c0_16] : memref<4096x128xi8, #tpu.memory_space<vmem>>, vector<4096x128xi8>
    %23 = arith.sitofp %22 : vector<4096x128xi8> to vector<4096x128xbf16>
    %cst_17 = arith.constant dense<0.000000e+00> : vector<8x128xf32>
    %24 = tpu.matmul %21, %23, %cst_17 {dimension_numbers = #tpu.dot_dimension_numbers<[1], [0], [0], [1], [0, 0, 1, 1], [], []>} : vector<8x4096xbf16>, vector<4096x128xbf16>, vector<8x128xf32> -> vector<8x128xf32>
    %25 = arith.addf %20, %24 : vector<8x128xf32>
    %c0_18 = arith.constant 0 : index
    %c0_19 = arith.constant 0 : index
    %26 = vector.load %arg10[%c0_18, %c0_19] : memref<8x128xf32, #tpu.memory_space<vmem>>, vector<8x128xf32>
    tpu.vector_store %arg10[%c0_18, %c0_19], %25 {strides = array<i32>} : memref<8x128xf32, #tpu.memory_space<vmem>>, vector<8x128xf32>,
    %c0_i32_20 = arith.constant 0 : i32
    %27 = arith.cmpi eq, %arg1, %c0_i32_20 : i32
    %28 = arith.extui %27 : i1 to i32
    %c0_i32_21 = arith.constant 0 : i32
    %29 = arith.cmpi ne, %28, %c0_i32_21 : i32
    scf.if %29 {
      %c0_22 = arith.constant 0 : index
      %c0_23 = arith.constant 0 : index
      %30 = vector.load %arg10[%c0_22, %c0_23] : memref<8x128xf32, #tpu.memory_space<vmem>>, vector<8x128xf32>
      %c0_24 = arith.constant 0 : index
      %c0_25 = arith.constant 0 : index
      %31 = vector.load %arg8[%c0_24, %c0_25] : memref<1x128xf32, #tpu.memory_space<vmem>>, vector<1x128xf32>
      %32 = vector.broadcast %31 : vector<1x128xf32> to vector<8x128xf32>
      %33 = arith.mulf %30, %32 : vector<8x128xf32>
      %c0_26 = arith.constant 0 : index
      %c0_27 = arith.constant 0 : index
      %34 = vector.load %arg9[%c0_26, %c0_27] : memref<1x128xf32, #tpu.memory_space<vmem>>, vector<1x128xf32>
      %35 = vector.broadcast %34 : vector<1x128xf32> to vector<8x128xf32>
      %36 = arith.addf %33, %35 : vector<8x128xf32>
      %cst_28 = arith.constant 5.000000e-01 : f32
      %37 = vector.broadcast %cst_28 : f32 to vector<8x128xf32>
      %38 = arith.mulf %37, %36 : vector<8x128xf32>
      %39 = math.tanh %38 : vector<8x128xf32>
      %cst_29 = arith.constant 1.000000e+00 : f32
      %40 = vector.broadcast %cst_29 : f32 to vector<8x128xf32>
      %41 = arith.addf %39, %40 : vector<8x128xf32>
      %cst_30 = arith.constant 5.000000e-01 : f32
      %42 = vector.broadcast %cst_30 : f32 to vector<8x128xf32>
      %43 = arith.mulf %42, %41 : vector<8x128xf32>
      %c0_31 = arith.constant 0 : index
      %c0_32 = arith.constant 0 : index
      %44 = vector.load %arg10[%c0_31, %c0_32] : memref<8x128xf32, #tpu.memory_space<vmem>>, vector<8x128xf32>
      tpu.vector_store %arg10[%c0_31, %c0_32], %43 {strides = array<i32>} : memref<8x128xf32, #tpu.memory_space<vmem>>, vector<8x128xf32>,
    } else {
    }
    return
  }
  func.func @transform_0(%arg0: i32, %arg1: i32) -> (i32, i32) {
    %c0_i32 = arith.constant 0 : i32
    %c0_i32_0 = arith.constant 0 : i32
    %c0_i32_1 = arith.constant 0 : i32
    return %c0_i32, %c0_i32_0 : i32, i32
  }
  func.func @transform_1(%arg0: i32, %arg1: i32) -> (i32, i32) {
    %c0_i32 = arith.constant 0 : i32
    %c0_i32_0 = arith.constant 0 : i32
    %c0_i32_1 = arith.constant 0 : i32
    return %c0_i32, %c0_i32_0 : i32, i32
  }
  func.func @transform_2(%arg0: i32, %arg1: i32) -> (i32, i32) {
    %c0_i32 = arith.constant 0 : i32
    %c0_i32_0 = arith.constant 0 : i32
    return %c0_i32, %arg1 : i32, i32
  }
  func.func @transform_3(%arg0: i32, %arg1: i32) -> (i32, i32) {
    %c0_i32 = arith.constant 0 : i32
    %c0_i32_0 = arith.constant 0 : i32
    return %c0_i32, %arg1 : i32, i32
  }
  func.func @transform_4(%arg0: i32, %arg1: i32) -> (i32, i32) {
    %c0_i32 = arith.constant 0 : i32
    %c0_i32_0 = arith.constant 0 : i32
    return %c0_i32, %arg1 : i32, i32
  }
  func.func @transform_5(%arg0: i32, %arg1: i32) -> (i32, i32) {
    %c0_i32 = arith.constant 0 : i32
    return %arg1, %arg0 : i32, i32
  }
  func.func @transform_6(%arg0: i32, %arg1: i32) -> (i32, i32) {
    %c0_i32 = arith.constant 0 : i32
    %c0_i32_0 = arith.constant 0 : i32
    return %c0_i32, %arg0 : i32, i32
  }
  func.func @transform_7(%arg0: i32, %arg1: i32) -> (i32, i32) {
    %c0_i32 = arith.constant 0 : i32
    %c0_i32_0 = arith.constant 0 : i32
    return %c0_i32, %arg0 : i32, i32
  }
  func.func @transform_8(%arg0: i32, %arg1: i32) -> (i32, i32) {
    %c0_i32 = arith.constant 0 : i32
    %c0_i32_0 = arith.constant 0 : i32
    return %c0_i32, %arg0 : i32, i32
  }
}

</mosaic_0001>

<llo_original>
// kernel: tpu_custom_call.1
$region0: #{tpu_custom_call.1}
  #allocation0 [shape = 'u32[]', space=smem, size = 0x4, offset = 0x4, fixed_abs, tag = 'smem constant byte address 0x4 - core index']
  #allocation1 [shape = 'u32[144,128]{1,0:T(1,128)}', space=vmem, size = 0x12000, scoped, tag = 'internal scratch']
  %s0 = inlined_call_operand.hbm [shape: f32[8,16], index: 0, kind: input, shape index: {}]
  %s1 = inlined_call_operand.hbm [shape: f32[8,16], index: 1, kind: input, shape index: {}]
  %s2 = inlined_call_operand.hbm [shape: bf16[16,4096], index: 2, kind: input, shape index: {}]
  %s3 = inlined_call_operand.hbm [shape: bf16[16,4096], index: 3, kind: input, shape index: {}]
  %s4 = inlined_call_operand.hbm [shape: f32[1,4096], index: 4, kind: input, shape index: {}]
  %s5 = inlined_call_operand.hbm [shape: s8[4096,128], index: 5, kind: input, shape index: {}]
  %s6 = inlined_call_operand.vmem [shape: f32[1,128], index: 6, kind: input, shape index: {}]
  %s7 = inlined_call_operand.vmem [shape: f32[1,128], index: 7, kind: input, shape index: {}]
  %s8 = inlined_call_operand.hbm [shape: f32[8,128], index: 8, kind: output, shape index: {}]
  %s9 = sld [smem:[#allocation0]]
  $region74: #{tpu_custom_call.1} parent=0
    _
  %s11 = ssub.s32 1, %s9
  %s12 = scalar_select 0, %s11, %s9
  $region1: #{tpu_custom_call.1} parent=0
    #allocation2 [shape = 'u8[4096]{0}', space=vmem, size = 0x1000, scoped, tag = 'input window, operand 0, single buffered']
    #allocation3 [shape = 's32[1]{0}', space=sflag, size = 0x4, scoped, tag = 'scoped memory for tpu_custom_call.1']
    #allocation4 [shape = 's32[1]{0}', space=sflag, size = 0x4, scoped, tag = 'scoped memory for tpu_custom_call.1']
    #allocation5 [shape = 'u8[4096]{0}', space=vmem, size = 0x1000, scoped, tag = 'input window, operand 1, single buffered']
    #allocation6 [shape = 's32[1]{0}', space=sflag, size = 0x4, scoped, tag = 'scoped memory for tpu_custom_call.1']
    #allocation7 [shape = 'u8[131072]{0}', space=vmem, size = 0x20000, scoped, tag = 'input window, operand 2, single buffered']
    #allocation8 [shape = 'u8[131072]{0}', space=vmem, size = 0x20000, scoped, tag = 'input window, operand 3, single buffered']
    #allocation9 [shape = 's32[1]{0}', space=sflag, size = 0x4, scoped, tag = 'scoped memory for tpu_custom_call.1']
    #allocation10 [shape = 'u8[16384]{0}', space=vmem, size = 0x4000, scoped, tag = 'input window, operand 4, single buffered']
    #allocation11 [shape = 'u8[524288]{0}', space=vmem, size = 0x80000, scoped, tag = 'input window, operand 5, single buffered']
    #allocation12 [shape = 's32[1]{0}', space=sflag, size = 0x4, scoped, tag = 'scoped memory for tpu_custom_call.1']
    #allocation13 [shape = 'u8[4096]{0}', space=vmem, size = 0x1000, scoped, tag = 'output window, operand 0, single buffered']
    %13 = vsyncpa [#allocation3], 0
    %14 = vsyncpa [#allocation6], 0
    %15 = vsyncpa [#allocation9], 0
    %16 = vsyncpa [#allocation12], 0
    %17 = vsyncpa [#allocation4], 0
    // Predicated region
    $region2: #{tpu_custom_call.1} parent=1 // pred_check
      _
    $region3: #{tpu_custom_call.1} parent=1 // pred_check_branch
      %19 = sbr.rel (0) target = $region5
    $region4: #{tpu_custom_call.1} parent=1 // pred_region
      %s21 = ssub.s32 128, 128
      %22 = vsyncadd [#allocation3], %s21
      %s24 = sshll.u32 [#allocation2], 4
      %s25 = int_to_ptr.vmem [resolvable:$true] %s24
      %27 = dma.hbm_to_vmem [thread:$0]  %s0, 128, %s25, [#allocation3]
    $region5: #{tpu_custom_call.1} parent=1 // pred_fallthru
      _
    // Predicated region
    $region6: #{tpu_custom_call.1} parent=1 // pred_check
      _
    $region7: #{tpu_custom_call.1} parent=1 // pred_check_branch
      %29 = sbr.rel (0) target = $region9
    $region8: #{tpu_custom_call.1} parent=1 // pred_region
      %s31 = ssub.s32 128, 128
      %32 = vsyncadd [#allocation6], %s31
      %s34 = sshll.u32 [#allocation5], 4
      %s35 = int_to_ptr.vmem [resolvable:$true] %s34
      %37 = dma.hbm_to_vmem [thread:$0]  %s1, 128, %s35, [#allocation6]
    $region9: #{tpu_custom_call.1} parent=1 // pred_fallthru
      _
    // Predicated region
    $region10: #{tpu_custom_call.1} parent=1 // pred_check
      _
    $region11: #{tpu_custom_call.1} parent=1 // pred_check_branch
      %39 = sbr.rel (0) target = $region13
    $region12: #{tpu_custom_call.1} parent=1 // pred_region
      %s41 = ssub.s32 4096, 4096
      %42 = vsyncadd [#allocation6], %s41
      %s43 = sshll.u32 [#allocation7], 4
      %s44 = int_to_ptr.vmem [resolvable:$true] %s43
      %49 = dma.hbm_to_vmem [thread:$0]  %s2, 4096, %s44, [#allocation6], 2048, 2048, 128
    $region13: #{tpu_custom_call.1} parent=1 // pred_fallthru
      _
    // Predicated region
    $region14: #{tpu_custom_call.1} parent=1 // pred_check
      _
    $region15: #{tpu_custom_call.1} parent=1 // pred_check_branch
      %51 = sbr.rel (0) target = $region17
    $region16: #{tpu_custom_call.1} parent=1 // pred_region
      %s53 = ssub.s32 4096, 4096
      %54 = vsyncadd [#allocation9], %s53
      %s55 = sshll.u32 [#allocation8], 4
      %s56 = int_to_ptr.vmem [resolvable:$true] %s55
      %61 = dma.hbm_to_vmem [thread:$0]  %s3, 4096, %s56, [#allocation9], 2048, 2048, 128
    $region17: #{tpu_custom_call.1} parent=1 // pred_fallthru
      _
    // Predicated region
    $region18: #{tpu_custom_call.1} parent=1 // pred_check
      _
    $region19: #{tpu_custom_call.1} parent=1 // pred_check_branch
      %63 = sbr.rel (0) target = $region21
    $region20: #{tpu_custom_call.1} parent=1 // pred_region
      %s65 = ssub.s32 512, 512
      %66 = vsyncadd [#allocation9], %s65
      %s68 = sshll.u32 [#allocation10], 4
      %s69 = int_to_ptr.vmem [resolvable:$true] %s68
      %71 = dma.hbm_to_vmem [thread:$0]  %s4, 512, %s69, [#allocation9]
    $region21: #{tpu_custom_call.1} parent=1 // pred_fallthru
      _
    // Predicated region
    $region22: #{tpu_custom_call.1} parent=1 // pred_check
      _
    $region23: #{tpu_custom_call.1} parent=1 // pred_check_branch
      %73 = sbr.rel (0) target = $region25
    $region24: #{tpu_custom_call.1} parent=1 // pred_region
      %s75 = ssub.s32 16384, 16384
      %76 = vsyncadd [#allocation12], %s75
      %s77 = sshll.u32 [#allocation11], 4
      %s78 = int_to_ptr.vmem [resolvable:$true] %s77
      %83 = dma.hbm_to_vmem [thread:$0]  %s5, 16384, %s78, [#allocation12], 128, 128, 8
    $region25: #{tpu_custom_call.1} parent=1 // pred_fallthru
      _
    // Predicated region
    $region26: #{tpu_custom_call.1} parent=1 // pred_check
      _
    $region27: #{tpu_custom_call.1} parent=1 // pred_check_branch
      %85 = sbr.rel (0) target = $region29
    $region28: #{tpu_custom_call.1} parent=1 // pred_region
      _
    $region29: #{tpu_custom_call.1} parent=1 // pred_fallthru
      _
    // Predicated region
    $region30: #{tpu_custom_call.1} parent=1 // pred_check
      _
    $region31: #{tpu_custom_call.1} parent=1 // pred_check_branch
      %87 = sbr.rel (0) target = $region33
    $region32: #{tpu_custom_call.1} parent=1 // pred_region
      _
    $region33: #{tpu_custom_call.1} parent=1 // pred_fallthru
      _
    // Predicated region
    $region34: #{tpu_custom_call.1} parent=1 // pred_check
      _
    $region35: #{tpu_custom_call.1} parent=1 // pred_check_branch
      %89 = sbr.rel (0) target = $region37
    $region36: #{tpu_custom_call.1} parent=1 // pred_region
      %90 = dma.done [#allocation3], 128
    $region37: #{tpu_custom_call.1} parent=1 // pred_fallthru
      _
    // Predicated region
    $region38: #{tpu_custom_call.1} parent=1 // pred_check
      _
    $region39: #{tpu_custom_call.1} parent=1 // pred_check_branch
      %92 = sbr.rel (0) target = $region41
    $region40: #{tpu_custom_call.1} parent=1 // pred_region
      %93 = dma.done [#allocation6], 128
    $region41: #{tpu_custom_call.1} parent=1 // pred_fallthru
      _
    // Predicated region
    $region42: #{tpu_custom_call.1} parent=1 // pred_check
      _
    $region43: #{tpu_custom_call.1} parent=1 // pred_check_branch
      %95 = sbr.rel (0) target = $region45
    $region44: #{tpu_custom_call.1} parent=1 // pred_region
      %96 = dma.done [#allocation6], 4096
    $region45: #{tpu_custom_call.1} parent=1 // pred_fallthru
      _
    // Predicated region
    $region46: #{tpu_custom_call.1} parent=1 // pred_check
      _
    $region47: #{tpu_custom_call.1} parent=1 // pred_check_branch
      %98 = sbr.rel (0) target = $region49
    $region48: #{tpu_custom_call.1} parent=1 // pred_region
      %99 = dma.done [#allocation9], 4096
    $region49: #{tpu_custom_call.1} parent=1 // pred_fallthru
      _
    // Predicated region
    $region50: #{tpu_custom_call.1} parent=1 // pred_check
      _
    $region51: #{tpu_custom_call.1} parent=1 // pred_check_branch
      %101 = sbr.rel (0) target = $region53
    $region52: #{tpu_custom_call.1} parent=1 // pred_region
      %102 = dma.done [#allocation9], 512
    $region53: #{tpu_custom_call.1} parent=1 // pred_fallthru
      _
    // Predicated region
    $region54: #{tpu_custom_call.1} parent=1 // pred_check
      _
    $region55: #{tpu_custom_call.1} parent=1 // pred_check_branch
      %104 = sbr.rel (0) target = $region57
    $region56: #{tpu_custom_call.1} parent=1 // pred_region
      %105 = dma.done [#allocation12], 16384
    $region57: #{tpu_custom_call.1} parent=1 // pred_fallthru
      _
    %p107 = scmp.eq.s32.totalorder 0, 0
    // Predicated region
    $region58: #{tpu_custom_call.1} parent=1 // pred_check
      %p108 = pneg %p107
    $region59: #{tpu_custom_call.1} parent=1 // pred_check_branch
      %110 = sbr.rel (%p108) target = $region61
    $region60: #{tpu_custom_call.1} parent=1 // pred_region
      %111 = vst [vmem:[#allocation13] sm:$0xff] 0.0
    $region61: #{tpu_custom_call.1} parent=1 // pred_fallthru
      _
    %v112 = vld [vmem:[#allocation2] sm:$0xff]
    %v113 = vpack.c.bf16 %v112, %v112
    %v114 = vld [vmem:[#allocation7] sm:$0xff]
    %v115 = vld [vmem:[#allocation7 + $0x8] sm:$0xff]
    %v116 = vld [vmem:[#allocation7 + $0x10] sm:$0xff]
    %v117 = vld [vmem:[#allocation7 + $0x18] sm:$0xff]
    %v118 = vld [vmem:[#allocation7 + $0x20] sm:$0xff]
    %v119 = vld [vmem:[#allocation7 + $0x28] sm:$0xff]
    %v120 = vld [vmem:[#allocation7 + $0x30] sm:$0xff]
    %v121 = vld [vmem:[#allocation7 + $0x38] sm:$0xff]
    %v122 = vld [vmem:[#allocation7 + $0x40] sm:$0xff]
    %v123 = vld [vmem:[#allocation7 + $0x48] sm:$0xff]
    %v124 = vld [vmem:[#allocation7 + $0x50] sm:$0xff]
    %v125 = vld [vmem:[#allocation7 + $0x58] sm:$0xff]
    %v126 = vld [vmem:[#allocation7 + $0x60] sm:$0xff]
    %v127 = vld [vmem:[#allocation7 + $0x68] sm:$0xff]
    %v128 = vld [vmem:[#allocation7 + $0x70] sm:$0xff]
    %v129 = vld [vmem:[#allocation7 + $0x78] sm:$0xff]
    %v130 = vld [vmem:[#allocation7 + $0x80] sm:$0xff]
    %v131 = vld [vmem:[#allocation7 + $0x88] sm:$0xff]
    %v132 = vld [vmem:[#allocation7 + $0x90] sm:$0xff]
    %v133 = vld [vmem:[#allocation7 + $0x98] sm:$0xff]
    %v134 = vld [vmem:[#allocation7 + $0xa0] sm:$0xff]
    %v135 = vld [vmem:[#allocation7 + $0xa8] sm:$0xff]
    %v136 = vld [vmem:[#allocation7 + $0xb0] sm:$0xff]
    %v137 = vld [vmem:[#allocation7 + $0xb8] sm:$0xff]
    %v138 = vld [vmem:[#allocation7 + $0xc0] sm:$0xff]
    %v139 = vld [vmem:[#allocation7 + $0xc8] sm:$0xff]
    %v140 = vld [vmem:[#allocation7 + $0xd0] sm:$0xff]
    %v141 = vld [vmem:[#allocation7 + $0xd8] sm:$0xff]
    %v142 = vld [vmem:[#allocation7 + $0xe0] sm:$0xff]
    %v143 = vld [vmem:[#allocation7 + $0xe8] sm:$0xff]
    %v144 = vld [vmem:[#allocation7 + $0xf0] sm:$0xff]
    %v145 = vld [vmem:[#allocation7 + $0xf8] sm:$0xff]
    %v146 = vld [vmem:[#allocation5] sm:$0xff]
    %v147 = vpack.c.bf16 %v146, %v146
    %v148 = vld [vmem:[#allocation8] sm:$0xff]
    %v149 = vld [vmem:[#allocation8 + $0x8] sm:$0xff]
    %v150 = vld [vmem:[#allocation8 + $0x10] sm:$0xff]
    %v151 = vld [vmem:[#allocation8 + $0x18] sm:$0xff]
    %v152 = vld [vmem:[#allocation8 + $0x20] sm:$0xff]
    %v153 = vld [vmem:[#allocation8 + $0x28] sm:$0xff]
    %v154 = vld [vmem:[#allocation8 + $0x30] sm:$0xff]
    %v155 = vld [vmem:[#allocation8 + $0x38] sm:$0xff]
    %v156 = vld [vmem:[#allocation8 + $0x40] sm:$0xff]
    %v157 = vld [vmem:[#allocation8 + $0x48] sm:$0xff]
    %v158 = vld [vmem:[#allocation8 + $0x50] sm:$0xff]
    %v159 = vld [vmem:[#allocation8 + $0x58] sm:$0xff]
    %v160 = vld [vmem:[#allocation8 + $0x60] sm:$0xff]
    %v161 = vld [vmem:[#allocation8 + $0x68] sm:$0xff]
    %v162 = vld [vmem:[#allocation8 + $0x70] sm:$0xff]
    %v163 = vld [vmem:[#allocation8 + $0x78] sm:$0xff]
    %v164 = vld [vmem:[#allocation8 + $0x80] sm:$0xff]
    %v165 = vld [vmem:[#allocation8 + $0x88] sm:$0xff]
    %v166 = vld [vmem:[#allocation8 + $0x90] sm:$0xff]
    %v167 = vld [vmem:[#allocation8 + $0x98] sm:$0xff]
    %v168 = vld [vmem:[#allocation8 + $0xa0] sm:$0xff]
    %v169 = vld [vmem:[#allocation8 + $0xa8] sm:$0xff]
    %v170 = vld [vmem:[#allocation8 + $0xb0] sm:$0xff]
    %v171 = vld [vmem:[#allocation8 + $0xb8] sm:$0xff]
    %v172 = vld [vmem:[#allocation8 + $0xc0] sm:$0xff]
    %v173 = vld [vmem:[#allocation8 + $0xc8] sm:$0xff]
    %v174 = vld [vmem:[#allocation8 + $0xd0] sm:$0xff]
    %v175 = vld [vmem:[#allocation8 + $0xd8] sm:$0xff]
    %v176 = vld [vmem:[#allocation8 + $0xe0] sm:$0xff]
    %v177 = vld [vmem:[#allocation8 + $0xe8] sm:$0xff]
    %v178 = vld [vmem:[#allocation8 + $0xf0] sm:$0xff]
    %v179 = vld [vmem:[#allocation8 + $0xf8] sm:$0xff]
    %v212 = vunpack.c.l.b16 %v148
    %v213 = vunpack.c.h.b16 %v148
    %v214 = vunpack.c.l.b16 %v149
    %v215 = vunpack.c.h.b16 %v149
    %v216 = vunpack.c.l.b16 %v150
    %v217 = vunpack.c.h.b16 %v150
    %v218 = vunpack.c.l.b16 %v151
    %v219 = vunpack.c.h.b16 %v151
    %v220 = vunpack.c.l.b16 %v152
    %v221 = vunpack.c.h.b16 %v152
    %v222 = vunpack.c.l.b16 %v153
    %v223 = vunpack.c.h.b16 %v153
    %v224 = vunpack.c.l.b16 %v154
    %v225 = vunpack.c.h.b16 %v154
    %v226 = vunpack.c.l.b16 %v155
    %v227 = vunpack.c.h.b16 %v155
    %v228 = vunpack.c.l.b16 %v156
    %v229 = vunpack.c.h.b16 %v156
    %v230 = vunpack.c.l.b16 %v157
    %v231 = vunpack.c.h.b16 %v157
    %v232 = vunpack.c.l.b16 %v158
    %v233 = vunpack.c.h.b16 %v158
    %v234 = vunpack.c.l.b16 %v159
    %v235 = vunpack.c.h.b16 %v159
    %v236 = vunpack.c.l.b16 %v160
    %v237 = vunpack.c.h.b16 %v160
    %v238 = vunpack.c.l.b16 %v161
    %v239 = vunpack.c.h.b16 %v161
    %v240 = vunpack.c.l.b16 %v162
    %v241 = vunpack.c.h.b16 %v162
    %v242 = vunpack.c.l.b16 %v163
    %v243 = vunpack.c.h.b16 %v163
    %v244 = vunpack.c.l.b16 %v164
    %v245 = vunpack.c.h.b16 %v164
    %v246 = vunpack.c.l.b16 %v165
    %v247 = vunpack.c.h.b16 %v165
    %v248 = vunpack.c.l.b16 %v166
    %v249 = vunpack.c.h.b16 %v166
    %v250 = vunpack.c.l.b16 %v167
    %v251 = vunpack.c.h.b16 %v167
    %v252 = vunpack.c.l.b16 %v168
    %v253 = vunpack.c.h.b16 %v168
    %v254 = vunpack.c.l.b16 %v169
    %v255 = vunpack.c.h.b16 %v169
    %v256 = vunpack.c.l.b16 %v170
    %v257 = vunpack.c.h.b16 %v170
    %v258 = vunpack.c.l.b16 %v171
    %v259 = vunpack.c.h.b16 %v171
    %v260 = vunpack.c.l.b16 %v172
    %v261 = vunpack.c.h.b16 %v172
    %v262 = vunpack.c.l.b16 %v173
    %v263 = vunpack.c.h.b16 %v173
    %v264 = vunpack.c.l.b16 %v174
    %v265 = vunpack.c.h.b16 %v174
    %v266 = vunpack.c.l.b16 %v175
    %v267 = vunpack.c.h.b16 %v175
    %v268 = vunpack.c.l.b16 %v176
    %v269 = vunpack.c.h.b16 %v176
    %v270 = vunpack.c.l.b16 %v177
    %v271 = vunpack.c.h.b16 %v177
    %v272 = vunpack.c.l.b16 %v178
    %v273 = vunpack.c.h.b16 %v178
    %v274 = vunpack.c.l.b16 %v179
    %v275 = vunpack.c.h.b16 %v179
    %v276 = vpack.c.b16 %v244, %v212
    %v277 = vpack.c.b16 %v245, %v213
    %v278 = vpack.c.b16 %v246, %v214
    %v279 = vpack.c.b16 %v247, %v215
    %v280 = vpack.c.b16 %v248, %v216
    %v281 = vpack.c.b16 %v249, %v217
    %v282 = vpack.c.b16 %v250, %v218
    %v283 = vpack.c.b16 %v251, %v219
    %v284 = vpack.c.b16 %v252, %v220
    %v285 = vpack.c.b16 %v253, %v221
    %v286 = vpack.c.b16 %v254, %v222
    %v287 = vpack.c.b16 %v255, %v223
    %v288 = vpack.c.b16 %v256, %v224
    %v289 = vpack.c.b16 %v257, %v225
    %v290 = vpack.c.b16 %v258, %v226
    %v291 = vpack.c.b16 %v259, %v227
    %v292 = vpack.c.b16 %v260, %v228
    %v293 = vpack.c.b16 %v261, %v229
    %v294 = vpack.c.b16 %v262, %v230
    %v295 = vpack.c.b16 %v263, %v231
    %v296 = vpack.c.b16 %v264, %v232
    %v297 = vpack.c.b16 %v265, %v233
    %v298 = vpack.c.b16 %v266, %v234
    %v299 = vpack.c.b16 %v267, %v235
    %v300 = vpack.c.b16 %v268, %v236
    %v301 = vpack.c.b16 %v269, %v237
    %v302 = vpack.c.b16 %v270, %v238
    %v303 = vpack.c.b16 %v271, %v239
    %v304 = vpack.c.b16 %v272, %v240
    %v305 = vpack.c.b16 %v273, %v241
    %v306 = vpack.c.b16 %v274, %v242
    %v307 = vpack.c.b16 %v275, %v243
    %vm340 = vcmask 130048
    %v342 = vsel %vm340, %v147, 0
    %344 = vmatprep.subr.bf16.mxu0 0
    %345 = vmatpush1.bf16.msra.mxu0 0
    %346 = vmatprep.subr.bf16.mxu0 0
    %347 = vmatpush1.bf16.msra.mxu0 0
    %348 = vmatprep.subr.bf16.mxu0 0
    %349 = vmatpush1.bf16.msra.mxu0 0
    %350 = vmatprep.subr.bf16.mxu0 0
    %351 = vmatpush1.bf16.msra.mxu0 0
    %352 = vmatprep.subr.bf16.mxu0 0
    %353 = vmatpush1.bf16.msra.mxu0 0
    %354 = vmatprep.subr.bf16.mxu0 0
    %355 = vmatpush1.bf16.msra.mxu0 0
    %356 = vmatprep.subr.bf16.mxu0 0
    %357 = vmatpush1.bf16.msra.mxu0 0
    %358 = vmatprep.subr.bf16.mxu0 %v277
    %359 = vmatpush1.bf16.msra.mxu0 %v276
    %360 = vmatprep.subr.bf16.mxu0 0
    %361 = vmatpush2.bf16.msra.mxu0 0
    %362 = vmatprep.subr.bf16.mxu0 0
    %363 = vmatpush2.bf16.msra.mxu0 0
    %364 = vmatprep.subr.bf16.mxu0 0
    %365 = vmatpush2.bf16.msra.mxu0 0
    %366 = vmatprep.subr.bf16.mxu0 0
    %367 = vmatpush2.bf16.msra.mxu0 0
    %368 = vmatprep.subr.bf16.mxu0 0
    %369 = vmatpush2.bf16.msra.mxu0 0
    %370 = vmatprep.subr.bf16.mxu0 0
    %371 = vmatpush2.bf16.msra.mxu0 0
    %372 = vmatprep.subr.bf16.mxu0 0
    %373 = vmatpush2.bf16.msra.mxu0 0
    %374 = vmatprep.subr.bf16.mxu0 0
    %375 = vmatpush2.bf16.msra.mxu0 0
    %376 = vmatprep.mubr.bf16.mxu0 0
    %377 = vmatmul.mubr.bf16.gmra.mxu0 %v342
    %v378 = vpop.f32.mrf.mxu0
    %v379 = vadd.f32 0.0, %v378
    %v380 = vpop.f32.mrf.mxu0
    %v381 = vadd.f32 0.0, %v380
    %v382 = vpop.f32.mrf.mxu0
    %v383 = vpop.f32.mrf.mxu0
    %384 = vdwg.mxu0
    %385 = vmatprep.subr.bf16.mxu0 0
    %386 = vmatpush1.bf16.msra.mxu0 0
    %387 = vmatprep.subr.bf16.mxu0 0
    %388 = vmatpush1.bf16.msra.mxu0 0
    %389 = vmatprep.subr.bf16.mxu0 0
    %390 = vmatpush1.bf16.msra.mxu0 0
    %391 = vmatprep.subr.bf16.mxu0 0
    %392 = vmatpush1.bf16.msra.mxu0 0
    %393 = vmatprep.subr.bf16.mxu0 0
    %394 = vmatpush1.bf16.msra.mxu0 0
    %395 = vmatprep.subr.bf16.mxu0 0
    %396 = vmatpush1.bf16.msra.mxu0 0
    %397 = vmatprep.subr.bf16.mxu0 0
    %398 = vmatpush1.bf16.msra.mxu0 0
    %399 = vmatprep.subr.bf16.mxu0 %v279
    %400 = vmatpush1.bf16.msra.mxu0 %v278
    %401 = vmatprep.subr.bf16.mxu0 0
    %402 = vmatpush2.bf16.msra.mxu0 0
    %403 = vmatprep.subr.bf16.mxu0 0
    %404 = vmatpush2.bf16.msra.mxu0 0
    %405 = vmatprep.subr.bf16.mxu0 0
    %406 = vmatpush2.bf16.msra.mxu0 0
    %407 = vmatprep.subr.bf16.mxu0 0
    %408 = vmatpush2.bf16.msra.mxu0 0
    %409 = vmatprep.subr.bf16.mxu0 0
    %410 = vmatpush2.bf16.msra.mxu0 0
    %411 = vmatprep.subr.bf16.mxu0 0
    %412 = vmatpush2.bf16.msra.mxu0 0
    %413 = vmatprep.subr.bf16.mxu0 0
    %414 = vmatpush2.bf16.msra.mxu0 0
    %415 = vmatprep.subr.bf16.mxu0 0
    %416 = vmatpush2.bf16.msra.mxu0 0
    %417 = vmatprep.mubr.bf16.mxu0 0
    %418 = vmatmul.mubr.bf16.gmra.mxu0 %v342
    %v419 = vpop.f32.mrf.mxu0
    %v420 = vadd.f32 0.0, %v419
    %v421 = vpop.f32.mrf.mxu0
    %v422 = vadd.f32 0.0, %v421
    %v423 = vpop.f32.mrf.mxu0
    %v424 = vpop.f32.mrf.mxu0
    %425 = vdwg.mxu0
    %426 = vmatprep.subr.bf16.mxu0 0
    %427 = vmatpush1.bf16.msra.mxu0 0
    %428 = vmatprep.subr.bf16.mxu0 0
    %429 = vmatpush1.bf16.msra.mxu0 0
    %430 = vmatprep.subr.bf16.mxu0 0
    %431 = vmatpush1.bf16.msra.mxu0 0
    %432 = vmatprep.subr.bf16.mxu0 0
    %433 = vmatpush1.bf16.msra.mxu0 0
    %434 = vmatprep.subr.bf16.mxu0 0
    %435 = vmatpush1.bf16.msra.mxu0 0
    %436 = vmatprep.subr.bf16.mxu0 0
    %437 = vmatpush1.bf16.msra.mxu0 0
    %438 = vmatprep.subr.bf16.mxu0 0
    %439 = vmatpush1.bf16.msra.mxu0 0
    %440 = vmatprep.subr.bf16.mxu0 %v281
    %441 = vmatpush1.bf16.msra.mxu0 %v280
    %442 = vmatprep.subr.bf16.mxu0 0
    %443 = vmatpush2.bf16.msra.mxu0 0
    %444 = vmatprep.subr.bf16.mxu0 0
    %445 = vmatpush2.bf16.msra.mxu0 0
    %446 = vmatprep.subr.bf16.mxu0 0
    %447 = vmatpush2.bf16.msra.mxu0 0
    %448 = vmatprep.subr.bf16.mxu0 0
    %449 = vmatpush2.bf16.msra.mxu0 0
    %450 = vmatprep.subr.bf16.mxu0 0
    %451 = vmatpush2.bf16.msra.mxu0 0
    %452 = vmatprep.subr.bf16.mxu0 0
    %453 = vmatpush2.bf16.msra.mxu0 0
    %454 = vmatprep.subr.bf16.mxu0 0
    %455 = vmatpush2.bf16.msra.mxu0 0
    %456 = vmatprep.subr.bf16.mxu0 0
    %457 = vmatpush2.bf16.msra.mxu0 0
    %458 = vmatprep.mubr.bf16.mxu0 0
    %459 = vmatmul.mubr.bf16.gmra.mxu0 %v342
    %v460 = vpop.f32.mrf.mxu0
    %v461 = vadd.f32 0.0, %v460
    %v462 = vpop.f32.mrf.mxu0
    %v463 = vadd.f32 0.0, %v462
    %v464 = vpop.f32.mrf.mxu0
    %v465 = vpop.f32.mrf.mxu0
    %466 = vdwg.mxu0
    %467 = vmatprep.subr.bf16.mxu0 0
    %468 = vmatpush1.bf16.msra.mxu0 0
    %469 = vmatprep.subr.bf16.mxu0 0
    %470 = vmatpush1.bf16.msra.mxu0 0
    %471 = vmatprep.subr.bf16.mxu0 0
    %472 = vmatpush1.bf16.msra.mxu0 0
    %473 = vmatprep.subr.bf16.mxu0 0
    %474 = vmatpush1.bf16.msra.mxu0 0
    %475 = vmatprep.subr.bf16.mxu0 0
    %476 = vmatpush1.bf16.msra.mxu0 0
    %477 = vmatprep.subr.bf16.mxu0 0
    %478 = vmatpush1.bf16.msra.mxu0 0
    %479 = vmatprep.subr.bf16.mxu0 0
    %480 = vmatpush1.bf16.msra.mxu0 0
    %481 = vmatprep.subr.bf16.mxu0 %v283
    %482 = vmatpush1.bf16.msra.mxu0 %v282
    %483 = vmatprep.subr.bf16.mxu0 0
    %484 = vmatpush2.bf16.msra.mxu0 0
    %485 = vmatprep.subr.bf16.mxu0 0
    %486 = vmatpush2.bf16.msra.mxu0 0
    %487 = vmatprep.subr.bf16.mxu0 0
    %488 = vmatpush2.bf16.msra.mxu0 0
    %489 = vmatprep.subr.bf16.mxu0 0
    %490 = vmatpush2.bf16.msra.mxu0 0
    %491 = vmatprep.subr.bf16.mxu0 0
    %492 = vmatpush2.bf16.msra.mxu0 0
    %493 = vmatprep.subr.bf16.mxu0 0
    %494 = vmatpush2.bf16.msra.mxu0 0
    %495 = vmatprep.subr.bf16.mxu0 0
    %496 = vmatpush2.bf16.msra.mxu0 0
    %497 = vmatprep.subr.bf16.mxu0 0
    %498 = vmatpush2.bf16.msra.mxu0 0
    %499 = vmatprep.mubr.bf16.mxu0 0
    %500 = vmatmul.mubr.bf16.gmra.mxu0 %v342
    %v501 = vpop.f32.mrf.mxu0
    %v502 = vadd.f32 0.0, %v501
    %v503 = vpop.f32.mrf.mxu0
    %v504 = vadd.f32 0.0, %v503
    %v505 = vpop.f32.mrf.mxu0
    %v506 = vpop.f32.mrf.mxu0
    %507 = vdwg.mxu0
    %508 = vmatprep.subr.bf16.mxu0 0
    %509 = vmatpush1.bf16.msra.mxu0 0
    %510 = vmatprep.subr.bf16.mxu0 0
    %511 = vmatpush1.bf16.msra.mxu0 0
    %512 = vmatprep.subr.bf16.mxu0 0
    %513 = vmatpush1.bf16.msra.mxu0 0
    %514 = vmatprep.subr.bf16.mxu0 0
    %515 = vmatpush1.bf16.msra.mxu0 0
    %516 = vmatprep.subr.bf16.mxu0 0
    %517 = vmatpush1.bf16.msra.mxu0 0
    %518 = vmatprep.subr.bf16.mxu0 0
    %519 = vmatpush1.bf16.msra.mxu0 0
    %520 = vmatprep.subr.bf16.mxu0 0
    %521 = vmatpush1.bf16.msra.mxu0 0
    %522 = vmatprep.subr.bf16.mxu0 %v285
    %523 = vmatpush1.bf16.msra.mxu0 %v284
    %524 = vmatprep.subr.bf16.mxu0 0
    %525 = vmatpush2.bf16.msra.mxu0 0
    %526 = vmatprep.subr.bf16.mxu0 0
    %527 = vmatpush2.bf16.msra.mxu0 0
    %528 = vmatprep.subr.bf16.mxu0 0
    %529 = vmatpush2.bf16.msra.mxu0 0
    %530 = vmatprep.subr.bf16.mxu0 0
    %531 = vmatpush2.bf16.msra.mxu0 0
    %532 = vmatprep.subr.bf16.mxu0 0
    %533 = vmatpush2.bf16.msra.mxu0 0
    %534 = vmatprep.subr.bf16.mxu0 0
    %535 = vmatpush2.bf16.msra.mxu0 0
    %536 = vmatprep.subr.bf16.mxu0 0
    %537 = vmatpush2.bf16.msra.mxu0 0
    %538 = vmatprep.subr.bf16.mxu0 0
    %539 = vmatpush2.bf16.msra.mxu0 0
    %540 = vmatprep.mubr.bf16.mxu0 0
    %541 = vmatmul.mubr.bf16.gmra.mxu0 %v342
    %v542 = vpop.f32.mrf.mxu0
    %v543 = vadd.f32 0.0, %v542
    %v544 = vpop.f32.mrf.mxu0
    %v545 = vadd.f32 0.0, %v544
    %v546 = vpop.f32.mrf.mxu0
    %v547 = vpop.f32.mrf.mxu0
    %548 = vdwg.mxu0
    %549 = vmatprep.subr.bf16.mxu0 0
    %550 = vmatpush1.bf16.msra.mxu0 0
    %551 = vmatprep.subr.bf16.mxu0 0
    %552 = vmatpush1.bf16.msra.mxu0 0
    %553 = vmatprep.subr.bf16.mxu0 0
    %554 = vmatpush1.bf16.msra.mxu0 0
    %555 = vmatprep.subr.bf16.mxu0 0
    %556 = vmatpush1.bf16.msra.mxu0 0
    %557 = vmatprep.subr.bf16.mxu0 0
    %558 = vmatpush1.bf16.msra.mxu0 0
    %559 = vmatprep.subr.bf16.mxu0 0
    %560 = vmatpush1.bf16.msra.mxu0 0
    %561 = vmatprep.subr.bf16.mxu0 0
    %562 = vmatpush1.bf16.msra.mxu0 0
    %563 = vmatprep.subr.bf16.mxu0 %v287
    %564 = vmatpush1.bf16.msra.mxu0 %v286
    %565 = vmatprep.subr.bf16.mxu0 0
    %566 = vmatpush2.bf16.msra.mxu0 0
    %567 = vmatprep.subr.bf16.mxu0 0
    %568 = vmatpush2.bf16.msra.mxu0 0
    %569 = vmatprep.subr.bf16.mxu0 0
    %570 = vmatpush2.bf16.msra.mxu0 0
    %571 = vmatprep.subr.bf16.mxu0 0
    %572 = vmatpush2.bf16.msra.mxu0 0
    %573 = vmatprep.subr.bf16.mxu0 0
    %574 = vmatpush2.bf16.msra.mxu0 0
    %575 = vmatprep.subr.bf16.mxu0 0
    %576 = vmatpush2.bf16.msra.mxu0 0
    %577 = vmatprep.subr.bf16.mxu0 0
    %578 = vmatpush2.bf16.msra.mxu0 0
    %579 = vmatprep.subr.bf16.mxu0 0
    %580 = vmatpush2.bf16.msra.mxu0 0
    %581 = vmatprep.mubr.bf16.mxu0 0
    %582 = vmatmul.mubr.bf16.gmra.mxu0 %v342
    %v583 = vpop.f32.mrf.mxu0
    %v584 = vadd.f32 0.0, %v583
    %v585 = vpop.f32.mrf.mxu0
    %v586 = vadd.f32 0.0, %v585
    %v587 = vpop.f32.mrf.mxu0
    %v588 = vpop.f32.mrf.mxu0
    %589 = vdwg.mxu0
    %590 = vmatprep.subr.bf16.mxu0 0
    %591 = vmatpush1.bf16.msra.mxu0 0
    %592 = vmatprep.subr.bf16.mxu0 0
    %593 = vmatpush1.bf16.msra.mxu0 0
    %594 = vmatprep.subr.bf16.mxu0 0
    %595 = vmatpush1.bf16.msra.mxu0 0
    %596 = vmatprep.subr.bf16.mxu0 0
    %597 = vmatpush1.bf16.msra.mxu0 0
    %598 = vmatprep.subr.bf16.mxu0 0
    %599 = vmatpush1.bf16.msra.mxu0 0
    %600 = vmatprep.subr.bf16.mxu0 0
    %601 = vmatpush1.bf16.msra.mxu0 0
    %602 = vmatprep.subr.bf16.mxu0 0
    %603 = vmatpush1.bf16.msra.mxu0 0
    %604 = vmatprep.subr.bf16.mxu0 %v289
    %605 = vmatpush1.bf16.msra.mxu0 %v288
    %606 = vmatprep.subr.bf16.mxu0 0
    %607 = vmatpush2.bf16.msra.mxu0 0
    %608 = vmatprep.subr.bf16.mxu0 0
    %609 = vmatpush2.bf16.msra.mxu0 0
    %610 = vmatprep.subr.bf16.mxu0 0
    %611 = vmatpush2.bf16.msra.mxu0 0
    %612 = vmatprep.subr.bf16.mxu0 0
    %613 = vmatpush2.bf16.msra.mxu0 0
    %614 = vmatprep.subr.bf16.mxu0 0
    %615 = vmatpush2.bf16.msra.mxu0 0
    %616 = vmatprep.subr.bf16.mxu0 0
    %617 = vmatpush2.bf16.msra.mxu0 0
    %618 = vmatprep.subr.bf16.mxu0 0
    %619 = vmatpush2.bf16.msra.mxu0 0
    %620 = vmatprep.subr.bf16.mxu0 0
    %621 = vmatpush2.bf16.msra.mxu0 0
    %622 = vmatprep.mubr.bf16.mxu0 0
    %623 = vmatmul.mubr.bf16.gmra.mxu0 %v342
    %v624 = vpop.f32.mrf.mxu0
    %v625 = vadd.f32 0.0, %v624
    %v626 = vpop.f32.mrf.mxu0
    %v627 = vadd.f32 0.0, %v626
    %v628 = vpop.f32.mrf.mxu0
    %v629 = vpop.f32.mrf.mxu0
    %630 = vdwg.mxu0
    %631 = vmatprep.subr.bf16.mxu0 0
    %632 = vmatpush1.bf16.msra.mxu0 0
    %633 = vmatprep.subr.bf16.mxu0 0
    %634 = vmatpush1.bf16.msra.mxu0 0
    %635 = vmatprep.subr.bf16.mxu0 0
    %636 = vmatpush1.bf16.msra.mxu0 0
    %637 = vmatprep.subr.bf16.mxu0 0
    %638 = vmatpush1.bf16.msra.mxu0 0
    %639 = vmatprep.subr.bf16.mxu0 0
    %640 = vmatpush1.bf16.msra.mxu0 0
    %641 = vmatprep.subr.bf16.mxu0 0
    %642 = vmatpush1.bf16.msra.mxu0 0
    %643 = vmatprep.subr.bf16.mxu0 0
    %644 = vmatpush1.bf16.msra.mxu0 0
    %645 = vmatprep.subr.bf16.mxu0 %v291
    %646 = vmatpush1.bf16.msra.mxu0 %v290
    %647 = vmatprep.subr.bf16.mxu0 0
    %648 = vmatpush2.bf16.msra.mxu0 0
    %649 = vmatprep.subr.bf16.mxu0 0
    %650 = vmatpush2.bf16.msra.mxu0 0
    %651 = vmatprep.subr.bf16.mxu0 0
    %652 = vmatpush2.bf16.msra.mxu0 0
    %653 = vmatprep.subr.bf16.mxu0 0
    %654 = vmatpush2.bf16.msra.mxu0 0
    %655 = vmatprep.subr.bf16.mxu0 0
    %656 = vmatpush2.bf16.msra.mxu0 0
    %657 = vmatprep.subr.bf16.mxu0 0
    %658 = vmatpush2.bf16.msra.mxu0 0
    %659 = vmatprep.subr.bf16.mxu0 0
    %660 = vmatpush2.bf16.msra.mxu0 0
    %661 = vmatprep.subr.bf16.mxu0 0
    %662 = vmatpush2.bf16.msra.mxu0 0
    %663 = vmatprep.mubr.bf16.mxu0 0
    %664 = vmatmul.mubr.bf16.gmra.mxu0 %v342
    %v665 = vpop.f32.mrf.mxu0
    %v666 = vadd.f32 0.0, %v665
    %v667 = vpop.f32.mrf.mxu0
    %v668 = vadd.f32 0.0, %v667
    %v669 = vpop.f32.mrf.mxu0
    %v670 = vpop.f32.mrf.mxu0
    %671 = vdwg.mxu0
    %672 = vmatprep.subr.bf16.mxu0 0
    %673 = vmatpush1.bf16.msra.mxu0 0
    %674 = vmatprep.subr.bf16.mxu0 0
    %675 = vmatpush1.bf16.msra.mxu0 0
    %676 = vmatprep.subr.bf16.mxu0 0
    %677 = vmatpush1.bf16.msra.mxu0 0
    %678 = vmatprep.subr.bf16.mxu0 0
    %679 = vmatpush1.bf16.msra.mxu0 0
    %680 = vmatprep.subr.bf16.mxu0 0
    %681 = vmatpush1.bf16.msra.mxu0 0
    %682 = vmatprep.subr.bf16.mxu0 0
    %683 = vmatpush1.bf16.msra.mxu0 0
    %684 = vmatprep.subr.bf16.mxu0 0
    %685 = vmatpush1.bf16.msra.mxu0 0
    %686 = vmatprep.subr.bf16.mxu0 %v293
    %687 = vmatpush1.bf16.msra.mxu0 %v292
    %688 = vmatprep.subr.bf16.mxu0 0
    %689 = vmatpush2.bf16.msra.mxu0 0
    %690 = vmatprep.subr.bf16.mxu0 0
    %691 = vmatpush2.bf16.msra.mxu0 0
    %692 = vmatprep.subr.bf16.mxu0 0
    %693 = vmatpush2.bf16.msra.mxu0 0
    %694 = vmatprep.subr.bf16.mxu0 0
    %695 = vmatpush2.bf16.msra.mxu0 0
    %696 = vmatprep.subr.bf16.mxu0 0
    %697 = vmatpush2.bf16.msra.mxu0 0
    %698 = vmatprep.subr.bf16.mxu0 0
    %699 = vmatpush2.bf16.msra.mxu0 0
    %700 = vmatprep.subr.bf16.mxu0 0
    %701 = vmatpush2.bf16.msra.mxu0 0
    %702 = vmatprep.subr.bf16.mxu0 0
    %703 = vmatpush2.bf16.msra.mxu0 0
    %704 = vmatprep.mubr.bf16.mxu0 0
    %705 = vmatmul.mubr.bf16.gmra.mxu0 %v342
    %v706 = vpop.f32.mrf.mxu0
    %v707 = vadd.f32 0.0, %v706
    %v708 = vpop.f32.mrf.mxu0
    %v709 = vadd.f32 0.0, %v708
    %v710 = vpop.f32.mrf.mxu0
    %v711 = vpop.f32.mrf.mxu0
    %712 = vdwg.mxu0
    %713 = vmatprep.subr.bf16.mxu0 0
    %714 = vmatpush1.bf16.msra.mxu0 0
    %715 = vmatprep.subr.bf16.mxu0 0
    %716 = vmatpush1.bf16.msra.mxu0 0
    %717 = vmatprep.subr.bf16.mxu0 0
    %718 = vmatpush1.bf16.msra.mxu0 0
    %719 = vmatprep.subr.bf16.mxu0 0
    %720 = vmatpush1.bf16.msra.mxu0 0
    %721 = vmatprep.subr.bf16.mxu0 0
    %722 = vmatpush1.bf16.msra.mxu0 0
    %723 = vmatprep.subr.bf16.mxu0 0
    %724 = vmatpush1.bf16.msra.mxu0 0
    %725 = vmatprep.subr.bf16.mxu0 0
    %726 = vmatpush1.bf16.msra.mxu0 0
    %727 = vmatprep.subr.bf16.mxu0 %v295
    %728 = vmatpush1.bf16.msra.mxu0 %v294
    %729 = vmatprep.subr.bf16.mxu0 0
    %730 = vmatpush2.bf16.msra.mxu0 0
    %731 = vmatprep.subr.bf16.mxu0 0
    %732 = vmatpush2.bf16.msra.mxu0 0
    %733 = vmatprep.subr.bf16.mxu0 0
    %734 = vmatpush2.bf16.msra.mxu0 0
    %735 = vmatprep.subr.bf16.mxu0 0
    %736 = vmatpush2.bf16.msra.mxu0 0
    %737 = vmatprep.subr.bf16.mxu0 0
    %738 = vmatpush2.bf16.msra.mxu0 0
    %739 = vmatprep.subr.bf16.mxu0 0
    %740 = vmatpush2.bf16.msra.mxu0 0
    %741 = vmatprep.subr.bf16.mxu0 0
    %742 = vmatpush2.bf16.msra.mxu0 0
    %743 = vmatprep.subr.bf16.mxu0 0
    %744 = vmatpush2.bf16.msra.mxu0 0
    %745 = vmatprep.mubr.bf16.mxu0 0
    %746 = vmatmul.mubr.bf16.gmra.mxu0 %v342
    %v747 = vpop.f32.mrf.mxu0
    %v748 = vadd.f32 0.0, %v747
    %v749 = vpop.f32.mrf.mxu0
    %v750 = vadd.f32 0.0, %v749
    %v751 = vpop.f32.mrf.mxu0
    %v752 = vpop.f32.mrf.mxu0
    %753 = vdwg.mxu0
    %754 = vmatprep.subr.bf16.mxu0 0
    %755 = vmatpush1.bf16.msra.mxu0 0
    %756 = vmatprep.subr.bf16.mxu0 0
    %757 = vmatpush1.bf16.msra.mxu0 0
    %758 = vmatprep.subr.bf16.mxu0 0
    %759 = vmatpush1.bf16.msra.mxu0 0
    %760 = vmatprep.subr.bf16.mxu0 0
    %761 = vmatpush1.bf16.msra.mxu0 0
    %762 = vmatprep.subr.bf16.mxu0 0
    %763 = vmatpush1.bf16.msra.mxu0 0
    %764 = vmatprep.subr.bf16.mxu0 0
    %765 = vmatpush1.bf16.msra.mxu0 0
    %766 = vmatprep.subr.bf16.mxu0 0
    %767 = vmatpush1.bf16.msra.mxu0 0
    %768 = vmatprep.subr.bf16.mxu0 %v297
    %769 = vmatpush1.bf16.msra.mxu0 %v296
    %770 = vmatprep.subr.bf16.mxu0 0
    %771 = vmatpush2.bf16.msra.mxu0 0
    %772 = vmatprep.subr.bf16.mxu0 0
    %773 = vmatpush2.bf16.msra.mxu0 0
    %774 = vmatprep.subr.bf16.mxu0 0
    %775 = vmatpush2.bf16.msra.mxu0 0
    %776 = vmatprep.subr.bf16.mxu0 0
    %777 = vmatpush2.bf16.msra.mxu0 0
    %778 = vmatprep.subr.bf16.mxu0 0
    %779 = vmatpush2.bf16.msra.mxu0 0
    %780 = vmatprep.subr.bf16.mxu0 0
    %781 = vmatpush2.bf16.msra.mxu0 0
    %782 = vmatprep.subr.bf16.mxu0 0
    %783 = vmatpush2.bf16.msra.mxu0 0
    %784 = vmatprep.subr.bf16.mxu0 0
    %785 = vmatpush2.bf16.msra.mxu0 0
    %786 = vmatprep.mubr.bf16.mxu0 0
    %787 = vmatmul.mubr.bf16.gmra.mxu0 %v342
    %v788 = vpop.f32.mrf.mxu0
    %v789 = vadd.f32 0.0, %v788
    %v790 = vpop.f32.mrf.mxu0
    %v791 = vadd.f32 0.0, %v790
    %v792 = vpop.f32.mrf.mxu0
    %v793 = vpop.f32.mrf.mxu0
    %794 = vdwg.mxu0
    %795 = vmatprep.subr.bf16.mxu0 0
    %796 = vmatpush1.bf16.msra.mxu0 0
    %797 = vmatprep.subr.bf16.mxu0 0
    %798 = vmatpush1.bf16.msra.mxu0 0
    %799 = vmatprep.subr.bf16.mxu0 0
    %800 = vmatpush1.bf16.msra.mxu0 0
    %801 = vmatprep.subr.bf16.mxu0 0
    %802 = vmatpush1.bf16.msra.mxu0 0
    %803 = vmatprep.subr.bf16.mxu0 0
    %804 = vmatpush1.bf16.msra.mxu0 0
    %805 = vmatprep.subr.bf16.mxu0 0
    %806 = vmatpush1.bf16.msra.mxu0 0
    %807 = vmatprep.subr.bf16.mxu0 0
    %808 = vmatpush1.bf16.msra.mxu0 0
    %809 = vmatprep.subr.bf16.mxu0 %v299
    %810 = vmatpush1.bf16.msra.mxu0 %v298
    %811 = vmatprep.subr.bf16.mxu0 0
    %812 = vmatpush2.bf16.msra.mxu0 0
    %813 = vmatprep.subr.bf16.mxu0 0
    %814 = vmatpush2.bf16.msra.mxu0 0
    %815 = vmatprep.subr.bf16.mxu0 0
    %816 = vmatpush2.bf16.msra.mxu0 0
    %817 = vmatprep.subr.bf16.mxu0 0
    %818 = vmatpush2.bf16.msra.mxu0 0
    %819 = vmatprep.subr.bf16.mxu0 0
    %820 = vmatpush2.bf16.msra.mxu0 0
    %821 = vmatprep.subr.bf16.mxu0 0
    %822 = vmatpush2.bf16.msra.mxu0 0
    %823 = vmatprep.subr.bf16.mxu0 0
    %824 = vmatpush2.bf16.msra.mxu0 0
    %825 = vmatprep.subr.bf16.mxu0 0
    %826 = vmatpush2.bf16.msra.mxu0 0
    %827 = vmatprep.mubr.bf16.mxu0 0
    %828 = vmatmul.mubr.bf16.gmra.mxu0 %v342
    %v829 = vpop.f32.mrf.mxu0
    %v830 = vadd.f32 0.0, %v829
    %v831 = vpop.f32.mrf.mxu0
    %v832 = vadd.f32 0.0, %v831
    %v833 = vpop.f32.mrf.mxu0
    %v834 = vpop.f32.mrf.mxu0
    %835 = vdwg.mxu0
    %836 = vmatprep.subr.bf16.mxu0 0
    %837 = vmatpush1.bf16.msra.mxu0 0
    %838 = vmatprep.subr.bf16.mxu0 0
    %839 = vmatpush1.bf16.msra.mxu0 0
    %840 = vmatprep.subr.bf16.mxu0 0
    %841 = vmatpush1.bf16.msra.mxu0 0
    %842 = vmatprep.subr.bf16.mxu0 0
    %843 = vmatpush1.bf16.msra.mxu0 0
    %844 = vmatprep.subr.bf16.mxu0 0
    %845 = vmatpush1.bf16.msra.mxu0 0
    %846 = vmatprep.subr.bf16.mxu0 0
    %847 = vmatpush1.bf16.msra.mxu0 0
    %848 = vmatprep.subr.bf16.mxu0 0
    %849 = vmatpush1.bf16.msra.mxu0 0
    %850 = vmatprep.subr.bf16.mxu0 %v301
    %851 = vmatpush1.bf16.msra.mxu0 %v300
    %852 = vmatprep.subr.bf16.mxu0 0
    %853 = vmatpush2.bf16.msra.mxu0 0
    %854 = vmatprep.subr.bf16.mxu0 0
    %855 = vmatpush2.bf16.msra.mxu0 0
    %856 = vmatprep.subr.bf16.mxu0 0
    %857 = vmatpush2.bf16.msra.mxu0 0
    %858 = vmatprep.subr.bf16.mxu0 0
    %859 = vmatpush2.bf16.msra.mxu0 0
    %860 = vmatprep.subr.bf16.mxu0 0
    %861 = vmatpush2.bf16.msra.mxu0 0
    %862 = vmatprep.subr.bf16.mxu0 0
    %863 = vmatpush2.bf16.msra.mxu0 0
    %864 = vmatprep.subr.bf16.mxu0 0
    %865 = vmatpush2.bf16.msra.mxu0 0
    %866 = vmatprep.subr.bf16.mxu0 0
    %867 = vmatpush2.bf16.msra.mxu0 0
    %868 = vmatprep.mubr.bf16.mxu0 0
    %869 = vmatmul.mubr.bf16.gmra.mxu0 %v342
    %v870 = vpop.f32.mrf.mxu0
    %v871 = vadd.f32 0.0, %v870
    %v872 = vpop.f32.mrf.mxu0
    %v873 = vadd.f32 0.0, %v872
    %v874 = vpop.f32.mrf.mxu0
    %v875 = vpop.f32.mrf.mxu0
    %876 = vdwg.mxu0
    %877 = vmatprep.subr.bf16.mxu0 0
    %878 = vmatpush1.bf16.msra.mxu0 0
    %879 = vmatprep.subr.bf16.mxu0 0
    %880 = vmatpush1.bf16.msra.mxu0 0
    %881 = vmatprep.subr.bf16.mxu0 0
    %882 = vmatpush1.bf16.msra.mxu0 0
    %883 = vmatprep.subr.bf16.mxu0 0
    %884 = vmatpush1.bf16.msra.mxu0 0
    %885 = vmatprep.subr.bf16.mxu0 0
    %886 = vmatpush1.bf16.msra.mxu0 0
    %887 = vmatprep.subr.bf16.mxu0 0
    %888 = vmatpush1.bf16.msra.mxu0 0
    %889 = vmatprep.subr.bf16.mxu0 0
    %890 = vmatpush1.bf16.msra.mxu0 0
    %891 = vmatprep.subr.bf16.mxu0 %v303
    %892 = vmatpush1.bf16.msra.mxu0 %v302
    %893 = vmatprep.subr.bf16.mxu0 0
    %894 = vmatpush2.bf16.msra.mxu0 0
    %895 = vmatprep.subr.bf16.mxu0 0
    %896 = vmatpush2.bf16.msra.mxu0 0
    %897 = vmatprep.subr.bf16.mxu0 0
    %898 = vmatpush2.bf16.msra.mxu0 0
    %899 = vmatprep.subr.bf16.mxu0 0
    %900 = vmatpush2.bf16.msra.mxu0 0
    %901 = vmatprep.subr.bf16.mxu0 0
    %902 = vmatpush2.bf16.msra.mxu0 0
    %903 = vmatprep.subr.bf16.mxu0 0
    %904 = vmatpush2.bf16.msra.mxu0 0
    %905 = vmatprep.subr.bf16.mxu0 0
    %906 = vmatpush2.bf16.msra.mxu0 0
    %907 = vmatprep.subr.bf16.mxu0 0
    %908 = vmatpush2.bf16.msra.mxu0 0
    %909 = vmatprep.mubr.bf16.mxu0 0
    %910 = vmatmul.mubr.bf16.gmra.mxu0 %v342
    %v911 = vpop.f32.mrf.mxu0
    %v912 = vadd.f32 0.0, %v911
    %v913 = vpop.f32.mrf.mxu0
    %v914 = vadd.f32 0.0, %v913
    %v915 = vpop.f32.mrf.mxu0
    %v916 = vpop.f32.mrf.mxu0
    %917 = vdwg.mxu0
    %918 = vmatprep.subr.bf16.mxu0 0
    %919 = vmatpush1.bf16.msra.mxu0 0
    %920 = vmatprep.subr.bf16.mxu0 0
    %921 = vmatpush1.bf16.msra.mxu0 0
    %922 = vmatprep.subr.bf16.mxu0 0
    %923 = vmatpush1.bf16.msra.mxu0 0
    %924 = vmatprep.subr.bf16.mxu0 0
    %925 = vmatpush1.bf16.msra.mxu0 0
    %926 = vmatprep.subr.bf16.mxu0 0
    %927 = vmatpush1.bf16.msra.mxu0 0
    %928 = vmatprep.subr.bf16.mxu0 0
    %929 = vmatpush1.bf16.msra.mxu0 0
    %930 = vmatprep.subr.bf16.mxu0 0
    %931 = vmatpush1.bf16.msra.mxu0 0
    %932 = vmatprep.subr.bf16.mxu0 %v305
    %933 = vmatpush1.bf16.msra.mxu0 %v304
    %934 = vmatprep.subr.bf16.mxu0 0
    %935 = vmatpush2.bf16.msra.mxu0 0
    %936 = vmatprep.subr.bf16.mxu0 0
    %937 = vmatpush2.bf16.msra.mxu0 0
    %938 = vmatprep.subr.bf16.mxu0 0
    %939 = vmatpush2.bf16.msra.mxu0 0
    %940 = vmatprep.subr.bf16.mxu0 0
    %941 = vmatpush2.bf16.msra.mxu0 0
    %942 = vmatprep.subr.bf16.mxu0 0
    %943 = vmatpush2.bf16.msra.mxu0 0
    %944 = vmatprep.subr.bf16.mxu0 0
    %945 = vmatpush2.bf16.msra.mxu0 0
    %946 = vmatprep.subr.bf16.mxu0 0
    %947 = vmatpush2.bf16.msra.mxu0 0
    %948 = vmatprep.subr.bf16.mxu0 0
    %949 = vmatpush2.bf16.msra.mxu0 0
    %950 = vmatprep.mubr.bf16.mxu0 0
    %951 = vmatmul.mubr.bf16.gmra.mxu0 %v342
    %v952 = vpop.f32.mrf.mxu0
    %v953 = vadd.f32 0.0, %v952
    %v954 = vpop.f32.mrf.mxu0
    %v955 = vadd.f32 0.0, %v954
    %v956 = vpop.f32.mrf.mxu0
    %v957 = vpop.f32.mrf.mxu0
    %958 = vdwg.mxu0
    %959 = vmatprep.subr.bf16.mxu0 0
    %960 = vmatpush1.bf16.msra.mxu0 0
    %961 = vmatprep.subr.bf16.mxu0 0
    %962 = vmatpush1.bf16.msra.mxu0 0
    %963 = vmatprep.subr.bf16.mxu0 0
    %964 = vmatpush1.bf16.msra.mxu0 0
    %965 = vmatprep.subr.bf16.mxu0 0
    %966 = vmatpush1.bf16.msra.mxu0 0
    %967 = vmatprep.subr.bf16.mxu0 0
    %968 = vmatpush1.bf16.msra.mxu0 0
    %969 = vmatprep.subr.bf16.mxu0 0
    %970 = vmatpush1.bf16.msra.mxu0 0
    %971 = vmatprep.subr.bf16.mxu0 0
    %972 = vmatpush1.bf16.msra.mxu0 0
    %973 = vmatprep.subr.bf16.mxu0 %v307
    %974 = vmatpush1.bf16.msra.mxu0 %v306
    %975 = vmatprep.subr.bf16.mxu0 0
    %976 = vmatpush2.bf16.msra.mxu0 0
    %977 = vmatprep.subr.bf16.mxu0 0
    %978 = vmatpush2.bf16.msra.mxu0 0
    %979 = vmatprep.subr.bf16.mxu0 0
    %980 = vmatpush2.bf16.msra.mxu0 0
    %981 = vmatprep.subr.bf16.mxu0 0
    %982 = vmatpush2.bf16.msra.mxu0 0
    %983 = vmatprep.subr.bf16.mxu0 0
    %984 = vmatpush2.bf16.msra.mxu0 0
    %985 = vmatprep.subr.bf16.mxu0 0
    %986 = vmatpush2.bf16.msra.mxu0 0
    %987 = vmatprep.subr.bf16.mxu0 0
    %988 = vmatpush2.bf16.msra.mxu0 0
    %989 = vmatprep.subr.bf16.mxu0 0
    %990 = vmatpush2.bf16.msra.mxu0 0
    %991 = vmatprep.mubr.bf16.mxu0 0
    %992 = vmatmul.mubr.bf16.gmra.mxu0 %v342
    %v993 = vpop.f32.mrf.mxu0
    %v994 = vadd.f32 0.0, %v993
    %v995 = vpop.f32.mrf.mxu0
    %v996 = vadd.f32 0.0, %v995
    %v997 = vpop.f32.mrf.mxu0
    %v998 = vpop.f32.mrf.mxu0
    %999 = vdwg.mxu0
    %v1032 = vunpack.c.l.b16 %v114
    %v1033 = vunpack.c.h.b16 %v114
    %v1034 = vunpack.c.l.b16 %v115
    %v1035 = vunpack.c.h.b16 %v115
    %v1036 = vunpack.c.l.b16 %v116
    %v1037 = vunpack.c.h.b16 %v116
    %v1038 = vunpack.c.l.b16 %v117
    %v1039 = vunpack.c.h.b16 %v117
    %v1040 = vunpack.c.l.b16 %v118
    %v1041 = vunpack.c.h.b16 %v118
    %v1042 = vunpack.c.l.b16 %v119
    %v1043 = vunpack.c.h.b16 %v119
    %v1044 = vunpack.c.l.b16 %v120
    %v1045 = vunpack.c.h.b16 %v120
    %v1046 = vunpack.c.l.b16 %v121
    %v1047 = vunpack.c.h.b16 %v121
    %v1048 = vunpack.c.l.b16 %v122
    %v1049 = vunpack.c.h.b16 %v122
    %v1050 = vunpack.c.l.b16 %v123
    %v1051 = vunpack.c.h.b16 %v123
    %v1052 = vunpack.c.l.b16 %v124
    %v1053 = vunpack.c.h.b16 %v124
    %v1054 = vunpack.c.l.b16 %v125
    %v1055 = vunpack.c.h.b16 %v125
    %v1056 = vunpack.c.l.b16 %v126
    %v1057 = vunpack.c.h.b16 %v126
    %v1058 = vunpack.c.l.b16 %v127
    %v1059 = vunpack.c.h.b16 %v127
    %v1060 = vunpack.c.l.b16 %v128
    %v1061 = vunpack.c.h.b16 %v128
    %v1062 = vunpack.c.l.b16 %v129
    %v1063 = vunpack.c.h.b16 %v129
    %v1064 = vunpack.c.l.b16 %v130
    %v1065 = vunpack.c.h.b16 %v130
    %v1066 = vunpack.c.l.b16 %v131
    %v1067 = vunpack.c.h.b16 %v131
    %v1068 = vunpack.c.l.b16 %v132
    %v1069 = vunpack.c.h.b16 %v132
    %v1070 = vunpack.c.l.b16 %v133
    %v1071 = vunpack.c.h.b16 %v133
    %v1072 = vunpack.c.l.b16 %v134
    %v1073 = vunpack.c.h.b16 %v134
    %v1074 = vunpack.c.l.b16 %v135
    %v1075 = vunpack.c.h.b16 %v135
    %v1076 = vunpack.c.l.b16 %v136
    %v1077 = vunpack.c.h.b16 %v136
    %v1078 = vunpack.c.l.b16 %v137
    %v1079 = vunpack.c.h.b16 %v137
    %v1080 = vunpack.c.l.b16 %v138
    %v1081 = vunpack.c.h.b16 %v138
    %v1082 = vunpack.c.l.b16 %v139
    %v1083 = vunpack.c.h.b16 %v139
    %v1084 = vunpack.c.l.b16 %v140
    %v1085 = vunpack.c.h.b16 %v140
    %v1086 = vunpack.c.l.b16 %v141
    %v1087 = vunpack.c.h.b16 %v141
    %v1088 = vunpack.c.l.b16 %v142
    %v1089 = vunpack.c.h.b16 %v142
    %v1090 = vunpack.c.l.b16 %v143
    %v1091 = vunpack.c.h.b16 %v143
    %v1092 = vunpack.c.l.b16 %v144
    %v1093 = vunpack.c.h.b16 %v144
    %v1094 = vunpack.c.l.b16 %v145
    %v1095 = vunpack.c.h.b16 %v145
    %v1096 = vpack.c.b16 %v1064, %v1032
    %v1097 = vpack.c.b16 %v1065, %v1033
    %v1098 = vpack.c.b16 %v1066, %v1034
    %v1099 = vpack.c.b16 %v1067, %v1035
    %v1100 = vpack.c.b16 %v1068, %v1036
    %v1101 = vpack.c.b16 %v1069, %v1037
    %v1102 = vpack.c.b16 %v1070, %v1038
    %v1103 = vpack.c.b16 %v1071, %v1039
    %v1104 = vpack.c.b16 %v1072, %v1040
    %v1105 = vpack.c.b16 %v1073, %v1041
    %v1106 = vpack.c.b16 %v1074, %v1042
    %v1107 = vpack.c.b16 %v1075, %v1043
    %v1108 = vpack.c.b16 %v1076, %v1044
    %v1109 = vpack.c.b16 %v1077, %v1045
    %v1110 = vpack.c.b16 %v1078, %v1046
    %v1111 = vpack.c.b16 %v1079, %v1047
    %v1112 = vpack.c.b16 %v1080, %v1048
    %v1113 = vpack.c.b16 %v1081, %v1049
    %v1114 = vpack.c.b16 %v1082, %v1050
    %v1115 = vpack.c.b16 %v1083, %v1051
    %v1116 = vpack.c.b16 %v1084, %v1052
    %v1117 = vpack.c.b16 %v1085, %v1053
    %v1118 = vpack.c.b16 %v1086, %v1054
    %v1119 = vpack.c.b16 %v1087, %v1055
    %v1120 = vpack.c.b16 %v1088, %v1056
    %v1121 = vpack.c.b16 %v1089, %v1057
    %v1122 = vpack.c.b16 %v1090, %v1058
    %v1123 = vpack.c.b16 %v1091, %v1059
    %v1124 = vpack.c.b16 %v1092, %v1060
    %v1125 = vpack.c.b16 %v1093, %v1061
    %v1126 = vpack.c.b16 %v1094, %v1062
    %v1127 = vpack.c.b16 %v1095, %v1063
    %v1161 = vsel %vm340, %v113, 0
    %1163 = vmatprep.subr.bf16.mxu0 0
    %1164 = vmatpush1.bf16.msra.mxu0 0
    %1165 = vmatprep.subr.bf16.mxu0 0
    %1166 = vmatpush1.bf16.msra.mxu0 0
    %1167 = vmatprep.subr.bf16.mxu0 0
    %1168 = vmatpush1.bf16.msra.mxu0 0
    %1169 = vmatprep.subr.bf16.mxu0 0
    %1170 = vmatpush1.bf16.msra.mxu0 0
    %1171 = vmatprep.subr.bf16.mxu0 0
    %1172 = vmatpush1.bf16.msra.mxu0 0
    %1173 = vmatprep.subr.bf16.mxu0 0
    %1174 = vmatpush1.bf16.msra.mxu0 0
    %1175 = vmatprep.subr.bf16.mxu0 0
    %1176 = vmatpush1.bf16.msra.mxu0 0
    %1177 = vmatprep.subr.bf16.mxu0 %v1097
    %1178 = vmatpush1.bf16.msra.mxu0 %v1096
    %1179 = vmatprep.subr.bf16.mxu0 0
    %1180 = vmatpush2.bf16.msra.mxu0 0
    %1181 = vmatprep.subr.bf16.mxu0 0
    %1182 = vmatpush2.bf16.msra.mxu0 0
    %1183 = vmatprep.subr.bf16.mxu0 0
    %1184 = vmatpush2.bf16.msra.mxu0 0
    %1185 = vmatprep.subr.bf16.mxu0 0
    %1186 = vmatpush2.bf16.msra.mxu0 0
    %1187 = vmatprep.subr.bf16.mxu0 0
    %1188 = vmatpush2.bf16.msra.mxu0 0
    %1189 = vmatprep.subr.bf16.mxu0 0
    %1190 = vmatpush2.bf16.msra.mxu0 0
    %1191 = vmatprep.subr.bf16.mxu0 0
    %1192 = vmatpush2.bf16.msra.mxu0 0
    %1193 = vmatprep.subr.bf16.mxu0 0
    %1194 = vmatpush2.bf16.msra.mxu0 0
    %1195 = vmatprep.mubr.bf16.mxu0 0
    %1196 = vmatmul.mubr.bf16.gmra.mxu0 %v1161
    %v1197 = vpop.f32.mrf.mxu0
    %v1198 = vadd.f32 %v379, %v1197
    %v1199 = vpop.f32.mrf.mxu0
    %v1200 = vadd.f32 %v381, %v1199
    %v1201 = vpop.f32.mrf.mxu0
    %v1202 = vpop.f32.mrf.mxu0
    %1203 = vdwg.mxu0
    %1204 = vmatprep.subr.bf16.mxu0 0
    %1205 = vmatpush1.bf16.msra.mxu0 0
    %1206 = vmatprep.subr.bf16.mxu0 0
    %1207 = vmatpush1.bf16.msra.mxu0 0
    %1208 = vmatprep.subr.bf16.mxu0 0
    %1209 = vmatpush1.bf16.msra.mxu0 0
    %1210 = vmatprep.subr.bf16.mxu0 0
    %1211 = vmatpush1.bf16.msra.mxu0 0
    %1212 = vmatprep.subr.bf16.mxu0 0
    %1213 = vmatpush1.bf16.msra.mxu0 0
    %1214 = vmatprep.subr.bf16.mxu0 0
    %1215 = vmatpush1.bf16.msra.mxu0 0
    %1216 = vmatprep.subr.bf16.mxu0 0
    %1217 = vmatpush1.bf16.msra.mxu0 0
    %1218 = vmatprep.subr.bf16.mxu0 %v1099
    %1219 = vmatpush1.bf16.msra.mxu0 %v1098
    %1220 = vmatprep.subr.bf16.mxu0 0
    %1221 = vmatpush2.bf16.msra.mxu0 0
    %1222 = vmatprep.subr.bf16.mxu0 0
    %1223 = vmatpush2.bf16.msra.mxu0 0
    %1224 = vmatprep.subr.bf16.mxu0 0
    %1225 = vmatpush2.bf16.msra.mxu0 0
    %1226 = vmatprep.subr.bf16.mxu0 0
    %1227 = vmatpush2.bf16.msra.mxu0 0
    %1228 = vmatprep.subr.bf16.mxu0 0
    %1229 = vmatpush2.bf16.msra.mxu0 0
    %1230 = vmatprep.subr.bf16.mxu0 0
    %1231 = vmatpush2.bf16.msra.mxu0 0
    %1232 = vmatprep.subr.bf16.mxu0 0
    %1233 = vmatpush2.bf16.msra.mxu0 0
    %1234 = vmatprep.subr.bf16.mxu0 0
    %1235 = vmatpush2.bf16.msra.mxu0 0
    %1236 = vmatprep.mubr.bf16.mxu0 0
    %1237 = vmatmul.mubr.bf16.gmra.mxu0 %v1161
    %v1238 = vpop.f32.mrf.mxu0
    %v1239 = vadd.f32 %v420, %v1238
    %v1240 = vpop.f32.mrf.mxu0
    %v1241 = vadd.f32 %v422, %v1240
    %v1242 = vpop.f32.mrf.mxu0
    %v1243 = vpop.f32.mrf.mxu0
    %1244 = vdwg.mxu0
    %1245 = vmatprep.subr.bf16.mxu0 0
    %1246 = vmatpush1.bf16.msra.mxu0 0
    %1247 = vmatprep.subr.bf16.mxu0 0
    %1248 = vmatpush1.bf16.msra.mxu0 0
    %1249 = vmatprep.subr.bf16.mxu0 0
    %1250 = vmatpush1.bf16.msra.mxu0 0
    %1251 = vmatprep.subr.bf16.mxu0 0
    %1252 = vmatpush1.bf16.msra.mxu0 0
    %1253 = vmatprep.subr.bf16.mxu0 0
    %1254 = vmatpush1.bf16.msra.mxu0 0
    %1255 = vmatprep.subr.bf16.mxu0 0
    %1256 = vmatpush1.bf16.msra.mxu0 0
    %1257 = vmatprep.subr.bf16.mxu0 0
    %1258 = vmatpush1.bf16.msra.mxu0 0
    %1259 = vmatprep.subr.bf16.mxu0 %v1101
    %1260 = vmatpush1.bf16.msra.mxu0 %v1100
    %1261 = vmatprep.subr.bf16.mxu0 0
    %1262 = vmatpush2.bf16.msra.mxu0 0
    %1263 = vmatprep.subr.bf16.mxu0 0
    %1264 = vmatpush2.bf16.msra.mxu0 0
    %1265 = vmatprep.subr.bf16.mxu0 0
    %1266 = vmatpush2.bf16.msra.mxu0 0
    %1267 = vmatprep.subr.bf16.mxu0 0
    %1268 = vmatpush2.bf16.msra.mxu0 0
    %1269 = vmatprep.subr.bf16.mxu0 0
    %1270 = vmatpush2.bf16.msra.mxu0 0
    %1271 = vmatprep.subr.bf16.mxu0 0
    %1272 = vmatpush2.bf16.msra.mxu0 0
    %1273 = vmatprep.subr.bf16.mxu0 0
    %1274 = vmatpush2.bf16.msra.mxu0 0
    %1275 = vmatprep.subr.bf16.mxu0 0
    %1276 = vmatpush2.bf16.msra.mxu0 0
    %1277 = vmatprep.mubr.bf16.mxu0 0
    %1278 = vmatmul.mubr.bf16.gmra.mxu0 %v1161
    %v1279 = vpop.f32.mrf.mxu0
    %v1280 = vadd.f32 %v461, %v1279
    %v1281 = vpop.f32.mrf.mxu0
    %v1282 = vadd.f32 %v463, %v1281
    %v1283 = vpop.f32.mrf.mxu0
    %v1284 = vpop.f32.mrf.mxu0
    %1285 = vdwg.mxu0
    %1286 = vmatprep.subr.bf16.mxu0 0
    %1287 = vmatpush1.bf16.msra.mxu0 0
    %1288 = vmatprep.subr.bf16.mxu0 0
    %1289 = vmatpush1.bf16.msra.mxu0 0
    %1290 = vmatprep.subr.bf16.mxu0 0
    %1291 = vmatpush1.bf16.msra.mxu0 0
    %1292 = vmatprep.subr.bf16.mxu0 0
    %1293 = vmatpush1.bf16.msra.mxu0 0
    %1294 = vmatprep.subr.bf16.mxu0 0
    %1295 = vmatpush1.bf16.msra.mxu0 0
    %1296 = vmatprep.subr.bf16.mxu0 0
    %1297 = vmatpush1.bf16.msra.mxu0 0
    %1298 = vmatprep.subr.bf16.mxu0 0
    %1299 = vmatpush1.bf16.msra.mxu0 0
    %1300 = vmatprep.subr.bf16.mxu0 %v1103
    %1301 = vmatpush1.bf16.msra.mxu0 %v1102
    %1302 = vmatprep.subr.bf16.mxu0 0
    %1303 = vmatpush2.bf16.msra.mxu0 0
    %1304 = vmatprep.subr.bf16.mxu0 0
    %1305 = vmatpush2.bf16.msra.mxu0 0
    %1306 = vmatprep.subr.bf16.mxu0 0
    %1307 = vmatpush2.bf16.msra.mxu0 0
    %1308 = vmatprep.subr.bf16.mxu0 0
    %1309 = vmatpush2.bf16.msra.mxu0 0
    %1310 = vmatprep.subr.bf16.mxu0 0
    %1311 = vmatpush2.bf16.msra.mxu0 0
    %1312 = vmatprep.subr.bf16.mxu0 0
    %1313 = vmatpush2.bf16.msra.mxu0 0
    %1314 = vmatprep.subr.bf16.mxu0 0
    %1315 = vmatpush2.bf16.msra.mxu0 0
    %1316 = vmatprep.subr.bf16.mxu0 0
    %1317 = vmatpush2.bf16.msra.mxu0 0
    %1318 = vmatprep.mubr.bf16.mxu0 0
    %1319 = vmatmul.mubr.bf16.gmra.mxu0 %v1161
    %v1320 = vpop.f32.mrf.mxu0
    %v1321 = vadd.f32 %v502, %v1320
    %v1322 = vpop.f32.mrf.mxu0
    %v1323 = vadd.f32 %v504, %v1322
    %v1324 = vpop.f32.mrf.mxu0
    %v1325 = vpop.f32.mrf.mxu0
    %1326 = vdwg.mxu0
    %1327 = vmatprep.subr.bf16.mxu0 0
    %1328 = vmatpush1.bf16.msra.mxu0 0
    %1329 = vmatprep.subr.bf16.mxu0 0
    %1330 = vmatpush1.bf16.msra.mxu0 0
    %1331 = vmatprep.subr.bf16.mxu0 0
    %1332 = vmatpush1.bf16.msra.mxu0 0
    %1333 = vmatprep.subr.bf16.mxu0 0
    %1334 = vmatpush1.bf16.msra.mxu0 0
    %1335 = vmatprep.subr.bf16.mxu0 0
    %1336 = vmatpush1.bf16.msra.mxu0 0
    %1337 = vmatprep.subr.bf16.mxu0 0
    %1338 = vmatpush1.bf16.msra.mxu0 0
    %1339 = vmatprep.subr.bf16.mxu0 0
    %1340 = vmatpush1.bf16.msra.mxu0 0
    %1341 = vmatprep.subr.bf16.mxu0 %v1105
    %1342 = vmatpush1.bf16.msra.mxu0 %v1104
    %1343 = vmatprep.subr.bf16.mxu0 0
    %1344 = vmatpush2.bf16.msra.mxu0 0
    %1345 = vmatprep.subr.bf16.mxu0 0
    %1346 = vmatpush2.bf16.msra.mxu0 0
    %1347 = vmatprep.subr.bf16.mxu0 0
    %1348 = vmatpush2.bf16.msra.mxu0 0
    %1349 = vmatprep.subr.bf16.mxu0 0
    %1350 = vmatpush2.bf16.msra.mxu0 0
    %1351 = vmatprep.subr.bf16.mxu0 0
    %1352 = vmatpush2.bf16.msra.mxu0 0
    %1353 = vmatprep.subr.bf16.mxu0 0
    %1354 = vmatpush2.bf16.msra.mxu0 0
    %1355 = vmatprep.subr.bf16.mxu0 0
    %1356 = vmatpush2.bf16.msra.mxu0 0
    %1357 = vmatprep.subr.bf16.mxu0 0
    %1358 = vmatpush2.bf16.msra.mxu0 0
    %1359 = vmatprep.mubr.bf16.mxu0 0
    %1360 = vmatmul.mubr.bf16.gmra.mxu0 %v1161
    %v1361 = vpop.f32.mrf.mxu0
    %v1362 = vadd.f32 %v543, %v1361
    %v1363 = vpop.f32.mrf.mxu0
    %v1364 = vadd.f32 %v545, %v1363
    %v1365 = vpop.f32.mrf.mxu0
    %v1366 = vpop.f32.mrf.mxu0
    %1367 = vdwg.mxu0
    %1368 = vmatprep.subr.bf16.mxu0 0
    %1369 = vmatpush1.bf16.msra.mxu0 0
    %1370 = vmatprep.subr.bf16.mxu0 0
    %1371 = vmatpush1.bf16.msra.mxu0 0
    %1372 = vmatprep.subr.bf16.mxu0 0
    %1373 = vmatpush1.bf16.msra.mxu0 0
    %1374 = vmatprep.subr.bf16.mxu0 0
    %1375 = vmatpush1.bf16.msra.mxu0 0
    %1376 = vmatprep.subr.bf16.mxu0 0
    %1377 = vmatpush1.bf16.msra.mxu0 0
    %1378 = vmatprep.subr.bf16.mxu0 0
    %1379 = vmatpush1.bf16.msra.mxu0 0
    %1380 = vmatprep.subr.bf16.mxu0 0
    %1381 = vmatpush1.bf16.msra.mxu0 0
    %1382 = vmatprep.subr.bf16.mxu0 %v1107
    %1383 = vmatpush1.bf16.msra.mxu0 %v1106
    %1384 = vmatprep.subr.bf16.mxu0 0
    %1385 = vmatpush2.bf16.msra.mxu0 0
    %1386 = vmatprep.subr.bf16.mxu0 0
    %1387 = vmatpush2.bf16.msra.mxu0 0
    %1388 = vmatprep.subr.bf16.mxu0 0
    %1389 = vmatpush2.bf16.msra.mxu0 0
    %1390 = vmatprep.subr.bf16.mxu0 0
    %1391 = vmatpush2.bf16.msra.mxu0 0
    %1392 = vmatprep.subr.bf16.mxu0 0
    %1393 = vmatpush2.bf16.msra.mxu0 0
    %1394 = vmatprep.subr.bf16.mxu0 0
    %1395 = vmatpush2.bf16.msra.mxu0 0
    %1396 = vmatprep.subr.bf16.mxu0 0
    %1397 = vmatpush2.bf16.msra.mxu0 0
    %1398 = vmatprep.subr.bf16.mxu0 0
    %1399 = vmatpush2.bf16.msra.mxu0 0
    %1400 = vmatprep.mubr.bf16.mxu0 0
    %1401 = vmatmul.mubr.bf16.gmra.mxu0 %v1161
    %v1402 = vpop.f32.mrf.mxu0
    %v1403 = vadd.f32 %v584, %v1402
    %v1404 = vpop.f32.mrf.mxu0
    %v1405 = vadd.f32 %v586, %v1404
    %v1406 = vpop.f32.mrf.mxu0
    %v1407 = vpop.f32.mrf.mxu0
    %1408 = vdwg.mxu0
    %1409 = vmatprep.subr.bf16.mxu0 0
    %1410 = vmatpush1.bf16.msra.mxu0 0
    %1411 = vmatprep.subr.bf16.mxu0 0
    %1412 = vmatpush1.bf16.msra.mxu0 0
    %1413 = vmatprep.subr.bf16.mxu0 0
    %1414 = vmatpush1.bf16.msra.mxu0 0
    %1415 = vmatprep.subr.bf16.mxu0 0
    %1416 = vmatpush1.bf16.msra.mxu0 0
    %1417 = vmatprep.subr.bf16.mxu0 0
    %1418 = vmatpush1.bf16.msra.mxu0 0
    %1419 = vmatprep.subr.bf16.mxu0 0
    %1420 = vmatpush1.bf16.msra.mxu0 0
    %1421 = vmatprep.subr.bf16.mxu0 0
    %1422 = vmatpush1.bf16.msra.mxu0 0
    %1423 = vmatprep.subr.bf16.mxu0 %v1109
    %1424 = vmatpush1.bf16.msra.mxu0 %v1108
    %1425 = vmatprep.subr.bf16.mxu0 0
    %1426 = vmatpush2.bf16.msra.mxu0 0
    %1427 = vmatprep.subr.bf16.mxu0 0
    %1428 = vmatpush2.bf16.msra.mxu0 0
    %1429 = vmatprep.subr.bf16.mxu0 0
    %1430 = vmatpush2.bf16.msra.mxu0 0
    %1431 = vmatprep.subr.bf16.mxu0 0
    %1432 = vmatpush2.bf16.msra.mxu0 0
    %1433 = vmatprep.subr.bf16.mxu0 0
    %1434 = vmatpush2.bf16.msra.mxu0 0
    %1435 = vmatprep.subr.bf16.mxu0 0
    %1436 = vmatpush2.bf16.msra.mxu0 0
    %1437 = vmatprep.subr.bf16.mxu0 0
    %1438 = vmatpush2.bf16.msra.mxu0 0
    %1439 = vmatprep.subr.bf16.mxu0 0
    %1440 = vmatpush2.bf16.msra.mxu0 0
    %1441 = vmatprep.mubr.bf16.mxu0 0
    %1442 = vmatmul.mubr.bf16.gmra.mxu0 %v1161
    %v1443 = vpop.f32.mrf.mxu0
    %v1444 = vadd.f32 %v625, %v1443
    %v1445 = vpop.f32.mrf.mxu0
    %v1446 = vadd.f32 %v627, %v1445
    %v1447 = vpop.f32.mrf.mxu0
    %v1448 = vpop.f32.mrf.mxu0
    %1449 = vdwg.mxu0
    %1450 = vmatprep.subr.bf16.mxu0 0
    %1451 = vmatpush1.bf16.msra.mxu0 0
    %1452 = vmatprep.subr.bf16.mxu0 0
    %1453 = vmatpush1.bf16.msra.mxu0 0
    %1454 = vmatprep.subr.bf16.mxu0 0
    %1455 = vmatpush1.bf16.msra.mxu0 0
    %1456 = vmatprep.subr.bf16.mxu0 0
    %1457 = vmatpush1.bf16.msra.mxu0 0
    %1458 = vmatprep.subr.bf16.mxu0 0
    %1459 = vmatpush1.bf16.msra.mxu0 0
    %1460 = vmatprep.subr.bf16.mxu0 0
    %1461 = vmatpush1.bf16.msra.mxu0 0
    %1462 = vmatprep.subr.bf16.mxu0 0
    %1463 = vmatpush1.bf16.msra.mxu0 0
    %1464 = vmatprep.subr.bf16.mxu0 %v1111
    %1465 = vmatpush1.bf16.msra.mxu0 %v1110
    %1466 = vmatprep.subr.bf16.mxu0 0
    %1467 = vmatpush2.bf16.msra.mxu0 0
    %1468 = vmatprep.subr.bf16.mxu0 0
    %1469 = vmatpush2.bf16.msra.mxu0 0
    %1470 = vmatprep.subr.bf16.mxu0 0
    %1471 = vmatpush2.bf16.msra.mxu0 0
    %1472 = vmatprep.subr.bf16.mxu0 0
    %1473 = vmatpush2.bf16.msra.mxu0 0
    %1474 = vmatprep.subr.bf16.mxu0 0
    %1475 = vmatpush2.bf16.msra.mxu0 0
    %1476 = vmatprep.subr.bf16.mxu0 0
    %1477 = vmatpush2.bf16.msra.mxu0 0
    %1478 = vmatprep.subr.bf16.mxu0 0
    %1479 = vmatpush2.bf16.msra.mxu0 0
    %1480 = vmatprep.subr.bf16.mxu0 0
    %1481 = vmatpush2.bf16.msra.mxu0 0
    %1482 = vmatprep.mubr.bf16.mxu0 0
    %1483 = vmatmul.mubr.bf16.gmra.mxu0 %v1161
    %v1484 = vpop.f32.mrf.mxu0
    %v1485 = vadd.f32 %v666, %v1484
    %v1486 = vpop.f32.mrf.mxu0
    %v1487 = vadd.f32 %v668, %v1486
    %v1488 = vpop.f32.mrf.mxu0
    %v1489 = vpop.f32.mrf.mxu0
    %1490 = vdwg.mxu0
    %1491 = vmatprep.subr.bf16.mxu0 0
    %1492 = vmatpush1.bf16.msra.mxu0 0
    %1493 = vmatprep.subr.bf16.mxu0 0
    %1494 = vmatpush1.bf16.msra.mxu0 0
    %1495 = vmatprep.subr.bf16.mxu0 0
    %1496 = vmatpush1.bf16.msra.mxu0 0
    %1497 = vmatprep.subr.bf16.mxu0 0
    %1498 = vmatpush1.bf16.msra.mxu0 0
    %1499 = vmatprep.subr.bf16.mxu0 0
    %1500 = vmatpush1.bf16.msra.mxu0 0
    %1501 = vmatprep.subr.bf16.mxu0 0
    %1502 = vmatpush1.bf16.msra.mxu0 0
    %1503 = vmatprep.subr.bf16.mxu0 0
    %1504 = vmatpush1.bf16.msra.mxu0 0
    %1505 = vmatprep.subr.bf16.mxu0 %v1113
    %1506 = vmatpush1.bf16.msra.mxu0 %v1112
    %1507 = vmatprep.subr.bf16.mxu0 0
    %1508 = vmatpush2.bf16.msra.mxu0 0
    %1509 = vmatprep.subr.bf16.mxu0 0
    %1510 = vmatpush2.bf16.msra.mxu0 0
    %1511 = vmatprep.subr.bf16.mxu0 0
    %1512 = vmatpush2.bf16.msra.mxu0 0
    %1513 = vmatprep.subr.bf16.mxu0 0
    %1514 = vmatpush2.bf16.msra.mxu0 0
    %1515 = vmatprep.subr.bf16.mxu0 0
    %1516 = vmatpush2.bf16.msra.mxu0 0
    %1517 = vmatprep.subr.bf16.mxu0 0
    %1518 = vmatpush2.bf16.msra.mxu0 0
    %1519 = vmatprep.subr.bf16.mxu0 0
    %1520 = vmatpush2.bf16.msra.mxu0 0
    %1521 = vmatprep.subr.bf16.mxu0 0
    %1522 = vmatpush2.bf16.msra.mxu0 0
    %1523 = vmatprep.mubr.bf16.mxu0 0
    %1524 = vmatmul.mubr.bf16.gmra.mxu0 %v1161
    %v1525 = vpop.f32.mrf.mxu0
    %v1526 = vadd.f32 %v707, %v1525
    %v1527 = vpop.f32.mrf.mxu0
    %v1528 = vadd.f32 %v709, %v1527
    %v1529 = vpop.f32.mrf.mxu0
    %v1530 = vpop.f32.mrf.mxu0
    %1531 = vdwg.mxu0
    %1532 = vmatprep.subr.bf16.mxu0 0
    %1533 = vmatpush1.bf16.msra.mxu0 0
    %1534 = vmatprep.subr.bf16.mxu0 0
    %1535 = vmatpush1.bf16.msra.mxu0 0
    %1536 = vmatprep.subr.bf16.mxu0 0
    %1537 = vmatpush1.bf16.msra.mxu0 0
    %1538 = vmatprep.subr.bf16.mxu0 0
    %1539 = vmatpush1.bf16.msra.mxu0 0
    %1540 = vmatprep.subr.bf16.mxu0 0
    %1541 = vmatpush1.bf16.msra.mxu0 0
    %1542 = vmatprep.subr.bf16.mxu0 0
    %1543 = vmatpush1.bf16.msra.mxu0 0
    %1544 = vmatprep.subr.bf16.mxu0 0
    %1545 = vmatpush1.bf16.msra.mxu0 0
    %1546 = vmatprep.subr.bf16.mxu0 %v1115
    %1547 = vmatpush1.bf16.msra.mxu0 %v1114
    %1548 = vmatprep.subr.bf16.mxu0 0
    %1549 = vmatpush2.bf16.msra.mxu0 0
    %1550 = vmatprep.subr.bf16.mxu0 0
    %1551 = vmatpush2.bf16.msra.mxu0 0
    %1552 = vmatprep.subr.bf16.mxu0 0
    %1553 = vmatpush2.bf16.msra.mxu0 0
    %1554 = vmatprep.subr.bf16.mxu0 0
    %1555 = vmatpush2.bf16.msra.mxu0 0
    %1556 = vmatprep.subr.bf16.mxu0 0
    %1557 = vmatpush2.bf16.msra.mxu0 0
    %1558 = vmatprep.subr.bf16.mxu0 0
    %1559 = vmatpush2.bf16.msra.mxu0 0
    %1560 = vmatprep.subr.bf16.mxu0 0
    %1561 = vmatpush2.bf16.msra.mxu0 0
    %1562 = vmatprep.subr.bf16.mxu0 0
    %1563 = vmatpush2.bf16.msra.mxu0 0
    %1564 = vmatprep.mubr.bf16.mxu0 0
    %1565 = vmatmul.mubr.bf16.gmra.mxu0 %v1161
    %v1566 = vpop.f32.mrf.mxu0
    %v1567 = vadd.f32 %v748, %v1566
    %v1568 = vpop.f32.mrf.mxu0
    %v1569 = vadd.f32 %v750, %v1568
    %v1570 = vpop.f32.mrf.mxu0
    %v1571 = vpop.f32.mrf.mxu0
    %1572 = vdwg.mxu0
    %1573 = vmatprep.subr.bf16.mxu0 0
    %1574 = vmatpush1.bf16.msra.mxu0 0
    %1575 = vmatprep.subr.bf16.mxu0 0
    %1576 = vmatpush1.bf16.msra.mxu0 0
    %1577 = vmatprep.subr.bf16.mxu0 0
    %1578 = vmatpush1.bf16.msra.mxu0 0
    %1579 = vmatprep.subr.bf16.mxu0 0
    %1580 = vmatpush1.bf16.msra.mxu0 0
    %1581 = vmatprep.subr.bf16.mxu0 0
    %1582 = vmatpush1.bf16.msra.mxu0 0
    %1583 = vmatprep.subr.bf16.mxu0 0
    %1584 = vmatpush1.bf16.msra.mxu0 0
    %1585 = vmatprep.subr.bf16.mxu0 0
    %1586 = vmatpush1.bf16.msra.mxu0 0
    %1587 = vmatprep.subr.bf16.mxu0 %v1117
    %1588 = vmatpush1.bf16.msra.mxu0 %v1116
    %1589 = vmatprep.subr.bf16.mxu0 0
    %1590 = vmatpush2.bf16.msra.mxu0 0
    %1591 = vmatprep.subr.bf16.mxu0 0
    %1592 = vmatpush2.bf16.msra.mxu0 0
    %1593 = vmatprep.subr.bf16.mxu0 0
    %1594 = vmatpush2.bf16.msra.mxu0 0
    %1595 = vmatprep.subr.bf16.mxu0 0
    %1596 = vmatpush2.bf16.msra.mxu0 0
    %1597 = vmatprep.subr.bf16.mxu0 0
    %1598 = vmatpush2.bf16.msra.mxu0 0
    %1599 = vmatprep.subr.bf16.mxu0 0
    %1600 = vmatpush2.bf16.msra.mxu0 0
    %1601 = vmatprep.subr.bf16.mxu0 0
    %1602 = vmatpush2.bf16.msra.mxu0 0
    %1603 = vmatprep.subr.bf16.mxu0 0
    %1604 = vmatpush2.bf16.msra.mxu0 0
    %1605 = vmatprep.mubr.bf16.mxu0 0
    %1606 = vmatmul.mubr.bf16.gmra.mxu0 %v1161
    %v1607 = vpop.f32.mrf.mxu0
    %v1608 = vadd.f32 %v789, %v1607
    %v1609 = vpop.f32.mrf.mxu0
    %v1610 = vadd.f32 %v791, %v1609
    %v1611 = vpop.f32.mrf.mxu0
    %v1612 = vpop.f32.mrf.mxu0
    %1613 = vdwg.mxu0
    %1614 = vmatprep.subr.bf16.mxu0 0
    %1615 = vmatpush1.bf16.msra.mxu0 0
    %1616 = vmatprep.subr.bf16.mxu0 0
    %1617 = vmatpush1.bf16.msra.mxu0 0
    %1618 = vmatprep.subr.bf16.mxu0 0
    %1619 = vmatpush1.bf16.msra.mxu0 0
    %1620 = vmatprep.subr.bf16.mxu0 0
    %1621 = vmatpush1.bf16.msra.mxu0 0
    %1622 = vmatprep.subr.bf16.mxu0 0
    %1623 = vmatpush1.bf16.msra.mxu0 0
    %1624 = vmatprep.subr.bf16.mxu0 0
    %1625 = vmatpush1.bf16.msra.mxu0 0
    %1626 = vmatprep.subr.bf16.mxu0 0
    %1627 = vmatpush1.bf16.msra.mxu0 0
    %1628 = vmatprep.subr.bf16.mxu0 %v1119
    %1629 = vmatpush1.bf16.msra.mxu0 %v1118
    %1630 = vmatprep.subr.bf16.mxu0 0
    %1631 = vmatpush2.bf16.msra.mxu0 0
    %1632 = vmatprep.subr.bf16.mxu0 0
    %1633 = vmatpush2.bf16.msra.mxu0 0
    %1634 = vmatprep.subr.bf16.mxu0 0
    %1635 = vmatpush2.bf16.msra.mxu0 0
    %1636 = vmatprep.subr.bf16.mxu0 0
    %1637 = vmatpush2.bf16.msra.mxu0 0
    %1638 = vmatprep.subr.bf16.mxu0 0
    %1639 = vmatpush2.bf16.msra.mxu0 0
    %1640 = vmatprep.subr.bf16.mxu0 0
    %1641 = vmatpush2.bf16.msra.mxu0 0
    %1642 = vmatprep.subr.bf16.mxu0 0
    %1643 = vmatpush2.bf16.msra.mxu0 0
    %1644 = vmatprep.subr.bf16.mxu0 0
    %1645 = vmatpush2.bf16.msra.mxu0 0
    %1646 = vmatprep.mubr.bf16.mxu0 0
    %1647 = vmatmul.mubr.bf16.gmra.mxu0 %v1161
    %v1648 = vpop.f32.mrf.mxu0
    %v1649 = vadd.f32 %v830, %v1648
    %v1650 = vpop.f32.mrf.mxu0
    %v1651 = vadd.f32 %v832, %v1650
    %v1652 = vpop.f32.mrf.mxu0
    %v1653 = vpop.f32.mrf.mxu0
    %1654 = vdwg.mxu0
    %1655 = vmatprep.subr.bf16.mxu0 0
    %1656 = vmatpush1.bf16.msra.mxu0 0
    %1657 = vmatprep.subr.bf16.mxu0 0
    %1658 = vmatpush1.bf16.msra.mxu0 0
    %1659 = vmatprep.subr.bf16.mxu0 0
    %1660 = vmatpush1.bf16.msra.mxu0 0
    %1661 = vmatprep.subr.bf16.mxu0 0
    %1662 = vmatpush1.bf16.msra.mxu0 0
    %1663 = vmatprep.subr.bf16.mxu0 0
    %1664 = vmatpush1.bf16.msra.mxu0 0
    %1665 = vmatprep.subr.bf16.mxu0 0
    %1666 = vmatpush1.bf16.msra.mxu0 0
    %1667 = vmatprep.subr.bf16.mxu0 0
    %1668 = vmatpush1.bf16.msra.mxu0 0
    %1669 = vmatprep.subr.bf16.mxu0 %v1121
    %1670 = vmatpush1.bf16.msra.mxu0 %v1120
    %1671 = vmatprep.subr.bf16.mxu0 0
    %1672 = vmatpush2.bf16.msra.mxu0 0
    %1673 = vmatprep.subr.bf16.mxu0 0
    %1674 = vmatpush2.bf16.msra.mxu0 0
    %1675 = vmatprep.subr.bf16.mxu0 0
    %1676 = vmatpush2.bf16.msra.mxu0 0
    %1677 = vmatprep.subr.bf16.mxu0 0
    %1678 = vmatpush2.bf16.msra.mxu0 0
    %1679 = vmatprep.subr.bf16.mxu0 0
    %1680 = vmatpush2.bf16.msra.mxu0 0
    %1681 = vmatprep.subr.bf16.mxu0 0
    %1682 = vmatpush2.bf16.msra.mxu0 0
    %1683 = vmatprep.subr.bf16.mxu0 0
    %1684 = vmatpush2.bf16.msra.mxu0 0
    %1685 = vmatprep.subr.bf16.mxu0 0
    %1686 = vmatpush2.bf16.msra.mxu0 0
    %1687 = vmatprep.mubr.bf16.mxu0 0
    %1688 = vmatmul.mubr.bf16.gmra.mxu0 %v1161
    %v1689 = vpop.f32.mrf.mxu0
    %v1690 = vadd.f32 %v871, %v1689
    %v1691 = vpop.f32.mrf.mxu0
    %v1692 = vadd.f32 %v873, %v1691
    %v1693 = vpop.f32.mrf.mxu0
    %v1694 = vpop.f32.mrf.mxu0
    %1695 = vdwg.mxu0
    %1696 = vmatprep.subr.bf16.mxu0 0
    %1697 = vmatpush1.bf16.msra.mxu0 0
    %1698 = vmatprep.subr.bf16.mxu0 0
    %1699 = vmatpush1.bf16.msra.mxu0 0
    %1700 = vmatprep.subr.bf16.mxu0 0
    %1701 = vmatpush1.bf16.msra.mxu0 0
    %1702 = vmatprep.subr.bf16.mxu0 0
    %1703 = vmatpush1.bf16.msra.mxu0 0
    %1704 = vmatprep.subr.bf16.mxu0 0
    %1705 = vmatpush1.bf16.msra.mxu0 0
    %1706 = vmatprep.subr.bf16.mxu0 0
    %1707 = vmatpush1.bf16.msra.mxu0 0
    %1708 = vmatprep.subr.bf16.mxu0 0
    %1709 = vmatpush1.bf16.msra.mxu0 0
    %1710 = vmatprep.subr.bf16.mxu0 %v1123
    %1711 = vmatpush1.bf16.msra.mxu0 %v1122
    %1712 = vmatprep.subr.bf16.mxu0 0
    %1713 = vmatpush2.bf16.msra.mxu0 0
    %1714 = vmatprep.subr.bf16.mxu0 0
    %1715 = vmatpush2.bf16.msra.mxu0 0
    %1716 = vmatprep.subr.bf16.mxu0 0
    %1717 = vmatpush2.bf16.msra.mxu0 0
    %1718 = vmatprep.subr.bf16.mxu0 0
    %1719 = vmatpush2.bf16.msra.mxu0 0
    %1720 = vmatprep.subr.bf16.mxu0 0
    %1721 = vmatpush2.bf16.msra.mxu0 0
    %1722 = vmatprep.subr.bf16.mxu0 0
    %1723 = vmatpush2.bf16.msra.mxu0 0
    %1724 = vmatprep.subr.bf16.mxu0 0
    %1725 = vmatpush2.bf16.msra.mxu0 0
    %1726 = vmatprep.subr.bf16.mxu0 0
    %1727 = vmatpush2.bf16.msra.mxu0 0
    %1728 = vmatprep.mubr.bf16.mxu0 0
    %1729 = vmatmul.mubr.bf16.gmra.mxu0 %v1161
    %v1730 = vpop.f32.mrf.mxu0
    %v1731 = vadd.f32 %v912, %v1730
    %v1732 = vpop.f32.mrf.mxu0
    %v1733 = vadd.f32 %v914, %v1732
    %v1734 = vpop.f32.mrf.mxu0
    %v1735 = vpop.f32.mrf.mxu0
    %1736 = vdwg.mxu0
    %1737 = vmatprep.subr.bf16.mxu0 0
    %1738 = vmatpush1.bf16.msra.mxu0 0
    %1739 = vmatprep.subr.bf16.mxu0 0
    %1740 = vmatpush1.bf16.msra.mxu0 0
    %1741 = vmatprep.subr.bf16.mxu0 0
    %1742 = vmatpush1.bf16.msra.mxu0 0
    %1743 = vmatprep.subr.bf16.mxu0 0
    %1744 = vmatpush1.bf16.msra.mxu0 0
    %1745 = vmatprep.subr.bf16.mxu0 0
    %1746 = vmatpush1.bf16.msra.mxu0 0
    %1747 = vmatprep.subr.bf16.mxu0 0
    %1748 = vmatpush1.bf16.msra.mxu0 0
    %1749 = vmatprep.subr.bf16.mxu0 0
    %1750 = vmatpush1.bf16.msra.mxu0 0
    %1751 = vmatprep.subr.bf16.mxu0 %v1125
    %1752 = vmatpush1.bf16.msra.mxu0 %v1124
    %1753 = vmatprep.subr.bf16.mxu0 0
    %1754 = vmatpush2.bf16.msra.mxu0 0
    %1755 = vmatprep.subr.bf16.mxu0 0
    %1756 = vmatpush2.bf16.msra.mxu0 0
    %1757 = vmatprep.subr.bf16.mxu0 0
    %1758 = vmatpush2.bf16.msra.mxu0 0
    %1759 = vmatprep.subr.bf16.mxu0 0
    %1760 = vmatpush2.bf16.msra.mxu0 0
    %1761 = vmatprep.subr.bf16.mxu0 0
    %1762 = vmatpush2.bf16.msra.mxu0 0
    %1763 = vmatprep.subr.bf16.mxu0 0
    %1764 = vmatpush2.bf16.msra.mxu0 0
    %1765 = vmatprep.subr.bf16.mxu0 0
    %1766 = vmatpush2.bf16.msra.mxu0 0
    %1767 = vmatprep.subr.bf16.mxu0 0
    %1768 = vmatpush2.bf16.msra.mxu0 0
    %1769 = vmatprep.mubr.bf16.mxu0 0
    %1770 = vmatmul.mubr.bf16.gmra.mxu0 %v1161
    %v1771 = vpop.f32.mrf.mxu0
    %v1772 = vadd.f32 %v953, %v1771
    %v1773 = vpop.f32.mrf.mxu0
    %v1774 = vadd.f32 %v955, %v1773
    %v1775 = vpop.f32.mrf.mxu0
    %v1776 = vpop.f32.mrf.mxu0
    %1777 = vdwg.mxu0
    %1778 = vmatprep.subr.bf16.mxu0 0
    %1779 = vmatpush1.bf16.msra.mxu0 0
    %1780 = vmatprep.subr.bf16.mxu0 0
    %1781 = vmatpush1.bf16.msra.mxu0 0
    %1782 = vmatprep.subr.bf16.mxu0 0
    %1783 = vmatpush1.bf16.msra.mxu0 0
    %1784 = vmatprep.subr.bf16.mxu0 0
    %1785 = vmatpush1.bf16.msra.mxu0 0
    %1786 = vmatprep.subr.bf16.mxu0 0
    %1787 = vmatpush1.bf16.msra.mxu0 0
    %1788 = vmatprep.subr.bf16.mxu0 0
    %1789 = vmatpush1.bf16.msra.mxu0 0
    %1790 = vmatprep.subr.bf16.mxu0 0
    %1791 = vmatpush1.bf16.msra.mxu0 0
    %1792 = vmatprep.subr.bf16.mxu0 %v1127
    %1793 = vmatpush1.bf16.msra.mxu0 %v1126
    %1794 = vmatprep.subr.bf16.mxu0 0
    %1795 = vmatpush2.bf16.msra.mxu0 0
    %1796 = vmatprep.subr.bf16.mxu0 0
    %1797 = vmatpush2.bf16.msra.mxu0 0
    %1798 = vmatprep.subr.bf16.mxu0 0
    %1799 = vmatpush2.bf16.msra.mxu0 0
    %1800 = vmatprep.subr.bf16.mxu0 0
    %1801 = vmatpush2.bf16.msra.mxu0 0
    %1802 = vmatprep.subr.bf16.mxu0 0
    %1803 = vmatpush2.bf16.msra.mxu0 0
    %1804 = vmatprep.subr.bf16.mxu0 0
    %1805 = vmatpush2.bf16.msra.mxu0 0
    %1806 = vmatprep.subr.bf16.mxu0 0
    %1807 = vmatpush2.bf16.msra.mxu0 0
    %1808 = vmatprep.subr.bf16.mxu0 0
    %1809 = vmatpush2.bf16.msra.mxu0 0
    %1810 = vmatprep.mubr.bf16.mxu0 0
    %1811 = vmatmul.mubr.bf16.gmra.mxu0 %v1161
    %v1812 = vpop.f32.mrf.mxu0
    %v1813 = vadd.f32 %v994, %v1812
    %v1814 = vpop.f32.mrf.mxu0
    %v1815 = vadd.f32 %v996, %v1814
    %v1816 = vpop.f32.mrf.mxu0
    %v1817 = vpop.f32.mrf.mxu0
    %1818 = vdwg.mxu0
    %v1819 = vld [vmem:[#allocation10] sm:$0xff]
    %v1820 = vld [vmem:[#allocation10 + $0x8] sm:$0xff]
    %v1821 = vld [vmem:[#allocation10 + $0x10] sm:$0xff]
    %v1822 = vld [vmem:[#allocation10 + $0x18] sm:$0xff]
    %v1827 = vlaneseq
    %v1828 = vshrl.u32 %v1827, 7
    %v1829 = vsub.s32 0, %v1828
    %v1830 = vrot.slane %v1819, %v1829
    %v1831 = vlaneseq
    %v1832 = vshrl.u32 %v1831, 7
    %v1833 = vsub.s32 1, %v1832
    %v1834 = vrot.slane %v1819, %v1833
    %v1835 = vlaneseq
    %v1836 = vshrl.u32 %v1835, 7
    %v1837 = vsub.s32 2, %v1836
    %v1838 = vrot.slane %v1819, %v1837
    %v1839 = vlaneseq
    %v1840 = vshrl.u32 %v1839, 7
    %v1841 = vsub.s32 3, %v1840
    %v1842 = vrot.slane %v1819, %v1841
    %v1843 = vlaneseq
    %v1844 = vshrl.u32 %v1843, 7
    %v1845 = vsub.s32 4, %v1844
    %v1846 = vrot.slane %v1819, %v1845
    %v1847 = vlaneseq
    %v1848 = vshrl.u32 %v1847, 7
    %v1849 = vsub.s32 5, %v1848
    %v1850 = vrot.slane %v1819, %v1849
    %v1851 = vlaneseq
    %v1852 = vshrl.u32 %v1851, 7
    %v1853 = vsub.s32 6, %v1852
    %v1854 = vrot.slane %v1819, %v1853
    %v1855 = vlaneseq
    %v1856 = vshrl.u32 %v1855, 7
    %v1857 = vsub.s32 7, %v1856
    %v1858 = vrot.slane %v1819, %v1857
    %v1859 = vlaneseq
    %v1860 = vshrl.u32 %v1859, 7
    %v1861 = vsub.s32 0, %v1860
    %v1862 = vrot.slane %v1820, %v1861
    %v1863 = vlaneseq
    %v1864 = vshrl.u32 %v1863, 7
    %v1865 = vsub.s32 1, %v1864
    %v1866 = vrot.slane %v1820, %v1865
    %v1867 = vlaneseq
    %v1868 = vshrl.u32 %v1867, 7
    %v1869 = vsub.s32 2, %v1868
    %v1870 = vrot.slane %v1820, %v1869
    %v1871 = vlaneseq
    %v1872 = vshrl.u32 %v1871, 7
    %v1873 = vsub.s32 3, %v1872
    %v1874 = vrot.slane %v1820, %v1873
    %v1875 = vlaneseq
    %v1876 = vshrl.u32 %v1875, 7
    %v1877 = vsub.s32 4, %v1876
    %v1878 = vrot.slane %v1820, %v1877
    %v1879 = vlaneseq
    %v1880 = vshrl.u32 %v1879, 7
    %v1881 = vsub.s32 5, %v1880
    %v1882 = vrot.slane %v1820, %v1881
    %v1883 = vlaneseq
    %v1884 = vshrl.u32 %v1883, 7
    %v1885 = vsub.s32 6, %v1884
    %v1886 = vrot.slane %v1820, %v1885
    %v1887 = vlaneseq
    %v1888 = vshrl.u32 %v1887, 7
    %v1889 = vsub.s32 7, %v1888
    %v1890 = vrot.slane %v1820, %v1889
    %v1891 = vlaneseq
    %v1892 = vshrl.u32 %v1891, 7
    %v1893 = vsub.s32 0, %v1892
    %v1894 = vrot.slane %v1821, %v1893
    %v1895 = vlaneseq
    %v1896 = vshrl.u32 %v1895, 7
    %v1897 = vsub.s32 1, %v1896
    %v1898 = vrot.slane %v1821, %v1897
    %v1899 = vlaneseq
    %v1900 = vshrl.u32 %v1899, 7
    %v1901 = vsub.s32 2, %v1900
    %v1902 = vrot.slane %v1821, %v1901
    %v1903 = vlaneseq
    %v1904 = vshrl.u32 %v1903, 7
    %v1905 = vsub.s32 3, %v1904
    %v1906 = vrot.slane %v1821, %v1905
    %v1907 = vlaneseq
    %v1908 = vshrl.u32 %v1907, 7
    %v1909 = vsub.s32 4, %v1908
    %v1910 = vrot.slane %v1821, %v1909
    %v1911 = vlaneseq
    %v1912 = vshrl.u32 %v1911, 7
    %v1913 = vsub.s32 5, %v1912
    %v1914 = vrot.slane %v1821, %v1913
    %v1915 = vlaneseq
    %v1916 = vshrl.u32 %v1915, 7
    %v1917 = vsub.s32 6, %v1916
    %v1918 = vrot.slane %v1821, %v1917
    %v1919 = vlaneseq
    %v1920 = vshrl.u32 %v1919, 7
    %v1921 = vsub.s32 7, %v1920
    %v1922 = vrot.slane %v1821, %v1921
    %v1923 = vlaneseq
    %v1924 = vshrl.u32 %v1923, 7
    %v1925 = vsub.s32 0, %v1924
    %v1926 = vrot.slane %v1822, %v1925
    %v1927 = vlaneseq
    %v1928 = vshrl.u32 %v1927, 7
    %v1929 = vsub.s32 1, %v1928
    %v1930 = vrot.slane %v1822, %v1929
    %v1931 = vlaneseq
    %v1932 = vshrl.u32 %v1931, 7
    %v1933 = vsub.s32 2, %v1932
    %v1934 = vrot.slane %v1822, %v1933
    %v1935 = vlaneseq
    %v1936 = vshrl.u32 %v1935, 7
    %v1937 = vsub.s32 3, %v1936
    %v1938 = vrot.slane %v1822, %v1937
    %v1939 = vlaneseq
    %v1940 = vshrl.u32 %v1939, 7
    %v1941 = vsub.s32 4, %v1940
    %v1942 = vrot.slane %v1822, %v1941
    %v1943 = vlaneseq
    %v1944 = vshrl.u32 %v1943, 7
    %v1945 = vsub.s32 5, %v1944
    %v1946 = vrot.slane %v1822, %v1945
    %v1947 = vlaneseq
    %v1948 = vshrl.u32 %v1947, 7
    %v1949 = vsub.s32 6, %v1948
    %v1950 = vrot.slane %v1822, %v1949
    %v1951 = vlaneseq
    %v1952 = vshrl.u32 %v1951, 7
    %v1953 = vsub.s32 7, %v1952
    %v1954 = vrot.slane %v1822, %v1953
    %v1987 = vadd.f32 %v1198, %v1830
    %v1988 = vadd.f32 %v1200, %v1834
    %v1989 = vadd.f32 %v1239, %v1838
    %v1990 = vadd.f32 %v1241, %v1842
    %v1991 = vadd.f32 %v1280, %v1846
    %v1992 = vadd.f32 %v1282, %v1850
    %v1993 = vadd.f32 %v1321, %v1854
    %v1994 = vadd.f32 %v1323, %v1858
    %v1995 = vadd.f32 %v1362, %v1862
    %v1996 = vadd.f32 %v1364, %v1866
    %v1997 = vadd.f32 %v1403, %v1870
    %v1998 = vadd.f32 %v1405, %v1874
    %v1999 = vadd.f32 %v1444, %v1878
    %v2000 = vadd.f32 %v1446, %v1882
    %v2001 = vadd.f32 %v1485, %v1886
    %v2002 = vadd.f32 %v1487, %v1890
    %v2003 = vadd.f32 %v1526, %v1894
    %v2004 = vadd.f32 %v1528, %v1898
    %v2005 = vadd.f32 %v1567, %v1902
    %v2006 = vadd.f32 %v1569, %v1906
    %v2007 = vadd.f32 %v1608, %v1910
    %v2008 = vadd.f32 %v1610, %v1914
    %v2009 = vadd.f32 %v1649, %v1918
    %v2010 = vadd.f32 %v1651, %v1922
    %v2011 = vadd.f32 %v1690, %v1926
    %v2012 = vadd.f32 %v1692, %v1930
    %v2013 = vadd.f32 %v1731, %v1934
    %v2014 = vadd.f32 %v1733, %v1938
    %v2015 = vadd.f32 %v1772, %v1942
    %v2016 = vadd.f32 %v1774, %v1946
    %v2017 = vadd.f32 %v1813, %v1950
    %v2018 = vadd.f32 %v1815, %v1954
    %vm2019 = vcmp.gt.f32.partialorder %v1987, 0.0
    %vm2020 = vcmp.gt.f32.partialorder %v1988, 0.0
    %vm2021 = vcmp.gt.f32.partialorder %v1989, 0.0
    %vm2022 = vcmp.gt.f32.partialorder %v1990, 0.0
    %vm2023 = vcmp.gt.f32.partialorder %v1991, 0.0
    %vm2024 = vcmp.gt.f32.partialorder %v1992, 0.0
    %vm2025 = vcmp.gt.f32.partialorder %v1993, 0.0
    %vm2026 = vcmp.gt.f32.partialorder %v1994, 0.0
    %vm2027 = vcmp.gt.f32.partialorder %v1995, 0.0
    %vm2028 = vcmp.gt.f32.partialorder %v1996, 0.0
    %vm2029 = vcmp.gt.f32.partialorder %v1997, 0.0
    %vm2030 = vcmp.gt.f32.partialorder %v1998, 0.0
    %vm2031 = vcmp.gt.f32.partialorder %v1999, 0.0
    %vm2032 = vcmp.gt.f32.partialorder %v2000, 0.0
    %vm2033 = vcmp.gt.f32.partialorder %v2001, 0.0
    %vm2034 = vcmp.gt.f32.partialorder %v2002, 0.0
    %vm2035 = vcmp.gt.f32.partialorder %v2003, 0.0
    %vm2036 = vcmp.gt.f32.partialorder %v2004, 0.0
    %vm2037 = vcmp.gt.f32.partialorder %v2005, 0.0
    %vm2038 = vcmp.gt.f32.partialorder %v2006, 0.0
    %vm2039 = vcmp.gt.f32.partialorder %v2007, 0.0
    %vm2040 = vcmp.gt.f32.partialorder %v2008, 0.0
    %vm2041 = vcmp.gt.f32.partialorder %v2009, 0.0
    %vm2042 = vcmp.gt.f32.partialorder %v2010, 0.0
    %vm2043 = vcmp.gt.f32.partialorder %v2011, 0.0
    %vm2044 = vcmp.gt.f32.partialorder %v2012, 0.0
    %vm2045 = vcmp.gt.f32.partialorder %v2013, 0.0
    %vm2046 = vcmp.gt.f32.partialorder %v2014, 0.0
    %vm2047 = vcmp.gt.f32.partialorder %v2015, 0.0
    %vm2048 = vcmp.gt.f32.partialorder %v2016, 0.0
    %vm2049 = vcmp.gt.f32.partialorder %v2017, 0.0
    %vm2050 = vcmp.gt.f32.partialorder %v2018, 0.0
    %v2051 = vmul.f32 %v1987, 0.2
    %v2052 = vmul.f32 %v1988, 0.2
    %v2053 = vmul.f32 %v1989, 0.2
    %v2054 = vmul.f32 %v1990, 0.2
    %v2055 = vmul.f32 %v1991, 0.2
    %v2056 = vmul.f32 %v1992, 0.2
    %v2057 = vmul.f32 %v1993, 0.2
    %v2058 = vmul.f32 %v1994, 0.2
    %v2059 = vmul.f32 %v1995, 0.2
    %v2060 = vmul.f32 %v1996, 0.2
    %v2061 = vmul.f32 %v1997, 0.2
    %v2062 = vmul.f32 %v1998, 0.2
    %v2063 = vmul.f32 %v1999, 0.2
    %v2064 = vmul.f32 %v2000, 0.2
    %v2065 = vmul.f32 %v2001, 0.2
    %v2066 = vmul.f32 %v2002, 0.2
    %v2067 = vmul.f32 %v2003, 0.2
    %v2068 = vmul.f32 %v2004, 0.2
    %v2069 = vmul.f32 %v2005, 0.2
    %v2070 = vmul.f32 %v2006, 0.2
    %v2071 = vmul.f32 %v2007, 0.2
    %v2072 = vmul.f32 %v2008, 0.2
    %v2073 = vmul.f32 %v2009, 0.2
    %v2074 = vmul.f32 %v2010, 0.2
    %v2075 = vmul.f32 %v2011, 0.2
    %v2076 = vmul.f32 %v2012, 0.2
    %v2077 = vmul.f32 %v2013, 0.2
    %v2078 = vmul.f32 %v2014, 0.2
    %v2079 = vmul.f32 %v2015, 0.2
    %v2080 = vmul.f32 %v2016, 0.2
    %v2081 = vmul.f32 %v2017, 0.2
    %v2082 = vmul.f32 %v2018, 0.2
    %v2083 = vsel %vm2019, %v1987, %v2051
    %v2084 = vsel %vm2020, %v1988, %v2052
    %v2085 = vsel %vm2021, %v1989, %v2053
    %v2086 = vsel %vm2022, %v1990, %v2054
    %v2087 = vsel %vm2023, %v1991, %v2055
    %v2088 = vsel %vm2024, %v1992, %v2056
    %v2089 = vsel %vm2025, %v1993, %v2057
    %v2090 = vsel %vm2026, %v1994, %v2058
    %v2091 = vsel %vm2027, %v1995, %v2059
    %v2092 = vsel %vm2028, %v1996, %v2060
    %v2093 = vsel %vm2029, %v1997, %v2061
    %v2094 = vsel %vm2030, %v1998, %v2062
    %v2095 = vsel %vm2031, %v1999, %v2063
    %v2096 = vsel %vm2032, %v2000, %v2064
    %v2097 = vsel %vm2033, %v2001, %v2065
    %v2098 = vsel %vm2034, %v2002, %v2066
    %v2099 = vsel %vm2035, %v2003, %v2067
    %v2100 = vsel %vm2036, %v2004, %v2068
    %v2101 = vsel %vm2037, %v2005, %v2069
    %v2102 = vsel %vm2038, %v2006, %v2070
    %v2103 = vsel %vm2039, %v2007, %v2071
    %v2104 = vsel %vm2040, %v2008, %v2072
    %v2105 = vsel %vm2041, %v2009, %v2073
    %v2106 = vsel %vm2042, %v2010, %v2074
    %v2107 = vsel %vm2043, %v2011, %v2075
    %v2108 = vsel %vm2044, %v2012, %v2076
    %v2109 = vsel %vm2045, %v2013, %v2077
    %v2110 = vsel %vm2046, %v2014, %v2078
    %v2111 = vsel %vm2047, %v2015, %v2079
    %v2112 = vsel %vm2048, %v2016, %v2080
    %v2113 = vsel %vm2049, %v2017, %v2081
    %v2114 = vsel %vm2050, %v2018, %v2082
    %v2115 = vld [vmem:[#allocation13] sm:$0xff]
    %v2116 = vpack.c.bf16 %v2083, %v2083
    %v2117 = vpack.c.bf16 %v2084, %v2084
    %v2118 = vpack.c.bf16 %v2085, %v2085
    %v2119 = vpack.c.bf16 %v2086, %v2086
    %v2120 = vpack.c.bf16 %v2087, %v2087
    %v2121 = vpack.c.bf16 %v2088, %v2088
    %v2122 = vpack.c.bf16 %v2089, %v2089
    %v2123 = vpack.c.bf16 %v2090, %v2090
    %v2124 = vpack.c.bf16 %v2091, %v2091
    %v2125 = vpack.c.bf16 %v2092, %v2092
    %v2126 = vpack.c.bf16 %v2093, %v2093
    %v2127 = vpack.c.bf16 %v2094, %v2094
    %v2128 = vpack.c.bf16 %v2095, %v2095
    %v2129 = vpack.c.bf16 %v2096, %v2096
    %v2130 = vpack.c.bf16 %v2097, %v2097
    %v2131 = vpack.c.bf16 %v2098, %v2098
    %v2132 = vpack.c.bf16 %v2099, %v2099
    %v2133 = vpack.c.bf16 %v2100, %v2100
    %v2134 = vpack.c.bf16 %v2101, %v2101
    %v2135 = vpack.c.bf16 %v2102, %v2102
    %v2136 = vpack.c.bf16 %v2103, %v2103
    %v2137 = vpack.c.bf16 %v2104, %v2104
    %v2138 = vpack.c.bf16 %v2105, %v2105
    %v2139 = vpack.c.bf16 %v2106, %v2106
    %v2140 = vpack.c.bf16 %v2107, %v2107
    %v2141 = vpack.c.bf16 %v2108, %v2108
    %v2142 = vpack.c.bf16 %v2109, %v2109
    %v2143 = vpack.c.bf16 %v2110, %v2110
    %v2144 = vpack.c.bf16 %v2111, %v2111
    %v2145 = vpack.c.bf16 %v2112, %v2112
    %v2146 = vpack.c.bf16 %v2113, %v2113
    %v2147 = vpack.c.bf16 %v2114, %v2114
    %v2148 = vld [vmem:[#allocation11] sm:$0xff]
    %v2149 = vld [vmem:[#allocation11 + $0x8] sm:$0xff]
    %v2150 = vld [vmem:[#allocation11 + $0x10] sm:$0xff]
    %v2151 = vld [vmem:[#allocation11 + $0x18] sm:$0xff]
    %v2152 = vld [vmem:[#allocation11 + $0x20] sm:$0xff]
    %v2153 = vld [vmem:[#allocation11 + $0x28] sm:$0xff]
    %v2154 = vld [vmem:[#allocation11 + $0x30] sm:$0xff]
    %v2155 = vld [vmem:[#allocation11 + $0x38] sm:$0xff]
    %v2156 = vld [vmem:[#allocation11 + $0x40] sm:$0xff]
    %v2157 = vld [vmem:[#allocation11 + $0x48] sm:$0xff]
    %v2158 = vld [vmem:[#allocation11 + $0x50] sm:$0xff]
    %v2159 = vld [vmem:[#allocation11 + $0x58] sm:$0xff]
    %v2160 = vld [vmem:[#allocation11 + $0x60] sm:$0xff]
    %v2161 = vld [vmem:[#allocation11 + $0x68] sm:$0xff]
    %v2162 = vld [vmem:[#allocation11 + $0x70] sm:$0xff]
    %v2163 = vld [vmem:[#allocation11 + $0x78] sm:$0xff]
    %v2164 = vld [vmem:[#allocation11 + $0x80] sm:$0xff]
    %v2165 = vld [vmem:[#allocation11 + $0x88] sm:$0xff]
    %v2166 = vld [vmem:[#allocation11 + $0x90] sm:$0xff]
    %v2167 = vld [vmem:[#allocation11 + $0x98] sm:$0xff]
    %v2168 = vld [vmem:[#allocation11 + $0xa0] sm:$0xff]
    %v2169 = vld [vmem:[#allocation11 + $0xa8] sm:$0xff]
    %v2170 = vld [vmem:[#allocation11 + $0xb0] sm:$0xff]
    %v2171 = vld [vmem:[#allocation11 + $0xb8] sm:$0xff]
    %v2172 = vld [vmem:[#allocation11 + $0xc0] sm:$0xff]
    %v2173 = vld [vmem:[#allocation11 + $0xc8] sm:$0xff]
    %v2174 = vld [vmem:[#allocation11 + $0xd0] sm:$0xff]
    %v2175 = vld [vmem:[#allocation11 + $0xd8] sm:$0xff]
    %v2176 = vld [vmem:[#allocation11 + $0xe0] sm:$0xff]
    %v2177 = vld [vmem:[#allocation11 + $0xe8] sm:$0xff]
    %v2178 = vld [vmem:[#allocation11 + $0xf0] sm:$0xff]
    %v2179 = vld [vmem:[#allocation11 + $0xf8] sm:$0xff]
    %v2180 = vld [vmem:[#allocation11 + $0x100] sm:$0xff]
    %v2181 = vld [vmem:[#allocation11 + $0x108] sm:$0xff]
    %v2182 = vld [vmem:[#allocation11 + $0x110] sm:$0xff]
    %v2183 = vld [vmem:[#allocation11 + $0x118] sm:$0xff]
    %v2184 = vld [vmem:[#allocation11 + $0x120] sm:$0xff]
    %v2185 = vld [vmem:[#allocation11 + $0x128] sm:$0xff]
    %v2186 = vld [vmem:[#allocation11 + $0x130] sm:$0xff]
    %v2187 = vld [vmem:[#allocation11 + $0x138] sm:$0xff]
    %v2188 = vld [vmem:[#allocation11 + $0x140] sm:$0xff]
    %v2189 = vld [vmem:[#allocation11 + $0x148] sm:$0xff]
    %v2190 = vld [vmem:[#allocation11 + $0x150] sm:$0xff]
    %v2191 = vld [vmem:[#allocation11 + $0x158] sm:$0xff]
    %v2192 = vld [vmem:[#allocation11 + $0x160] sm:$0xff]
    %v2193 = vld [vmem:[#allocation11 + $0x168] sm:$0xff]
    %v2194 = vld [vmem:[#allocation11 + $0x170] sm:$0xff]
    %v2195 = vld [vmem:[#allocation11 + $0x178] sm:$0xff]
    %v2196 = vld [vmem:[#allocation11 + $0x180] sm:$0xff]
    %v2197 = vld [vmem:[#allocation11 + $0x188] sm:$0xff]
    %v2198 = vld [vmem:[#allocation11 + $0x190] sm:$0xff]
    %v2199 = vld [vmem:[#allocation11 + $0x198] sm:$0xff]
    %v2200 = vld [vmem:[#allocation11 + $0x1a0] sm:$0xff]
    %v2201 = vld [vmem:[#allocation11 + $0x1a8] sm:$0xff]
    %v2202 = vld [vmem:[#allocation11 + $0x1b0] sm:$0xff]
    %v2203 = vld [vmem:[#allocation11 + $0x1b8] sm:$0xff]
    %v2204 = vld [vmem:[#allocation11 + $0x1c0] sm:$0xff]
    %v2205 = vld [vmem:[#allocation11 + $0x1c8] sm:$0xff]
    %v2206 = vld [vmem:[#allocation11 + $0x1d0] sm:$0xff]
    %v2207 = vld [vmem:[#allocation11 + $0x1d8] sm:$0xff]
    %v2208 = vld [vmem:[#allocation11 + $0x1e0] sm:$0xff]
    %v2209 = vld [vmem:[#allocation11 + $0x1e8] sm:$0xff]
    %v2210 = vld [vmem:[#allocation11 + $0x1f0] sm:$0xff]
    %v2211 = vld [vmem:[#allocation11 + $0x1f8] sm:$0xff]
    %v2212 = vld [vmem:[#allocation11 + $0x200] sm:$0xff]
    %v2213 = vld [vmem:[#allocation11 + $0x208] sm:$0xff]
    %v2214 = vld [vmem:[#allocation11 + $0x210] sm:$0xff]
    %v2215 = vld [vmem:[#allocation11 + $0x218] sm:$0xff]
    %v2216 = vld [vmem:[#allocation11 + $0x220] sm:$0xff]
    %v2217 = vld [vmem:[#allocation11 + $0x228] sm:$0xff]
    %v2218 = vld [vmem:[#allocation11 + $0x230] sm:$0xff]
    %v2219 = vld [vmem:[#allocation11 + $0x238] sm:$0xff]
    %v2220 = vld [vmem:[#allocation11 + $0x240] sm:$0xff]
    %v2221 = vld [vmem:[#allocation11 + $0x248] sm:$0xff]
    %v2222 = vld [vmem:[#allocation11 + $0x250] sm:$0xff]
    %v2223 = vld [vmem:[#allocation11 + $0x258] sm:$0xff]
    %v2224 = vld [vmem:[#allocation11 + $0x260] sm:$0xff]
    %v2225 = vld [vmem:[#allocation11 + $0x268] sm:$0xff]
    %v2226 = vld [vmem:[#allocation11 + $0x270] sm:$0xff]
    %v2227 = vld [vmem:[#allocation11 + $0x278] sm:$0xff]
    %v2228 = vld [vmem:[#allocation11 + $0x280] sm:$0xff]
    %v2229 = vld [vmem:[#allocation11 + $0x288] sm:$0xff]
    %v2230 = vld [vmem:[#allocation11 + $0x290] sm:$0xff]
    %v2231 = vld [vmem:[#allocation11 + $0x298] sm:$0xff]
    %v2232 = vld [vmem:[#allocation11 + $0x2a0] sm:$0xff]
    %v2233 = vld [vmem:[#allocation11 + $0x2a8] sm:$0xff]
    %v2234 = vld [vmem:[#allocation11 + $0x2b0] sm:$0xff]
    %v2235 = vld [vmem:[#allocation11 + $0x2b8] sm:$0xff]
    %v2236 = vld [vmem:[#allocation11 + $0x2c0] sm:$0xff]
    %v2237 = vld [vmem:[#allocation11 + $0x2c8] sm:$0xff]
    %v2238 = vld [vmem:[#allocation11 + $0x2d0] sm:$0xff]
    %v2239 = vld [vmem:[#allocation11 + $0x2d8] sm:$0xff]
    %v2240 = vld [vmem:[#allocation11 + $0x2e0] sm:$0xff]
    %v2241 = vld [vmem:[#allocation11 + $0x2e8] sm:$0xff]
    %v2242 = vld [vmem:[#allocation11 + $0x2f0] sm:$0xff]
    %v2243 = vld [vmem:[#allocation11 + $0x2f8] sm:$0xff]
    %v2244 = vld [vmem:[#allocation11 + $0x300] sm:$0xff]
    %v2245 = vld [vmem:[#allocation11 + $0x308] sm:$0xff]
    %v2246 = vld [vmem:[#allocation11 + $0x310] sm:$0xff]
    %v2247 = vld [vmem:[#allocation11 + $0x318] sm:$0xff]
    %v2248 = vld [vmem:[#allocation11 + $0x320] sm:$0xff]
    %v2249 = vld [vmem:[#allocation11 + $0x328] sm:$0xff]
    %v2250 = vld [vmem:[#allocation11 + $0x330] sm:$0xff]
    %v2251 = vld [vmem:[#allocation11 + $0x338] sm:$0xff]
    %v2252 = vld [vmem:[#allocation11 + $0x340] sm:$0xff]
    %v2253 = vld [vmem:[#allocation11 + $0x348] sm:$0xff]
    %v2254 = vld [vmem:[#allocation11 + $0x350] sm:$0xff]
    %v2255 = vld [vmem:[#allocation11 + $0x358] sm:$0xff]
    %v2256 = vld [vmem:[#allocation11 + $0x360] sm:$0xff]
    %v2257 = vld [vmem:[#allocation11 + $0x368] sm:$0xff]
    %v2258 = vld [vmem:[#allocation11 + $0x370] sm:$0xff]
    %v2259 = vld [vmem:[#allocation11 + $0x378] sm:$0xff]
    %v2260 = vld [vmem:[#allocation11 + $0x380] sm:$0xff]
    %v2261 = vld [vmem:[#allocation11 + $0x388] sm:$0xff]
    %v2262 = vld [vmem:[#allocation11 + $0x390] sm:$0xff]
    %v2263 = vld [vmem:[#allocation11 + $0x398] sm:$0xff]
    %v2264 = vld [vmem:[#allocation11 + $0x3a0] sm:$0xff]
    %v2265 = vld [vmem:[#allocation11 + $0x3a8] sm:$0xff]
    %v2266 = vld [vmem:[#allocation11 + $0x3b0] sm:$0xff]
    %v2267 = vld [vmem:[#allocation11 + $0x3b8] sm:$0xff]
    %v2268 = vld [vmem:[#allocation11 + $0x3c0] sm:$0xff]
    %v2269 = vld [vmem:[#allocation11 + $0x3c8] sm:$0xff]
    %v2270 = vld [vmem:[#allocation11 + $0x3d0] sm:$0xff]
    %v2271 = vld [vmem:[#allocation11 + $0x3d8] sm:$0xff]
    %v2272 = vld [vmem:[#allocation11 + $0x3e0] sm:$0xff]
    %v2273 = vld [vmem:[#allocation11 + $0x3e8] sm:$0xff]
    %v2274 = vld [vmem:[#allocation11 + $0x3f0] sm:$0xff]
    %v2275 = vld [vmem:[#allocation11 + $0x3f8] sm:$0xff]
    %v2276 = vunpack.c.l.s8.bf16 %v2148
    %v2277 = vunpack.c.h.s8.bf16 %v2148
    %v2278 = vunpack.c.l.s8.bf16 %v2149
    %v2279 = vunpack.c.h.s8.bf16 %v2149
    %v2280 = vunpack.c.l.s8.bf16 %v2150
    %v2281 = vunpack.c.h.s8.bf16 %v2150
    %v2282 = vunpack.c.l.s8.bf16 %v2151
    %v2283 = vunpack.c.h.s8.bf16 %v2151
    %v2284 = vunpack.c.l.s8.bf16 %v2152
    %v2285 = vunpack.c.h.s8.bf16 %v2152
    %v2286 = vunpack.c.l.s8.bf16 %v2153
    %v2287 = vunpack.c.h.s8.bf16 %v2153
    %v2288 = vunpack.c.l.s8.bf16 %v2154
    %v2289 = vunpack.c.h.s8.bf16 %v2154
    %v2290 = vunpack.c.l.s8.bf16 %v2155
    %v2291 = vunpack.c.h.s8.bf16 %v2155
    %v2292 = vunpack.c.l.s8.bf16 %v2156
    %v2293 = vunpack.c.h.s8.bf16 %v2156
    %v2294 = vunpack.c.l.s8.bf16 %v2157
    %v2295 = vunpack.c.h.s8.bf16 %v2157
    %v2296 = vunpack.c.l.s8.bf16 %v2158
    %v2297 = vunpack.c.h.s8.bf16 %v2158
    %v2298 = vunpack.c.l.s8.bf16 %v2159
    %v2299 = vunpack.c.h.s8.bf16 %v2159
    %v2300 = vunpack.c.l.s8.bf16 %v2160
    %v2301 = vunpack.c.h.s8.bf16 %v2160
    %v2302 = vunpack.c.l.s8.bf16 %v2161
    %v2303 = vunpack.c.h.s8.bf16 %v2161
    %v2304 = vunpack.c.l.s8.bf16 %v2162
    %v2305 = vunpack.c.h.s8.bf16 %v2162
    %v2306 = vunpack.c.l.s8.bf16 %v2163
    %v2307 = vunpack.c.h.s8.bf16 %v2163
    %v2308 = vunpack.c.l.s8.bf16 %v2164
    %v2309 = vunpack.c.h.s8.bf16 %v2164
    %v2310 = vunpack.c.l.s8.bf16 %v2165
    %v2311 = vunpack.c.h.s8.bf16 %v2165
    %v2312 = vunpack.c.l.s8.bf16 %v2166
    %v2313 = vunpack.c.h.s8.bf16 %v2166
    %v2314 = vunpack.c.l.s8.bf16 %v2167
    %v2315 = vunpack.c.h.s8.bf16 %v2167
    %v2316 = vunpack.c.l.s8.bf16 %v2168
    %v2317 = vunpack.c.h.s8.bf16 %v2168
    %v2318 = vunpack.c.l.s8.bf16 %v2169
    %v2319 = vunpack.c.h.s8.bf16 %v2169
    %v2320 = vunpack.c.l.s8.bf16 %v2170
    %v2321 = vunpack.c.h.s8.bf16 %v2170
    %v2322 = vunpack.c.l.s8.bf16 %v2171
    %v2323 = vunpack.c.h.s8.bf16 %v2171
    %v2324 = vunpack.c.l.s8.bf16 %v2172
    %v2325 = vunpack.c.h.s8.bf16 %v2172
    %v2326 = vunpack.c.l.s8.bf16 %v2173
    %v2327 = vunpack.c.h.s8.bf16 %v2173
    %v2328 = vunpack.c.l.s8.bf16 %v2174
    %v2329 = vunpack.c.h.s8.bf16 %v2174
    %v2330 = vunpack.c.l.s8.bf16 %v2175
    %v2331 = vunpack.c.h.s8.bf16 %v2175
    %v2332 = vunpack.c.l.s8.bf16 %v2176
    %v2333 = vunpack.c.h.s8.bf16 %v2176
    %v2334 = vunpack.c.l.s8.bf16 %v2177
    %v2335 = vunpack.c.h.s8.bf16 %v2177
    %v2336 = vunpack.c.l.s8.bf16 %v2178
    %v2337 = vunpack.c.h.s8.bf16 %v2178
    %v2338 = vunpack.c.l.s8.bf16 %v2179
    %v2339 = vunpack.c.h.s8.bf16 %v2179
    %v2340 = vunpack.c.l.s8.bf16 %v2180
    %v2341 = vunpack.c.h.s8.bf16 %v2180
    %v2342 = vunpack.c.l.s8.bf16 %v2181
    %v2343 = vunpack.c.h.s8.bf16 %v2181
    %v2344 = vunpack.c.l.s8.bf16 %v2182
    %v2345 = vunpack.c.h.s8.bf16 %v2182
    %v2346 = vunpack.c.l.s8.bf16 %v2183
    %v2347 = vunpack.c.h.s8.bf16 %v2183
    %v2348 = vunpack.c.l.s8.bf16 %v2184
    %v2349 = vunpack.c.h.s8.bf16 %v2184
    %v2350 = vunpack.c.l.s8.bf16 %v2185
    %v2351 = vunpack.c.h.s8.bf16 %v2185
    %v2352 = vunpack.c.l.s8.bf16 %v2186
    %v2353 = vunpack.c.h.s8.bf16 %v2186
    %v2354 = vunpack.c.l.s8.bf16 %v2187
    %v2355 = vunpack.c.h.s8.bf16 %v2187
    %v2356 = vunpack.c.l.s8.bf16 %v2188
    %v2357 = vunpack.c.h.s8.bf16 %v2188
    %v2358 = vunpack.c.l.s8.bf16 %v2189
    %v2359 = vunpack.c.h.s8.bf16 %v2189
    %v2360 = vunpack.c.l.s8.bf16 %v2190
    %v2361 = vunpack.c.h.s8.bf16 %v2190
    %v2362 = vunpack.c.l.s8.bf16 %v2191
    %v2363 = vunpack.c.h.s8.bf16 %v2191
    %v2364 = vunpack.c.l.s8.bf16 %v2192
    %v2365 = vunpack.c.h.s8.bf16 %v2192
    %v2366 = vunpack.c.l.s8.bf16 %v2193
    %v2367 = vunpack.c.h.s8.bf16 %v2193
    %v2368 = vunpack.c.l.s8.bf16 %v2194
    %v2369 = vunpack.c.h.s8.bf16 %v2194
    %v2370 = vunpack.c.l.s8.bf16 %v2195
    %v2371 = vunpack.c.h.s8.bf16 %v2195
    %v2372 = vunpack.c.l.s8.bf16 %v2196
    %v2373 = vunpack.c.h.s8.bf16 %v2196
    %v2374 = vunpack.c.l.s8.bf16 %v2197
    %v2375 = vunpack.c.h.s8.bf16 %v2197
    %v2376 = vunpack.c.l.s8.bf16 %v2198
    %v2377 = vunpack.c.h.s8.bf16 %v2198
    %v2378 = vunpack.c.l.s8.bf16 %v2199
    %v2379 = vunpack.c.h.s8.bf16 %v2199
    %v2380 = vunpack.c.l.s8.bf16 %v2200
    %v2381 = vunpack.c.h.s8.bf16 %v2200
    %v2382 = vunpack.c.l.s8.bf16 %v2201
    %v2383 = vunpack.c.h.s8.bf16 %v2201
    %v2384 = vunpack.c.l.s8.bf16 %v2202
    %v2385 = vunpack.c.h.s8.bf16 %v2202
    %v2386 = vunpack.c.l.s8.bf16 %v2203
    %v2387 = vunpack.c.h.s8.bf16 %v2203
    %v2388 = vunpack.c.l.s8.bf16 %v2204
    %v2389 = vunpack.c.h.s8.bf16 %v2204
    %v2390 = vunpack.c.l.s8.bf16 %v2205
    %v2391 = vunpack.c.h.s8.bf16 %v2205
    %v2392 = vunpack.c.l.s8.bf16 %v2206
    %v2393 = vunpack.c.h.s8.bf16 %v2206
    %v2394 = vunpack.c.l.s8.bf16 %v2207
    %v2395 = vunpack.c.h.s8.bf16 %v2207
    %v2396 = vunpack.c.l.s8.bf16 %v2208
    %v2397 = vunpack.c.h.s8.bf16 %v2208
    %v2398 = vunpack.c.l.s8.bf16 %v2209
    %v2399 = vunpack.c.h.s8.bf16 %v2209
    %v2400 = vunpack.c.l.s8.bf16 %v2210
    %v2401 = vunpack.c.h.s8.bf16 %v2210
    %v2402 = vunpack.c.l.s8.bf16 %v2211
    %v2403 = vunpack.c.h.s8.bf16 %v2211
    %v2404 = vunpack.c.l.s8.bf16 %v2212
    %v2405 = vunpack.c.h.s8.bf16 %v2212
    %v2406 = vunpack.c.l.s8.bf16 %v2213
    %v2407 = vunpack.c.h.s8.bf16 %v2213
    %v2408 = vunpack.c.l.s8.bf16 %v2214
    %v2409 = vunpack.c.h.s8.bf16 %v2214
    %v2410 = vunpack.c.l.s8.bf16 %v2215
    %v2411 = vunpack.c.h.s8.bf16 %v2215
    %v2412 = vunpack.c.l.s8.bf16 %v2216
    %v2413 = vunpack.c.h.s8.bf16 %v2216
    %v2414 = vunpack.c.l.s8.bf16 %v2217
    %v2415 = vunpack.c.h.s8.bf16 %v2217
    %v2416 = vunpack.c.l.s8.bf16 %v2218
    %v2417 = vunpack.c.h.s8.bf16 %v2218
    %v2418 = vunpack.c.l.s8.bf16 %v2219
    %v2419 = vunpack.c.h.s8.bf16 %v2219
    %v2420 = vunpack.c.l.s8.bf16 %v2220
    %v2421 = vunpack.c.h.s8.bf16 %v2220
    %v2422 = vunpack.c.l.s8.bf16 %v2221
    %v2423 = vunpack.c.h.s8.bf16 %v2221
    %v2424 = vunpack.c.l.s8.bf16 %v2222
    %v2425 = vunpack.c.h.s8.bf16 %v2222
    %v2426 = vunpack.c.l.s8.bf16 %v2223
    %v2427 = vunpack.c.h.s8.bf16 %v2223
    %v2428 = vunpack.c.l.s8.bf16 %v2224
    %v2429 = vunpack.c.h.s8.bf16 %v2224
    %v2430 = vunpack.c.l.s8.bf16 %v2225
    %v2431 = vunpack.c.h.s8.bf16 %v2225
    %v2432 = vunpack.c.l.s8.bf16 %v2226
    %v2433 = vunpack.c.h.s8.bf16 %v2226
    %v2434 = vunpack.c.l.s8.bf16 %v2227
    %v2435 = vunpack.c.h.s8.bf16 %v2227
    %v2436 = vunpack.c.l.s8.bf16 %v2228
    %v2437 = vunpack.c.h.s8.bf16 %v2228
    %v2438 = vunpack.c.l.s8.bf16 %v2229
    %v2439 = vunpack.c.h.s8.bf16 %v2229
    %v2440 = vunpack.c.l.s8.bf16 %v2230
    %v2441 = vunpack.c.h.s8.bf16 %v2230
    %v2442 = vunpack.c.l.s8.bf16 %v2231
    %v2443 = vunpack.c.h.s8.bf16 %v2231
    %v2444 = vunpack.c.l.s8.bf16 %v2232
    %v2445 = vunpack.c.h.s8.bf16 %v2232
    %v2446 = vunpack.c.l.s8.bf16 %v2233
    %v2447 = vunpack.c.h.s8.bf16 %v2233
    %v2448 = vunpack.c.l.s8.bf16 %v2234
    %v2449 = vunpack.c.h.s8.bf16 %v2234
    %v2450 = vunpack.c.l.s8.bf16 %v2235
    %v2451 = vunpack.c.h.s8.bf16 %v2235
    %v2452 = vunpack.c.l.s8.bf16 %v2236
    %v2453 = vunpack.c.h.s8.bf16 %v2236
    %v2454 = vunpack.c.l.s8.bf16 %v2237
    %v2455 = vunpack.c.h.s8.bf16 %v2237
    %v2456 = vunpack.c.l.s8.bf16 %v2238
    %v2457 = vunpack.c.h.s8.bf16 %v2238
    %v2458 = vunpack.c.l.s8.bf16 %v2239
    %v2459 = vunpack.c.h.s8.bf16 %v2239
    %v2460 = vunpack.c.l.s8.bf16 %v2240
    %v2461 = vunpack.c.h.s8.bf16 %v2240
    %v2462 = vunpack.c.l.s8.bf16 %v2241
    %v2463 = vunpack.c.h.s8.bf16 %v2241
    %v2464 = vunpack.c.l.s8.bf16 %v2242
    %v2465 = vunpack.c.h.s8.bf16 %v2242
    %v2466 = vunpack.c.l.s8.bf16 %v2243
    %v2467 = vunpack.c.h.s8.bf16 %v2243
    %v2468 = vunpack.c.l.s8.bf16 %v2244
    %v2469 = vunpack.c.h.s8.bf16 %v2244
    %v2470 = vunpack.c.l.s8.bf16 %v2245
    %v2471 = vunpack.c.h.s8.bf16 %v2245
    %v2472 = vunpack.c.l.s8.bf16 %v2246
    %v2473 = vunpack.c.h.s8.bf16 %v2246
    %v2474 = vunpack.c.l.s8.bf16 %v2247
    %v2475 = vunpack.c.h.s8.bf16 %v2247
    %v2476 = vunpack.c.l.s8.bf16 %v2248
    %v2477 = vunpack.c.h.s8.bf16 %v2248
    %v2478 = vunpack.c.l.s8.bf16 %v2249
    %v2479 = vunpack.c.h.s8.bf16 %v2249
    %v2480 = vunpack.c.l.s8.bf16 %v2250
    %v2481 = vunpack.c.h.s8.bf16 %v2250
    %v2482 = vunpack.c.l.s8.bf16 %v2251
    %v2483 = vunpack.c.h.s8.bf16 %v2251
    %v2484 = vunpack.c.l.s8.bf16 %v2252
    %v2485 = vunpack.c.h.s8.bf16 %v2252
    %v2486 = vunpack.c.l.s8.bf16 %v2253
    %v2487 = vunpack.c.h.s8.bf16 %v2253
    %v2488 = vunpack.c.l.s8.bf16 %v2254
    %v2489 = vunpack.c.h.s8.bf16 %v2254
    %v2490 = vunpack.c.l.s8.bf16 %v2255
    %v2491 = vunpack.c.h.s8.bf16 %v2255
    %v2492 = vunpack.c.l.s8.bf16 %v2256
    %v2493 = vunpack.c.h.s8.bf16 %v2256
    %v2494 = vunpack.c.l.s8.bf16 %v2257
    %v2495 = vunpack.c.h.s8.bf16 %v2257
    %v2496 = vunpack.c.l.s8.bf16 %v2258
    %v2497 = vunpack.c.h.s8.bf16 %v2258
    %v2498 = vunpack.c.l.s8.bf16 %v2259
    %v2499 = vunpack.c.h.s8.bf16 %v2259
    %v2500 = vunpack.c.l.s8.bf16 %v2260
    %v2501 = vunpack.c.h.s8.bf16 %v2260
    %v2502 = vunpack.c.l.s8.bf16 %v2261
    %v2503 = vunpack.c.h.s8.bf16 %v2261
    %v2504 = vunpack.c.l.s8.bf16 %v2262
    %v2505 = vunpack.c.h.s8.bf16 %v2262
    %v2506 = vunpack.c.l.s8.bf16 %v2263
    %v2507 = vunpack.c.h.s8.bf16 %v2263
    %v2508 = vunpack.c.l.s8.bf16 %v2264
    %v2509 = vunpack.c.h.s8.bf16 %v2264
    %v2510 = vunpack.c.l.s8.bf16 %v2265
    %v2511 = vunpack.c.h.s8.bf16 %v2265
    %v2512 = vunpack.c.l.s8.bf16 %v2266
    %v2513 = vunpack.c.h.s8.bf16 %v2266
    %v2514 = vunpack.c.l.s8.bf16 %v2267
    %v2515 = vunpack.c.h.s8.bf16 %v2267
    %v2516 = vunpack.c.l.s8.bf16 %v2268
    %v2517 = vunpack.c.h.s8.bf16 %v2268
    %v2518 = vunpack.c.l.s8.bf16 %v2269
    %v2519 = vunpack.c.h.s8.bf16 %v2269
    %v2520 = vunpack.c.l.s8.bf16 %v2270
    %v2521 = vunpack.c.h.s8.bf16 %v2270
    %v2522 = vunpack.c.l.s8.bf16 %v2271
    %v2523 = vunpack.c.h.s8.bf16 %v2271
    %v2524 = vunpack.c.l.s8.bf16 %v2272
    %v2525 = vunpack.c.h.s8.bf16 %v2272
    %v2526 = vunpack.c.l.s8.bf16 %v2273
    %v2527 = vunpack.c.h.s8.bf16 %v2273
    %v2528 = vunpack.c.l.s8.bf16 %v2274
    %v2529 = vunpack.c.h.s8.bf16 %v2274
    %v2530 = vunpack.c.l.s8.bf16 %v2275
    %v2531 = vunpack.c.h.s8.bf16 %v2275
    %2532 = vmatprep.subr.bf16.mxu0 0
    %2533 = vmatpush1.bf16.msra.mxu0 %v2283
    %2534 = vmatprep.subr.bf16.mxu0 0
    %2535 = vmatpush1.bf16.msra.mxu0 %v2282
    %2536 = vmatprep.subr.bf16.mxu0 0
    %2537 = vmatpush1.bf16.msra.mxu0 %v2281
    %2538 = vmatprep.subr.bf16.mxu0 0
    %2539 = vmatpush1.bf16.msra.mxu0 %v2280
    %2540 = vmatprep.subr.bf16.mxu0 0
    %2541 = vmatpush1.bf16.msra.mxu0 %v2279
    %2542 = vmatprep.subr.bf16.mxu0 0
    %2543 = vmatpush1.bf16.msra.mxu0 %v2278
    %2544 = vmatprep.subr.bf16.mxu0 0
    %2545 = vmatpush1.bf16.msra.mxu0 %v2277
    %2546 = vmatprep.subr.bf16.mxu0 0
    %2547 = vmatpush1.bf16.msra.mxu0 %v2276
    %2548 = vmatprep.subr.bf16.mxu0 0
    %2549 = vmatpush2.bf16.msra.mxu0 %v2291
    %2550 = vmatprep.subr.bf16.mxu0 0
    %2551 = vmatpush2.bf16.msra.mxu0 %v2290
    %2552 = vmatprep.subr.bf16.mxu0 0
    %2553 = vmatpush2.bf16.msra.mxu0 %v2289
    %2554 = vmatprep.subr.bf16.mxu0 0
    %2555 = vmatpush2.bf16.msra.mxu0 %v2288
    %2556 = vmatprep.subr.bf16.mxu0 0
    %2557 = vmatpush2.bf16.msra.mxu0 %v2287
    %2558 = vmatprep.subr.bf16.mxu0 0
    %2559 = vmatpush2.bf16.msra.mxu0 %v2286
    %2560 = vmatprep.subr.bf16.mxu0 0
    %2561 = vmatpush2.bf16.msra.mxu0 %v2285
    %2562 = vmatprep.subr.bf16.mxu0 0
    %2563 = vmatpush2.bf16.msra.mxu0 %v2284
    %2564 = vmatprep.mubr.bf16.mxu0 %v2117
    %2565 = vmatmul.mubr.bf16.gmra.mxu0 %v2116
    %v2566 = vpop.f32.mrf.mxu0
    %v2567 = vadd.f32 0.0, %v2566
    %v2568 = vpop.f32.mrf.mxu0
    %v2569 = vpop.f32.mrf.mxu0
    %v2570 = vpop.f32.mrf.mxu0
    %2571 = vdwg.mxu0
    %2572 = vmatprep.subr.bf16.mxu0 0
    %2573 = vmatpush1.bf16.msra.mxu0 %v2299
    %2574 = vmatprep.subr.bf16.mxu0 0
    %2575 = vmatpush1.bf16.msra.mxu0 %v2298
    %2576 = vmatprep.subr.bf16.mxu0 0
    %2577 = vmatpush1.bf16.msra.mxu0 %v2297
    %2578 = vmatprep.subr.bf16.mxu0 0
    %2579 = vmatpush1.bf16.msra.mxu0 %v2296
    %2580 = vmatprep.subr.bf16.mxu0 0
    %2581 = vmatpush1.bf16.msra.mxu0 %v2295
    %2582 = vmatprep.subr.bf16.mxu0 0
    %2583 = vmatpush1.bf16.msra.mxu0 %v2294
    %2584 = vmatprep.subr.bf16.mxu0 0
    %2585 = vmatpush1.bf16.msra.mxu0 %v2293
    %2586 = vmatprep.subr.bf16.mxu0 0
    %2587 = vmatpush1.bf16.msra.mxu0 %v2292
    %2588 = vmatprep.subr.bf16.mxu0 0
    %2589 = vmatpush2.bf16.msra.mxu0 %v2307
    %2590 = vmatprep.subr.bf16.mxu0 0
    %2591 = vmatpush2.bf16.msra.mxu0 %v2306
    %2592 = vmatprep.subr.bf16.mxu0 0
    %2593 = vmatpush2.bf16.msra.mxu0 %v2305
    %2594 = vmatprep.subr.bf16.mxu0 0
    %2595 = vmatpush2.bf16.msra.mxu0 %v2304
    %2596 = vmatprep.subr.bf16.mxu0 0
    %2597 = vmatpush2.bf16.msra.mxu0 %v2303
    %2598 = vmatprep.subr.bf16.mxu0 0
    %2599 = vmatpush2.bf16.msra.mxu0 %v2302
    %2600 = vmatprep.subr.bf16.mxu0 0
    %2601 = vmatpush2.bf16.msra.mxu0 %v2301
    %2602 = vmatprep.subr.bf16.mxu0 0
    %2603 = vmatpush2.bf16.msra.mxu0 %v2300
    %2604 = vmatprep.mubr.bf16.mxu0 %v2119
    %2605 = vmatmul.mubr.bf16.gmra.mxu0 %v2118
    %v2606 = vpop.f32.mrf.mxu0
    %v2607 = vadd.f32 %v2567, %v2606
    %v2608 = vpop.f32.mrf.mxu0
    %v2609 = vpop.f32.mrf.mxu0
    %v2610 = vpop.f32.mrf.mxu0
    %2611 = vdwg.mxu0
    %2612 = vmatprep.subr.bf16.mxu0 0
    %2613 = vmatpush1.bf16.msra.mxu0 %v2315
    %2614 = vmatprep.subr.bf16.mxu0 0
    %2615 = vmatpush1.bf16.msra.mxu0 %v2314
    %2616 = vmatprep.subr.bf16.mxu0 0
    %2617 = vmatpush1.bf16.msra.mxu0 %v2313
    %2618 = vmatprep.subr.bf16.mxu0 0
    %2619 = vmatpush1.bf16.msra.mxu0 %v2312
    %2620 = vmatprep.subr.bf16.mxu0 0
    %2621 = vmatpush1.bf16.msra.mxu0 %v2311
    %2622 = vmatprep.subr.bf16.mxu0 0
    %2623 = vmatpush1.bf16.msra.mxu0 %v2310
    %2624 = vmatprep.subr.bf16.mxu0 0
    %2625 = vmatpush1.bf16.msra.mxu0 %v2309
    %2626 = vmatprep.subr.bf16.mxu0 0
    %2627 = vmatpush1.bf16.msra.mxu0 %v2308
    %2628 = vmatprep.subr.bf16.mxu0 0
    %2629 = vmatpush2.bf16.msra.mxu0 %v2323
    %2630 = vmatprep.subr.bf16.mxu0 0
    %2631 = vmatpush2.bf16.msra.mxu0 %v2322
    %2632 = vmatprep.subr.bf16.mxu0 0
    %2633 = vmatpush2.bf16.msra.mxu0 %v2321
    %2634 = vmatprep.subr.bf16.mxu0 0
    %2635 = vmatpush2.bf16.msra.mxu0 %v2320
    %2636 = vmatprep.subr.bf16.mxu0 0
    %2637 = vmatpush2.bf16.msra.mxu0 %v2319
    %2638 = vmatprep.subr.bf16.mxu0 0
    %2639 = vmatpush2.bf16.msra.mxu0 %v2318
    %2640 = vmatprep.subr.bf16.mxu0 0
    %2641 = vmatpush2.bf16.msra.mxu0 %v2317
    %2642 = vmatprep.subr.bf16.mxu0 0
    %2643 = vmatpush2.bf16.msra.mxu0 %v2316
    %2644 = vmatprep.mubr.bf16.mxu0 %v2121
    %2645 = vmatmul.mubr.bf16.gmra.mxu0 %v2120
    %v2646 = vpop.f32.mrf.mxu0
    %v2647 = vadd.f32 %v2607, %v2646
    %v2648 = vpop.f32.mrf.mxu0
    %v2649 = vpop.f32.mrf.mxu0
    %v2650 = vpop.f32.mrf.mxu0
    %2651 = vdwg.mxu0
    %2652 = vmatprep.subr.bf16.mxu0 0
    %2653 = vmatpush1.bf16.msra.mxu0 %v2331
    %2654 = vmatprep.subr.bf16.mxu0 0
    %2655 = vmatpush1.bf16.msra.mxu0 %v2330
    %2656 = vmatprep.subr.bf16.mxu0 0
    %2657 = vmatpush1.bf16.msra.mxu0 %v2329
    %2658 = vmatprep.subr.bf16.mxu0 0
    %2659 = vmatpush1.bf16.msra.mxu0 %v2328
    %2660 = vmatprep.subr.bf16.mxu0 0
    %2661 = vmatpush1.bf16.msra.mxu0 %v2327
    %2662 = vmatprep.subr.bf16.mxu0 0
    %2663 = vmatpush1.bf16.msra.mxu0 %v2326
    %2664 = vmatprep.subr.bf16.mxu0 0
    %2665 = vmatpush1.bf16.msra.mxu0 %v2325
    %2666 = vmatprep.subr.bf16.mxu0 0
    %2667 = vmatpush1.bf16.msra.mxu0 %v2324
    %2668 = vmatprep.subr.bf16.mxu0 0
    %2669 = vmatpush2.bf16.msra.mxu0 %v2339
    %2670 = vmatprep.subr.bf16.mxu0 0
    %2671 = vmatpush2.bf16.msra.mxu0 %v2338
    %2672 = vmatprep.subr.bf16.mxu0 0
    %2673 = vmatpush2.bf16.msra.mxu0 %v2337
    %2674 = vmatprep.subr.bf16.mxu0 0
    %2675 = vmatpush2.bf16.msra.mxu0 %v2336
    %2676 = vmatprep.subr.bf16.mxu0 0
    %2677 = vmatpush2.bf16.msra.mxu0 %v2335
    %2678 = vmatprep.subr.bf16.mxu0 0
    %2679 = vmatpush2.bf16.msra.mxu0 %v2334
    %2680 = vmatprep.subr.bf16.mxu0 0
    %2681 = vmatpush2.bf16.msra.mxu0 %v2333
    %2682 = vmatprep.subr.bf16.mxu0 0
    %2683 = vmatpush2.bf16.msra.mxu0 %v2332
    %2684 = vmatprep.mubr.bf16.mxu0 %v2123
    %2685 = vmatmul.mubr.bf16.gmra.mxu0 %v2122
    %v2686 = vpop.f32.mrf.mxu0
    %v2687 = vadd.f32 %v2647, %v2686
    %v2688 = vpop.f32.mrf.mxu0
    %v2689 = vpop.f32.mrf.mxu0
    %v2690 = vpop.f32.mrf.mxu0
    %2691 = vdwg.mxu0
    %2692 = vmatprep.subr.bf16.mxu0 0
    %2693 = vmatpush1.bf16.msra.mxu0 %v2347
    %2694 = vmatprep.subr.bf16.mxu0 0
    %2695 = vmatpush1.bf16.msra.mxu0 %v2346
    %2696 = vmatprep.subr.bf16.mxu0 0
    %2697 = vmatpush1.bf16.msra.mxu0 %v2345
    %2698 = vmatprep.subr.bf16.mxu0 0
    %2699 = vmatpush1.bf16.msra.mxu0 %v2344
    %2700 = vmatprep.subr.bf16.mxu0 0
    %2701 = vmatpush1.bf16.msra.mxu0 %v2343
    %2702 = vmatprep.subr.bf16.mxu0 0
    %2703 = vmatpush1.bf16.msra.mxu0 %v2342
    %2704 = vmatprep.subr.bf16.mxu0 0
    %2705 = vmatpush1.bf16.msra.mxu0 %v2341
    %2706 = vmatprep.subr.bf16.mxu0 0
    %2707 = vmatpush1.bf16.msra.mxu0 %v2340
    %2708 = vmatprep.subr.bf16.mxu0 0
    %2709 = vmatpush2.bf16.msra.mxu0 %v2355
    %2710 = vmatprep.subr.bf16.mxu0 0
    %2711 = vmatpush2.bf16.msra.mxu0 %v2354
    %2712 = vmatprep.subr.bf16.mxu0 0
    %2713 = vmatpush2.bf16.msra.mxu0 %v2353
    %2714 = vmatprep.subr.bf16.mxu0 0
    %2715 = vmatpush2.bf16.msra.mxu0 %v2352
    %2716 = vmatprep.subr.bf16.mxu0 0
    %2717 = vmatpush2.bf16.msra.mxu0 %v2351
    %2718 = vmatprep.subr.bf16.mxu0 0
    %2719 = vmatpush2.bf16.msra.mxu0 %v2350
    %2720 = vmatprep.subr.bf16.mxu0 0
    %2721 = vmatpush2.bf16.msra.mxu0 %v2349
    %2722 = vmatprep.subr.bf16.mxu0 0
    %2723 = vmatpush2.bf16.msra.mxu0 %v2348
    %2724 = vmatprep.mubr.bf16.mxu0 %v2125
    %2725 = vmatmul.mubr.bf16.gmra.mxu0 %v2124
    %v2726 = vpop.f32.mrf.mxu0
    %v2727 = vadd.f32 %v2687, %v2726
    %v2728 = vpop.f32.mrf.mxu0
    %v2729 = vpop.f32.mrf.mxu0
    %v2730 = vpop.f32.mrf.mxu0
    %2731 = vdwg.mxu0
    %2732 = vmatprep.subr.bf16.mxu0 0
    %2733 = vmatpush1.bf16.msra.mxu0 %v2363
    %2734 = vmatprep.subr.bf16.mxu0 0
    %2735 = vmatpush1.bf16.msra.mxu0 %v2362
    %2736 = vmatprep.subr.bf16.mxu0 0
    %2737 = vmatpush1.bf16.msra.mxu0 %v2361
    %2738 = vmatprep.subr.bf16.mxu0 0
    %2739 = vmatpush1.bf16.msra.mxu0 %v2360
    %2740 = vmatprep.subr.bf16.mxu0 0
    %2741 = vmatpush1.bf16.msra.mxu0 %v2359
    %2742 = vmatprep.subr.bf16.mxu0 0
    %2743 = vmatpush1.bf16.msra.mxu0 %v2358
    %2744 = vmatprep.subr.bf16.mxu0 0
    %2745 = vmatpush1.bf16.msra.mxu0 %v2357
    %2746 = vmatprep.subr.bf16.mxu0 0
    %2747 = vmatpush1.bf16.msra.mxu0 %v2356
    %2748 = vmatprep.subr.bf16.mxu0 0
    %2749 = vmatpush2.bf16.msra.mxu0 %v2371
    %2750 = vmatprep.subr.bf16.mxu0 0
    %2751 = vmatpush2.bf16.msra.mxu0 %v2370
    %2752 = vmatprep.subr.bf16.mxu0 0
    %2753 = vmatpush2.bf16.msra.mxu0 %v2369
    %2754 = vmatprep.subr.bf16.mxu0 0
    %2755 = vmatpush2.bf16.msra.mxu0 %v2368
    %2756 = vmatprep.subr.bf16.mxu0 0
    %2757 = vmatpush2.bf16.msra.mxu0 %v2367
    %2758 = vmatprep.subr.bf16.mxu0 0
    %2759 = vmatpush2.bf16.msra.mxu0 %v2366
    %2760 = vmatprep.subr.bf16.mxu0 0
    %2761 = vmatpush2.bf16.msra.mxu0 %v2365
    %2762 = vmatprep.subr.bf16.mxu0 0
    %2763 = vmatpush2.bf16.msra.mxu0 %v2364
    %2764 = vmatprep.mubr.bf16.mxu0 %v2127
    %2765 = vmatmul.mubr.bf16.gmra.mxu0 %v2126
    %v2766 = vpop.f32.mrf.mxu0
    %v2767 = vadd.f32 %v2727, %v2766
    %v2768 = vpop.f32.mrf.mxu0
    %v2769 = vpop.f32.mrf.mxu0
    %v2770 = vpop.f32.mrf.mxu0
    %2771 = vdwg.mxu0
    %2772 = vmatprep.subr.bf16.mxu0 0
    %2773 = vmatpush1.bf16.msra.mxu0 %v2379
    %2774 = vmatprep.subr.bf16.mxu0 0
    %2775 = vmatpush1.bf16.msra.mxu0 %v2378
    %2776 = vmatprep.subr.bf16.mxu0 0
    %2777 = vmatpush1.bf16.msra.mxu0 %v2377
    %2778 = vmatprep.subr.bf16.mxu0 0
    %2779 = vmatpush1.bf16.msra.mxu0 %v2376
    %2780 = vmatprep.subr.bf16.mxu0 0
    %2781 = vmatpush1.bf16.msra.mxu0 %v2375
    %2782 = vmatprep.subr.bf16.mxu0 0
    %2783 = vmatpush1.bf16.msra.mxu0 %v2374
    %2784 = vmatprep.subr.bf16.mxu0 0
    %2785 = vmatpush1.bf16.msra.mxu0 %v2373
    %2786 = vmatprep.subr.bf16.mxu0 0
    %2787 = vmatpush1.bf16.msra.mxu0 %v2372
    %2788 = vmatprep.subr.bf16.mxu0 0
    %2789 = vmatpush2.bf16.msra.mxu0 %v2387
    %2790 = vmatprep.subr.bf16.mxu0 0
    %2791 = vmatpush2.bf16.msra.mxu0 %v2386
    %2792 = vmatprep.subr.bf16.mxu0 0
    %2793 = vmatpush2.bf16.msra.mxu0 %v2385
    %2794 = vmatprep.subr.bf16.mxu0 0
    %2795 = vmatpush2.bf16.msra.mxu0 %v2384
    %2796 = vmatprep.subr.bf16.mxu0 0
    %2797 = vmatpush2.bf16.msra.mxu0 %v2383
    %2798 = vmatprep.subr.bf16.mxu0 0
    %2799 = vmatpush2.bf16.msra.mxu0 %v2382
    %2800 = vmatprep.subr.bf16.mxu0 0
    %2801 = vmatpush2.bf16.msra.mxu0 %v2381
    %2802 = vmatprep.subr.bf16.mxu0 0
    %2803 = vmatpush2.bf16.msra.mxu0 %v2380
    %2804 = vmatprep.mubr.bf16.mxu0 %v2129
    %2805 = vmatmul.mubr.bf16.gmra.mxu0 %v2128
    %v2806 = vpop.f32.mrf.mxu0
    %v2807 = vadd.f32 %v2767, %v2806
    %v2808 = vpop.f32.mrf.mxu0
    %v2809 = vpop.f32.mrf.mxu0
    %v2810 = vpop.f32.mrf.mxu0
    %2811 = vdwg.mxu0
    %2812 = vmatprep.subr.bf16.mxu0 0
    %2813 = vmatpush1.bf16.msra.mxu0 %v2395
    %2814 = vmatprep.subr.bf16.mxu0 0
    %2815 = vmatpush1.bf16.msra.mxu0 %v2394
    %2816 = vmatprep.subr.bf16.mxu0 0
    %2817 = vmatpush1.bf16.msra.mxu0 %v2393
    %2818 = vmatprep.subr.bf16.mxu0 0
    %2819 = vmatpush1.bf16.msra.mxu0 %v2392
    %2820 = vmatprep.subr.bf16.mxu0 0
    %2821 = vmatpush1.bf16.msra.mxu0 %v2391
    %2822 = vmatprep.subr.bf16.mxu0 0
    %2823 = vmatpush1.bf16.msra.mxu0 %v2390
    %2824 = vmatprep.subr.bf16.mxu0 0
    %2825 = vmatpush1.bf16.msra.mxu0 %v2389
    %2826 = vmatprep.subr.bf16.mxu0 0
    %2827 = vmatpush1.bf16.msra.mxu0 %v2388
    %2828 = vmatprep.subr.bf16.mxu0 0
    %2829 = vmatpush2.bf16.msra.mxu0 %v2403
    %2830 = vmatprep.subr.bf16.mxu0 0
    %2831 = vmatpush2.bf16.msra.mxu0 %v2402
    %2832 = vmatprep.subr.bf16.mxu0 0
    %2833 = vmatpush2.bf16.msra.mxu0 %v2401
    %2834 = vmatprep.subr.bf16.mxu0 0
    %2835 = vmatpush2.bf16.msra.mxu0 %v2400
    %2836 = vmatprep.subr.bf16.mxu0 0
    %2837 = vmatpush2.bf16.msra.mxu0 %v2399
    %2838 = vmatprep.subr.bf16.mxu0 0
    %2839 = vmatpush2.bf16.msra.mxu0 %v2398
    %2840 = vmatprep.subr.bf16.mxu0 0
    %2841 = vmatpush2.bf16.msra.mxu0 %v2397
    %2842 = vmatprep.subr.bf16.mxu0 0
    %2843 = vmatpush2.bf16.msra.mxu0 %v2396
    %2844 = vmatprep.mubr.bf16.mxu0 %v2131
    %2845 = vmatmul.mubr.bf16.gmra.mxu0 %v2130
    %v2846 = vpop.f32.mrf.mxu0
    %v2847 = vadd.f32 %v2807, %v2846
    %v2848 = vpop.f32.mrf.mxu0
    %v2849 = vpop.f32.mrf.mxu0
    %v2850 = vpop.f32.mrf.mxu0
    %2851 = vdwg.mxu0
    %2852 = vmatprep.subr.bf16.mxu0 0
    %2853 = vmatpush1.bf16.msra.mxu0 %v2411
    %2854 = vmatprep.subr.bf16.mxu0 0
    %2855 = vmatpush1.bf16.msra.mxu0 %v2410
    %2856 = vmatprep.subr.bf16.mxu0 0
    %2857 = vmatpush1.bf16.msra.mxu0 %v2409
    %2858 = vmatprep.subr.bf16.mxu0 0
    %2859 = vmatpush1.bf16.msra.mxu0 %v2408
    %2860 = vmatprep.subr.bf16.mxu0 0
    %2861 = vmatpush1.bf16.msra.mxu0 %v2407
    %2862 = vmatprep.subr.bf16.mxu0 0
    %2863 = vmatpush1.bf16.msra.mxu0 %v2406
    %2864 = vmatprep.subr.bf16.mxu0 0
    %2865 = vmatpush1.bf16.msra.mxu0 %v2405
    %2866 = vmatprep.subr.bf16.mxu0 0
    %2867 = vmatpush1.bf16.msra.mxu0 %v2404
    %2868 = vmatprep.subr.bf16.mxu0 0
    %2869 = vmatpush2.bf16.msra.mxu0 %v2419
    %2870 = vmatprep.subr.bf16.mxu0 0
    %2871 = vmatpush2.bf16.msra.mxu0 %v2418
    %2872 = vmatprep.subr.bf16.mxu0 0
    %2873 = vmatpush2.bf16.msra.mxu0 %v2417
    %2874 = vmatprep.subr.bf16.mxu0 0
    %2875 = vmatpush2.bf16.msra.mxu0 %v2416
    %2876 = vmatprep.subr.bf16.mxu0 0
    %2877 = vmatpush2.bf16.msra.mxu0 %v2415
    %2878 = vmatprep.subr.bf16.mxu0 0
    %2879 = vmatpush2.bf16.msra.mxu0 %v2414
    %2880 = vmatprep.subr.bf16.mxu0 0
    %2881 = vmatpush2.bf16.msra.mxu0 %v2413
    %2882 = vmatprep.subr.bf16.mxu0 0
    %2883 = vmatpush2.bf16.msra.mxu0 %v2412
    %2884 = vmatprep.mubr.bf16.mxu0 %v2133
    %2885 = vmatmul.mubr.bf16.gmra.mxu0 %v2132
    %v2886 = vpop.f32.mrf.mxu0
    %v2887 = vadd.f32 %v2847, %v2886
    %v2888 = vpop.f32.mrf.mxu0
    %v2889 = vpop.f32.mrf.mxu0
    %v2890 = vpop.f32.mrf.mxu0
    %2891 = vdwg.mxu0
    %2892 = vmatprep.subr.bf16.mxu0 0
    %2893 = vmatpush1.bf16.msra.mxu0 %v2427
    %2894 = vmatprep.subr.bf16.mxu0 0
    %2895 = vmatpush1.bf16.msra.mxu0 %v2426
    %2896 = vmatprep.subr.bf16.mxu0 0
    %2897 = vmatpush1.bf16.msra.mxu0 %v2425
    %2898 = vmatprep.subr.bf16.mxu0 0
    %2899 = vmatpush1.bf16.msra.mxu0 %v2424
    %2900 = vmatprep.subr.bf16.mxu0 0
    %2901 = vmatpush1.bf16.msra.mxu0 %v2423
    %2902 = vmatprep.subr.bf16.mxu0 0
    %2903 = vmatpush1.bf16.msra.mxu0 %v2422
    %2904 = vmatprep.subr.bf16.mxu0 0
    %2905 = vmatpush1.bf16.msra.mxu0 %v2421
    %2906 = vmatprep.subr.bf16.mxu0 0
    %2907 = vmatpush1.bf16.msra.mxu0 %v2420
    %2908 = vmatprep.subr.bf16.mxu0 0
    %2909 = vmatpush2.bf16.msra.mxu0 %v2435
    %2910 = vmatprep.subr.bf16.mxu0 0
    %2911 = vmatpush2.bf16.msra.mxu0 %v2434
    %2912 = vmatprep.subr.bf16.mxu0 0
    %2913 = vmatpush2.bf16.msra.mxu0 %v2433
    %2914 = vmatprep.subr.bf16.mxu0 0
    %2915 = vmatpush2.bf16.msra.mxu0 %v2432
    %2916 = vmatprep.subr.bf16.mxu0 0
    %2917 = vmatpush2.bf16.msra.mxu0 %v2431
    %2918 = vmatprep.subr.bf16.mxu0 0
    %2919 = vmatpush2.bf16.msra.mxu0 %v2430
    %2920 = vmatprep.subr.bf16.mxu0 0
    %2921 = vmatpush2.bf16.msra.mxu0 %v2429
    %2922 = vmatprep.subr.bf16.mxu0 0
    %2923 = vmatpush2.bf16.msra.mxu0 %v2428
    %2924 = vmatprep.mubr.bf16.mxu0 %v2135
    %2925 = vmatmul.mubr.bf16.gmra.mxu0 %v2134
    %v2926 = vpop.f32.mrf.mxu0
    %v2927 = vadd.f32 %v2887, %v2926
    %v2928 = vpop.f32.mrf.mxu0
    %v2929 = vpop.f32.mrf.mxu0
    %v2930 = vpop.f32.mrf.mxu0
    %2931 = vdwg.mxu0
    %2932 = vmatprep.subr.bf16.mxu0 0
    %2933 = vmatpush1.bf16.msra.mxu0 %v2443
    %2934 = vmatprep.subr.bf16.mxu0 0
    %2935 = vmatpush1.bf16.msra.mxu0 %v2442
    %2936 = vmatprep.subr.bf16.mxu0 0
    %2937 = vmatpush1.bf16.msra.mxu0 %v2441
    %2938 = vmatprep.subr.bf16.mxu0 0
    %2939 = vmatpush1.bf16.msra.mxu0 %v2440
    %2940 = vmatprep.subr.bf16.mxu0 0
    %2941 = vmatpush1.bf16.msra.mxu0 %v2439
    %2942 = vmatprep.subr.bf16.mxu0 0
    %2943 = vmatpush1.bf16.msra.mxu0 %v2438
    %2944 = vmatprep.subr.bf16.mxu0 0
    %2945 = vmatpush1.bf16.msra.mxu0 %v2437
    %2946 = vmatprep.subr.bf16.mxu0 0
    %2947 = vmatpush1.bf16.msra.mxu0 %v2436
    %2948 = vmatprep.subr.bf16.mxu0 0
    %2949 = vmatpush2.bf16.msra.mxu0 %v2451
    %2950 = vmatprep.subr.bf16.mxu0 0
    %2951 = vmatpush2.bf16.msra.mxu0 %v2450
    %2952 = vmatprep.subr.bf16.mxu0 0
    %2953 = vmatpush2.bf16.msra.mxu0 %v2449
    %2954 = vmatprep.subr.bf16.mxu0 0
    %2955 = vmatpush2.bf16.msra.mxu0 %v2448
    %2956 = vmatprep.subr.bf16.mxu0 0
    %2957 = vmatpush2.bf16.msra.mxu0 %v2447
    %2958 = vmatprep.subr.bf16.mxu0 0
    %2959 = vmatpush2.bf16.msra.mxu0 %v2446
    %2960 = vmatprep.subr.bf16.mxu0 0
    %2961 = vmatpush2.bf16.msra.mxu0 %v2445
    %2962 = vmatprep.subr.bf16.mxu0 0
    %2963 = vmatpush2.bf16.msra.mxu0 %v2444
    %2964 = vmatprep.mubr.bf16.mxu0 %v2137
    %2965 = vmatmul.mubr.bf16.gmra.mxu0 %v2136
    %v2966 = vpop.f32.mrf.mxu0
    %v2967 = vadd.f32 %v2927, %v2966
    %v2968 = vpop.f32.mrf.mxu0
    %v2969 = vpop.f32.mrf.mxu0
    %v2970 = vpop.f32.mrf.mxu0
    %2971 = vdwg.mxu0
    %2972 = vmatprep.subr.bf16.mxu0 0
    %2973 = vmatpush1.bf16.msra.mxu0 %v2459
    %2974 = vmatprep.subr.bf16.mxu0 0
    %2975 = vmatpush1.bf16.msra.mxu0 %v2458
    %2976 = vmatprep.subr.bf16.mxu0 0
    %2977 = vmatpush1.bf16.msra.mxu0 %v2457
    %2978 = vmatprep.subr.bf16.mxu0 0
    %2979 = vmatpush1.bf16.msra.mxu0 %v2456
    %2980 = vmatprep.subr.bf16.mxu0 0
    %2981 = vmatpush1.bf16.msra.mxu0 %v2455
    %2982 = vmatprep.subr.bf16.mxu0 0
    %2983 = vmatpush1.bf16.msra.mxu0 %v2454
    %2984 = vmatprep.subr.bf16.mxu0 0
    %2985 = vmatpush1.bf16.msra.mxu0 %v2453
    %2986 = vmatprep.subr.bf16.mxu0 0
    %2987 = vmatpush1.bf16.msra.mxu0 %v2452
    %2988 = vmatprep.subr.bf16.mxu0 0
    %2989 = vmatpush2.bf16.msra.mxu0 %v2467
    %2990 = vmatprep.subr.bf16.mxu0 0
    %2991 = vmatpush2.bf16.msra.mxu0 %v2466
    %2992 = vmatprep.subr.bf16.mxu0 0
    %2993 = vmatpush2.bf16.msra.mxu0 %v2465
    %2994 = vmatprep.subr.bf16.mxu0 0
    %2995 = vmatpush2.bf16.msra.mxu0 %v2464
    %2996 = vmatprep.subr.bf16.mxu0 0
    %2997 = vmatpush2.bf16.msra.mxu0 %v2463
    %2998 = vmatprep.subr.bf16.mxu0 0
    %2999 = vmatpush2.bf16.msra.mxu0 %v2462
    %3000 = vmatprep.subr.bf16.mxu0 0
    %3001 = vmatpush2.bf16.msra.mxu0 %v2461
    %3002 = vmatprep.subr.bf16.mxu0 0
    %3003 = vmatpush2.bf16.msra.mxu0 %v2460
    %3004 = vmatprep.mubr.bf16.mxu0 %v2139
    %3005 = vmatmul.mubr.bf16.gmra.mxu0 %v2138
    %v3006 = vpop.f32.mrf.mxu0
    %v3007 = vadd.f32 %v2967, %v3006
    %v3008 = vpop.f32.mrf.mxu0
    %v3009 = vpop.f32.mrf.mxu0
    %v3010 = vpop.f32.mrf.mxu0
    %3011 = vdwg.mxu0
    %3012 = vmatprep.subr.bf16.mxu0 0
    %3013 = vmatpush1.bf16.msra.mxu0 %v2475
    %3014 = vmatprep.subr.bf16.mxu0 0
    %3015 = vmatpush1.bf16.msra.mxu0 %v2474
    %3016 = vmatprep.subr.bf16.mxu0 0
    %3017 = vmatpush1.bf16.msra.mxu0 %v2473
    %3018 = vmatprep.subr.bf16.mxu0 0
    %3019 = vmatpush1.bf16.msra.mxu0 %v2472
    %3020 = vmatprep.subr.bf16.mxu0 0
    %3021 = vmatpush1.bf16.msra.mxu0 %v2471
    %3022 = vmatprep.subr.bf16.mxu0 0
    %3023 = vmatpush1.bf16.msra.mxu0 %v2470
    %3024 = vmatprep.subr.bf16.mxu0 0
    %3025 = vmatpush1.bf16.msra.mxu0 %v2469
    %3026 = vmatprep.subr.bf16.mxu0 0
    %3027 = vmatpush1.bf16.msra.mxu0 %v2468
    %3028 = vmatprep.subr.bf16.mxu0 0
    %3029 = vmatpush2.bf16.msra.mxu0 %v2483
    %3030 = vmatprep.subr.bf16.mxu0 0
    %3031 = vmatpush2.bf16.msra.mxu0 %v2482
    %3032 = vmatprep.subr.bf16.mxu0 0
    %3033 = vmatpush2.bf16.msra.mxu0 %v2481
    %3034 = vmatprep.subr.bf16.mxu0 0
    %3035 = vmatpush2.bf16.msra.mxu0 %v2480
    %3036 = vmatprep.subr.bf16.mxu0 0
    %3037 = vmatpush2.bf16.msra.mxu0 %v2479
    %3038 = vmatprep.subr.bf16.mxu0 0
    %3039 = vmatpush2.bf16.msra.mxu0 %v2478
    %3040 = vmatprep.subr.bf16.mxu0 0
    %3041 = vmatpush2.bf16.msra.mxu0 %v2477
    %3042 = vmatprep.subr.bf16.mxu0 0
    %3043 = vmatpush2.bf16.msra.mxu0 %v2476
    %3044 = vmatprep.mubr.bf16.mxu0 %v2141
    %3045 = vmatmul.mubr.bf16.gmra.mxu0 %v2140
    %v3046 = vpop.f32.mrf.mxu0
    %v3047 = vadd.f32 %v3007, %v3046
    %v3048 = vpop.f32.mrf.mxu0
    %v3049 = vpop.f32.mrf.mxu0
    %v3050 = vpop.f32.mrf.mxu0
    %3051 = vdwg.mxu0
    %3052 = vmatprep.subr.bf16.mxu0 0
    %3053 = vmatpush1.bf16.msra.mxu0 %v2491
    %3054 = vmatprep.subr.bf16.mxu0 0
    %3055 = vmatpush1.bf16.msra.mxu0 %v2490
    %3056 = vmatprep.subr.bf16.mxu0 0
    %3057 = vmatpush1.bf16.msra.mxu0 %v2489
    %3058 = vmatprep.subr.bf16.mxu0 0
    %3059 = vmatpush1.bf16.msra.mxu0 %v2488
    %3060 = vmatprep.subr.bf16.mxu0 0
    %3061 = vmatpush1.bf16.msra.mxu0 %v2487
    %3062 = vmatprep.subr.bf16.mxu0 0
    %3063 = vmatpush1.bf16.msra.mxu0 %v2486
    %3064 = vmatprep.subr.bf16.mxu0 0
    %3065 = vmatpush1.bf16.msra.mxu0 %v2485
    %3066 = vmatprep.subr.bf16.mxu0 0
    %3067 = vmatpush1.bf16.msra.mxu0 %v2484
    %3068 = vmatprep.subr.bf16.mxu0 0
    %3069 = vmatpush2.bf16.msra.mxu0 %v2499
    %3070 = vmatprep.subr.bf16.mxu0 0
    %3071 = vmatpush2.bf16.msra.mxu0 %v2498
    %3072 = vmatprep.subr.bf16.mxu0 0
    %3073 = vmatpush2.bf16.msra.mxu0 %v2497
    %3074 = vmatprep.subr.bf16.mxu0 0
    %3075 = vmatpush2.bf16.msra.mxu0 %v2496
    %3076 = vmatprep.subr.bf16.mxu0 0
    %3077 = vmatpush2.bf16.msra.mxu0 %v2495
    %3078 = vmatprep.subr.bf16.mxu0 0
    %3079 = vmatpush2.bf16.msra.mxu0 %v2494
    %3080 = vmatprep.subr.bf16.mxu0 0
    %3081 = vmatpush2.bf16.msra.mxu0 %v2493
    %3082 = vmatprep.subr.bf16.mxu0 0
    %3083 = vmatpush2.bf16.msra.mxu0 %v2492
    %3084 = vmatprep.mubr.bf16.mxu0 %v2143
    %3085 = vmatmul.mubr.bf16.gmra.mxu0 %v2142
    %v3086 = vpop.f32.mrf.mxu0
    %v3087 = vadd.f32 %v3047, %v3086
    %v3088 = vpop.f32.mrf.mxu0
    %v3089 = vpop.f32.mrf.mxu0
    %v3090 = vpop.f32.mrf.mxu0
    %3091 = vdwg.mxu0
    %3092 = vmatprep.subr.bf16.mxu0 0
    %3093 = vmatpush1.bf16.msra.mxu0 %v2507
    %3094 = vmatprep.subr.bf16.mxu0 0
    %3095 = vmatpush1.bf16.msra.mxu0 %v2506
    %3096 = vmatprep.subr.bf16.mxu0 0
    %3097 = vmatpush1.bf16.msra.mxu0 %v2505
    %3098 = vmatprep.subr.bf16.mxu0 0
    %3099 = vmatpush1.bf16.msra.mxu0 %v2504
    %3100 = vmatprep.subr.bf16.mxu0 0
    %3101 = vmatpush1.bf16.msra.mxu0 %v2503
    %3102 = vmatprep.subr.bf16.mxu0 0
    %3103 = vmatpush1.bf16.msra.mxu0 %v2502
    %3104 = vmatprep.subr.bf16.mxu0 0
    %3105 = vmatpush1.bf16.msra.mxu0 %v2501
    %3106 = vmatprep.subr.bf16.mxu0 0
    %3107 = vmatpush1.bf16.msra.mxu0 %v2500
    %3108 = vmatprep.subr.bf16.mxu0 0
    %3109 = vmatpush2.bf16.msra.mxu0 %v2515
    %3110 = vmatprep.subr.bf16.mxu0 0
    %3111 = vmatpush2.bf16.msra.mxu0 %v2514
    %3112 = vmatprep.subr.bf16.mxu0 0
    %3113 = vmatpush2.bf16.msra.mxu0 %v2513
    %3114 = vmatprep.subr.bf16.mxu0 0
    %3115 = vmatpush2.bf16.msra.mxu0 %v2512
    %3116 = vmatprep.subr.bf16.mxu0 0
    %3117 = vmatpush2.bf16.msra.mxu0 %v2511
    %3118 = vmatprep.subr.bf16.mxu0 0
    %3119 = vmatpush2.bf16.msra.mxu0 %v2510
    %3120 = vmatprep.subr.bf16.mxu0 0
    %3121 = vmatpush2.bf16.msra.mxu0 %v2509
    %3122 = vmatprep.subr.bf16.mxu0 0
    %3123 = vmatpush2.bf16.msra.mxu0 %v2508
    %3124 = vmatprep.mubr.bf16.mxu0 %v2145
    %3125 = vmatmul.mubr.bf16.gmra.mxu0 %v2144
    %v3126 = vpop.f32.mrf.mxu0
    %v3127 = vadd.f32 %v3087, %v3126
    %v3128 = vpop.f32.mrf.mxu0
    %v3129 = vpop.f32.mrf.mxu0
    %v3130 = vpop.f32.mrf.mxu0
    %3131 = vdwg.mxu0
    %3132 = vmatprep.subr.bf16.mxu0 0
    %3133 = vmatpush1.bf16.msra.mxu0 %v2523
    %3134 = vmatprep.subr.bf16.mxu0 0
    %3135 = vmatpush1.bf16.msra.mxu0 %v2522
    %3136 = vmatprep.subr.bf16.mxu0 0
    %3137 = vmatpush1.bf16.msra.mxu0 %v2521
    %3138 = vmatprep.subr.bf16.mxu0 0
    %3139 = vmatpush1.bf16.msra.mxu0 %v2520
    %3140 = vmatprep.subr.bf16.mxu0 0
    %3141 = vmatpush1.bf16.msra.mxu0 %v2519
    %3142 = vmatprep.subr.bf16.mxu0 0
    %3143 = vmatpush1.bf16.msra.mxu0 %v2518
    %3144 = vmatprep.subr.bf16.mxu0 0
    %3145 = vmatpush1.bf16.msra.mxu0 %v2517
    %3146 = vmatprep.subr.bf16.mxu0 0
    %3147 = vmatpush1.bf16.msra.mxu0 %v2516
    %3148 = vmatprep.subr.bf16.mxu0 0
    %3149 = vmatpush2.bf16.msra.mxu0 %v2531
    %3150 = vmatprep.subr.bf16.mxu0 0
    %3151 = vmatpush2.bf16.msra.mxu0 %v2530
    %3152 = vmatprep.subr.bf16.mxu0 0
    %3153 = vmatpush2.bf16.msra.mxu0 %v2529
    %3154 = vmatprep.subr.bf16.mxu0 0
    %3155 = vmatpush2.bf16.msra.mxu0 %v2528
    %3156 = vmatprep.subr.bf16.mxu0 0
    %3157 = vmatpush2.bf16.msra.mxu0 %v2527
    %3158 = vmatprep.subr.bf16.mxu0 0
    %3159 = vmatpush2.bf16.msra.mxu0 %v2526
    %3160 = vmatprep.subr.bf16.mxu0 0
    %3161 = vmatpush2.bf16.msra.mxu0 %v2525
    %3162 = vmatprep.subr.bf16.mxu0 0
    %3163 = vmatpush2.bf16.msra.mxu0 %v2524
    %3164 = vmatprep.mubr.bf16.mxu0 %v2147
    %3165 = vmatmul.mubr.bf16.gmra.mxu0 %v2146
    %v3166 = vpop.f32.mrf.mxu0
    %v3167 = vadd.f32 %v3127, %v3166
    %v3168 = vpop.f32.mrf.mxu0
    %v3169 = vpop.f32.mrf.mxu0
    %v3170 = vpop.f32.mrf.mxu0
    %3171 = vdwg.mxu0
    %v3172 = vadd.f32 %v2115, %v3167
    %3173 = vst [vmem:[#allocation13] sm:$0xff] %v3172
    // Predicated region
    $region62: #{tpu_custom_call.1} parent=1 // pred_check
      %p3174 = pneg %p107
    $region63: #{tpu_custom_call.1} parent=1 // pred_check_branch
      %3176 = sbr.rel (%p3174) target = $region65
    $region64: #{tpu_custom_call.1} parent=1 // pred_region
      %v3177 = vld [vmem:[#allocation13] sm:$0xff]
      %v3178 = vld [vmem:[%s6] sm:$0x1]
      %v3180 = vlaneseq
      %v3181 = vshrl.u32 %v3180, 7
      %v3182 = vsub.s32 0, %v3181
      %v3183 = vrot.slane %v3178, %v3182
      %v3185 = vmul.f32 %v3177, %v3183
      %v3186 = vld [vmem:[%s7] sm:$0x1]
      %v3188 = vlaneseq
      %v3189 = vshrl.u32 %v3188, 7
      %v3190 = vsub.s32 0, %v3189
      %v3191 = vrot.slane %v3186, %v3190
      %v3193 = vadd.f32 %v3185, %v3191
      %v3194 = vmul.f32 %v3193, 0.5
      %v3195 = vtanh.pop %v3194
      %v3196 = vadd.f32 %v3195, 1.0
      %v3197 = vmul.f32 %v3196, 0.5
      %3198 = vst [vmem:[#allocation13] sm:$0xff] %v3197
    $region65: #{tpu_custom_call.1} parent=1 // pred_fallthru
      _
    // Predicated region
    $region66: #{tpu_custom_call.1} parent=1 // pred_check
      _
    $region67: #{tpu_custom_call.1} parent=1 // pred_check_branch
      %3200 = sbr.rel (0) target = $region69
    $region68: #{tpu_custom_call.1} parent=1 // pred_region
      %s3202 = ssub.s32 128, 128
      %3203 = vsyncadd [#allocation4], %s3202
      %s3205 = sshll.u32 [#allocation13], 4
      %s3206 = int_to_ptr.vmem [resolvable:$true] %s3205
      %3208 = dma.vmem_to_hbm [thread:$0]  %s3206, 128, %s8, [#allocation4]
    $region69: #{tpu_custom_call.1} parent=1 // pred_fallthru
      _
    // Predicated region
    $region70: #{tpu_custom_call.1} parent=1 // pred_check
      _
    $region71: #{tpu_custom_call.1} parent=1 // pred_check_branch
      %3210 = sbr.rel (0) target = $region73
    $region72: #{tpu_custom_call.1} parent=1 // pred_region
      %3211 = dma.done [#allocation4], 128
    $region73: #{tpu_custom_call.1} parent=1 // pred_fallthru
      _
    %3212 = vsyncpa [#allocation3], 1
    %3213 = vsyncpa [#allocation6], 1
    %3214 = vsyncpa [#allocation9], 1
    %3215 = vsyncpa [#allocation12], 1
    %3216 = vsyncpa [#allocation4], 1

</llo_original>
